<compile_context>
chip_gen: v7x
topology: tpu7x:2x2x1
jax: 0.10.0
libtpu: 0.0.40
codegen_flags: <defaults>
</compile_context>

<pallas_src>
import math
import functools

import jax
import jax.numpy as jnp
from jax import lax
from jax.experimental import pallas as pl
from jax.experimental.pallas import tpu as pltpu

LN_EPS = 1e-5  # PyTorch nn.LayerNorm default


def _round_up(x, m):
    return ((x + m - 1) // m) * m


# ---------------------------------------------------------------------------
# Kernel 1: y = LayerNorm(ReLU(x @ W + b)) * gamma + beta
#           (LayerNorm applied independently per group of the output channels,
#            which lets key+value share one matmul with groups=2)
# ---------------------------------------------------------------------------
def _mlp_ln_kernel(x_ref, w_ref, b_ref, g_ref, beta_ref, o_ref, *, groups):
    h = jnp.dot(x_ref[...], w_ref[...], preferred_element_type=jnp.float32)
    h = jnp.maximum(h + b_ref[...], 0.0)
    n_out = h.shape[-1]
    gs = n_out // groups
    outs = []
    for gidx in range(groups):  # groups is small & static (1 or 2)
        hg = h[:, gidx * gs:(gidx + 1) * gs]
        # one-pass statistics (biased variance, like torch.nn.LayerNorm)
        mean = jnp.mean(hg, axis=-1, keepdims=True)
        var = jnp.mean(hg * hg, axis=-1, keepdims=True) - mean * mean
        outs.append((hg - mean) * lax.rsqrt(var + LN_EPS))
    y = outs[0] if groups == 1 else jnp.concatenate(outs, axis=-1)
    o_ref[...] = y * g_ref[...] + beta_ref[...]


def mlp_layernorm(x, w, b, gamma, beta, *, groups=1, tm=256):
    """x: (M, K) f32 -> (M, N_out) f32.  K is zero-padded to a multiple of 128."""
    M, K = x.shape
    n_out = w.shape[1]

    kp = _round_up(K, 128)                     # aligned contraction dim
    if kp != K:
        x = jnp.pad(x, ((0, 0), (0, kp - K)))
        w = jnp.pad(w, ((0, kp - K), (0, 0)))  # zero rows -> same matmul result

    tm_eff = min(tm, _round_up(M, 8))
    m_pad = _round_up(M, tm_eff)
    if m_pad != M:
        x = jnp.pad(x, ((0, m_pad - M), (0, 0)))

    out = pl.pallas_call(
        functools.partial(_mlp_ln_kernel, groups=groups),
        out_shape=jax.ShapeDtypeStruct((m_pad, n_out), jnp.float32),
        grid=(m_pad // tm_eff,),
        in_specs=[
            pl.BlockSpec((tm_eff, kp), lambda i: (i, 0)),
            pl.BlockSpec((kp, n_out), lambda i: (0, 0)),
            pl.BlockSpec((1, n_out), lambda i: (0, 0)),
            pl.BlockSpec((1, n_out), lambda i: (0, 0)),
            pl.BlockSpec((1, n_out), lambda i: (0, 0)),
        ],
        out_specs=pl.BlockSpec((tm_eff, n_out), lambda i: (i, 0)),
        compiler_params=pltpu.CompilerParams(
            dimension_semantics=("parallel",),
            vmem_limit_bytes=64 * 1024 * 1024),
    )(x, w, b.reshape(1, -1), gamma.reshape(1, -1), beta.reshape(1, -1))
    return out[:M]


# ---------------------------------------------------------------------------
# Kernel 2: edge-tiled streaming segment softmax + segment mean + fused
#           update MLP + residual.  Grid = (batch, edge_tiles).
#
# Accumulators (VMEM scratch), reset at edge-tile 0 per batch element:
#   m_acc  (H, Npad)  running per-node / per-head max
#   l_acc  (H, Npad)  running sum of exp(simi - m_acc)
#   cnt    (1, Npad)  edge count per node (for scatter-mean)
#   v_acc  (Npad, C)  running sum of exp(simi - m_acc)[head(c)] * value
# ---------------------------------------------------------------------------
def _attn_update_kernel(kv_ref, q_ref, dest_ref, pool_ref, pool_t_ref,
                        wu_ref, bu_ref, gu_ref, betau_ref, res_ref, o_ref,
                        m_acc, l_acc, cnt_acc, v_acc,
                        *, heads, head_dim, n_nodes):
    ki = pl.program_id(1)

    @pl.when(ki == 0)
    def _init():
        m_acc[...] = jnp.full_like(m_acc, -1e30)
        l_acc[...] = jnp.zeros_like(l_acc)
        cnt_acc[...] = jnp.zeros_like(cnt_acc)
        v_acc[...] = jnp.zeros_like(v_acc)

    C = heads * head_dim
    kv = kv_ref[0]                         # (te, 2C)
    k = kv[:, :C]
    v = kv[:, C:]
    q = q_ref[0]                           # (te, C)
    dest = dest_ref[0]                     # (te, 1) int32 (-1 marks padded edges)
    pool = pool_ref[...]                   # (C, H) one-hot: channel -> head
    pool_t = pool_t_ref[...]               # (H, C)

    te = kv.shape[0]
    H = heads

    # One-hot assignment A[e, n] -- built ONCE and reused (hoisted out of the
    # per-head segment-max loop).  Padded edges (dest = -1) match no node.
    node_iota = lax.broadcasted_iota(jnp.int32, (te, n_nodes), 1)
    a_bool = node_iota == dest
    a_f32 = a_bool.astype(jnp.float32)
    a_bf16 = a_f32.astype(jnp.bfloat16)     # exact in bf16

    # per-head similarity: MXU with bf16 operands, f32 accumulation
    kq = (k * q).astype(jnp.bfloat16)
    simi = jnp.dot(kq, pool.astype(jnp.bfloat16),
                   preferred_element_type=jnp.float32)              # (te, H)
    simi = simi * jnp.float32(1.0 / math.sqrt(head_dim))

    # segment max of this tile, per head -> (H, n)
    neg = jnp.float32(-1e30)
    rows = []
    for h in range(H):                      # H is small & static
        masked = jnp.where(a_bool, simi[:, h:h + 1], neg)            # (te, n)
        rows.append(jnp.max(masked, axis=0, keepdims=True))          # (1, n)
    tile_max = jnp.concatenate(rows, axis=0)                         # (H, n)

    # online (flash-style) rescaling of the running accumulators
    new_max = jnp.maximum(m_acc[...], tile_max)                      # (H, n)
    alpha = jnp.exp(m_acc[...] - new_max)                            # (H, n)
    m_acc[...] = new_max

    # gather the (updated) per-node max back to edges (exact f32 one-hot matmul)
    edge_max = lax.dot_general(a_f32, new_max, (((1,), (1,)), ((), ())),
                               preferred_element_type=jnp.float32)   # (te, H)
    p = jnp.exp(simi - edge_max)                                     # (te, H)

    # softmax denominator and edge counts (small f32 matmul / reduce)
    l_acc[...] = alpha * l_acc[...] + lax.dot_general(
        p, a_f32, (((0,), (0,)), ((), ())),
        preferred_element_type=jnp.float32)                          # (H, n)
    cnt_acc[...] = cnt_acc[...] + jnp.sum(a_f32, axis=0, keepdims=True)

    # weighted values, scattered to nodes (big matmul -> bf16 operands)
    alpha_full = lax.dot_general(alpha, pool_t, (((0,), (0,)), ((), ())),
                                 preferred_element_type=jnp.float32)  # (n, C)
    p_full = jnp.dot(p, pool_t, preferred_element_type=jnp.float32)   # (te, C)
    wv = (p_full * v).astype(jnp.bfloat16)                            # (te, C)
    v_acc[...] = alpha_full * v_acc[...] + lax.dot_general(
        a_bf16, wv, (((0,), (0,)), ((), ())),
        preferred_element_type=jnp.float32)                           # (n, C)

    @pl.when(ki == pl.num_programs(1) - 1)
    def _epilogue():
        # aggregated[n, c] = v_acc[n, c] / (l_acc[head(c), n] * max(cnt, 1))
        denom = l_acc[...] * jnp.maximum(cnt_acc[...], 1.0)           # (H, n)
        inv = pl.reciprocal(jnp.maximum(denom, 1e-20), approx=True)   # EUP divide
        inv_full = lax.dot_general(inv, pool_t, (((0,), (0,)), ((), ())),
                                   preferred_element_type=jnp.float32)  # (n, C)
        agg = v_acc[...] * inv_full                                   # (n, C)

        # fused update MLP (Linear -> ReLU -> LayerNorm) + residual
        h_u = jnp.dot(agg, wu_ref[...], preferred_element_type=jnp.float32)
        h_u = jnp.maximum(h_u + bu_ref[...], 0.0)
        mean = jnp.mean(h_u, axis=-1, keepdims=True)
        var = jnp.mean(h_u * h_u, axis=-1, keepdims=True) - mean * mean
        y = (h_u - mean) * lax.rsqrt(var + LN_EPS)
        y = y * gu_ref[...] + betau_ref[...]
        o_ref[0] = y + res_ref[0]


def attention_update(kv, query, dest, res, pool, pool_t, upd_params, *,
                     num_nodes, heads, te=512):
    """kv: (B, E, 2C) [key|value], query: (B, E, C), dest: (B, E, 1) int32,
    res: (B, N, C) residual.  Returns (B, N, C)."""
    B, E, C2 = kv.shape
    C = C2 // 2
    head_dim = C // heads
    n_pad = _round_up(num_nodes, 8)

    te_eff = min(te, _round_up(E, 8))
    e_pad = _round_up(E, te_eff)
    if e_pad != E:
        kv = jnp.pad(kv, ((0, 0), (0, e_pad - E), (0, 0)))
        query = jnp.pad(query, ((0, 0), (0, e_pad - E), (0, 0)))
        dest = jnp.pad(dest, ((0, 0), (0, e_pad - E), (0, 0)), constant_values=-1)
    if n_pad != num_nodes:
        res = jnp.pad(res, ((0, 0), (0, n_pad - num_nodes), (0, 0)))
    n_et = e_pad // te_eff

    wu, bu, gu, betau = upd_params
    kern = functools.partial(_attn_update_kernel, heads=heads,
                             head_dim=head_dim, n_nodes=n_pad)
    out = pl.pallas_call(
        kern,
        out_shape=jax.ShapeDtypeStruct((B, n_pad, C), jnp.float32),
        grid=(B, n_et),
        in_specs=[
            pl.BlockSpec((1, te_eff, 2 * C), lambda b, k: (b, k, 0)),
            pl.BlockSpec((1, te_eff, C), lambda b, k: (b, k, 0)),
            # TODO(synk): make dest lane-dense ((B,1,E) with E on lanes) to avoid
            # the 1->128 lane padding of this block at very large E.
            pl.BlockSpec((1, te_eff, 1), lambda b, k: (b, k, 0)),
            pl.BlockSpec((C, heads), lambda b, k: (0, 0)),
            pl.BlockSpec((heads, C), lambda b, k: (0, 0)),
            pl.BlockSpec((C, C), lambda b, k: (0, 0)),
            pl.BlockSpec((1, C), lambda b, k: (0, 0)),
            pl.BlockSpec((1, C), lambda b, k: (0, 0)),
            pl.BlockSpec((1, C), lambda b, k: (0, 0)),
            pl.BlockSpec((1, n_pad, C), lambda b, k: (b, 0, 0)),
        ],
        out_specs=pl.BlockSpec((1, n_pad, C), lambda b, k: (b, 0, 0)),
        scratch_shapes=[
            pltpu.VMEM((heads, n_pad), jnp.float32),   # m_acc
            pltpu.VMEM((heads, n_pad), jnp.float32),   # l_acc
            pltpu.VMEM((1, n_pad), jnp.float32),       # cnt
            pltpu.VMEM((n_pad, C), jnp.float32),       # v_acc
        ],
        compiler_params=pltpu.CompilerParams(
            dimension_semantics=("parallel", "arbitrary"),
            vmem_limit_bytes=64 * 1024 * 1024),
    )(kv, query, dest, pool, pool_t, wu, bu.reshape(1, -1),
      gu.reshape(1, -1), betau.reshape(1, -1), res)
    return out[:, :num_nodes, :]


# ---------------------------------------------------------------------------
# Parameter init (deterministic, PyTorch-like Linear init; LN = (1, 0))
# ---------------------------------------------------------------------------
def init_mlp_params(rng, fan_in, fan_out):
    k1, k2 = jax.random.split(rng)
    bound = 1.0 / math.sqrt(fan_in)
    w = jax.random.uniform(k1, (fan_in, fan_out), jnp.float32, -bound, bound)
    b = jax.random.uniform(k2, (fan_out,), jnp.float32, -bound, bound)
    return (w, b, jnp.ones((fan_out,), jnp.float32), jnp.zeros((fan_out,), jnp.float32))


# ---------------------------------------------------------------------------
# Full GAN_Module forward
# ---------------------------------------------------------------------------
def gan_module_forward(xyz, features, edges, params, heads=8, tm=256, te=512):
    """xyz: (B, N, 3), features: (B, C, N), edges: (B, E, 2) int32 -> (B, C, N)."""
    B, C, N = features.shape
    E = edges.shape[1]
    assert C % heads == 0

    ivf = jnp.transpose(features, (0, 2, 1))              # (B, N, C)
    s_idx = edges[:, :, 0]
    d_idx = edges[:, :, 1]

    gather = jax.vmap(lambda a, i: a[i])
    s_feat = gather(ivf, s_idx)                           # (B, E, C)
    d_feat = gather(ivf, d_idx)
    rel = gather(xyz, s_idx) - gather(xyz, d_idx)         # (B, E, 3)
    # TODO(synk): at large E, replace these materialized gathers with a
    # scalar-prefetch (pl.Element) row gather inside the MLP kernel.
    s_in = jnp.concatenate([s_feat, rel], axis=-1).reshape(B * E, C + 3)
    d_in = jnp.concatenate([d_feat, rel], axis=-1).reshape(B * E, C + 3)

    # Fuse key + value MLPs (same input) into one pass: weights -> (K, 2C).
    wk, bk, gk, bek = params["key"]
    wv_, bv, gv, bev = params["value"]
    w_kv = jnp.concatenate([wk, wv_], axis=1)
    b_kv = jnp.concatenate([bk, bv])
    g_kv = jnp.concatenate([gk, gv])
    be_kv = jnp.concatenate([bek, bev])

    kv = mlp_layernorm(s_in, w_kv, b_kv, g_kv, be_kv,
                       groups=2, tm=tm).reshape(B, E, 2 * C)   # [key | value]
    query = mlp_layernorm(d_in, *params["query"],
                          groups=1, tm=tm).reshape(B, E, C)

    head_dim = C // heads
    pool = (jnp.arange(C)[:, None] // head_dim
            == jnp.arange(heads)[None, :]).astype(jnp.float32)   # (C, H)
    pool_t = (jnp.arange(heads)[:, None]
              == jnp.arange(C)[None, :] // head_dim).astype(jnp.float32)  # (H, C)

    # NOTE: torch_scatter sizes the scatter output as max(index)+1; here we use
    # dim_size = N explicitly (what the residual add requires anyway).
    dest = d_idx.astype(jnp.int32).reshape(B, E, 1)
    out_nc = attention_update(kv, query, dest, ivf, pool, pool_t,
                              params["update"], num_nodes=N, heads=heads, te=te)
    return jnp.transpose(out_nc, (0, 2, 1))                # (B, C, N)


# ---------------------------------------------------------------------------
# Pure-JAX reference (mirrors the PyTorch module) for correctness checking
# ---------------------------------------------------------------------------
def _reference_forward(xyz, features, edges, params, heads):
    B, C, N = features.shape
    ivf = jnp.transpose(features, (0, 2, 1))
    s_idx = edges[:, :, 0]
    d_idx = edges[:, :, 1]
    gather = jax.vmap(lambda a, i: a[i])
    s_feat = gather(ivf, s_idx)
    d_feat = gather(ivf, d_idx)
    rel = gather(xyz, s_idx) - gather(xyz, d_idx)
    s_in = jnp.concatenate([s_feat, rel], -1)
    d_in = jnp.concatenate([d_feat, rel], -1)

    def mlp(x, p):
        w, b, g, beta = p
        h = jnp.maximum(x @ w + b, 0.0)
        mu = h.mean(-1, keepdims=True)
        var = ((h - mu) ** 2).mean(-1, keepdims=True)
        return ((h - mu) / jnp.sqrt(var + LN_EPS)) * g + beta

    key = mlp(s_in, params["key"])
    value = mlp(s_in, params["value"])
    query = mlp(d_in, params["query"])
    hd = C // heads
    k4 = key.reshape(B, -1, heads, hd)
    q4 = query.reshape(B, -1, heads, hd)
    simi = (k4 * q4).sum(-1) / math.sqrt(hd)               # (B, E, H)

    def per_batch(sim, val, dst):
        mx = jax.ops.segment_max(sim, dst, num_segments=N)
        p = jnp.exp(sim - mx[dst])
        sm = jax.ops.segment_sum(p, dst, num_segments=N)
        attn = p / sm[dst]
        wv = val * jnp.repeat(attn, hd, axis=-1)
        agg = jax.ops.segment_sum(wv, dst, num_segments=N)
        cnt = jax.ops.segment_sum(jnp.ones((sim.shape[0],), jnp.float32),
                                  dst, num_segments=N)
        return agg / jnp.maximum(cnt, 1.0)[:, None]

    agg = jax.vmap(per_batch)(simi, value, d_idx)
    upd = mlp(agg.reshape(-1, C), params["update"]).reshape(B, N, C)
    return jnp.transpose(upd + ivf, (0, 2, 1))


# ---------------------------------------------------------------------------
if __name__ == "__main__":
    B, N, E = 2, 16, 32
    C, heads = 256, 8

    root = jax.random.PRNGKey(0)
    k_xyz, k_feat, k_e1, k_e2, k_p1, k_p2, k_p3, k_p4 = jax.random.split(root, 8)

    xyz = jax.random.normal(k_xyz, (B, N, 3), jnp.float32)
    features = jax.random.normal(k_feat, (B, C, N), jnp.float32)
    edges = jnp.stack(
        [jax.random.randint(k_e1, (B, E), 0, N),
         jax.random.randint(k_e2, (B, E), 0, N)], axis=-1).astype(jnp.int32)

    params = {
        "key": init_mlp_params(k_p1, C + 3, C),
        "value": init_mlp_params(k_p2, C + 3, C),
        "query": init_mlp_params(k_p3, C + 3, C),
        "update": init_mlp_params(k_p4, C, C),
    }

    # default path (single edge tile at this toy size)
    fwd = jax.jit(functools.partial(gan_module_forward, heads=heads))
    out = fwd(xyz, features, edges, params)
    jax.block_until_ready(out)

    # multi-edge-tile path: exercises the online (streaming) segment softmax
    fwd_tiled = jax.jit(functools.partial(gan_module_forward, heads=heads, te=16))
    out_tiled = fwd_tiled(xyz, features, edges, params)
    jax.block_until_ready(out_tiled)

    ref = _reference_forward(xyz, features, edges, params, heads)

    def rel_err(a, b):
        return float(jnp.linalg.norm(a - b) / (jnp.linalg.norm(b) + 1e-12))

    assert out.shape == (B, C, N) and out.dtype == jnp.float32
    assert bool(jnp.isfinite(out).all()) and bool(jnp.isfinite(out_tiled).all())
    assert rel_err(out, ref) < 3e-2, f"rel_err={rel_err(out, ref)}"
    assert rel_err(out_tiled, ref) < 3e-2, f"rel_err={rel_err(out_tiled, ref)}"
    print("KERNEL_OK")
</pallas_src>

<mosaic_0001>
module attributes {stable_mosaic.version = 11 : i64} {
  func.func @_mlp_ln_kernel(%arg0: i32, %arg1: memref<64x384xf32, #tpu.memory_space<vmem>>, %arg2: memref<384x512xf32, #tpu.memory_space<vmem>>, %arg3: memref<1x512xf32, #tpu.memory_space<vmem>>, %arg4: memref<1x512xf32, #tpu.memory_space<vmem>>, %arg5: memref<1x512xf32, #tpu.memory_space<vmem>>, %arg6: memref<64x512xf32, #tpu.memory_space<vmem>>) attributes {dimension_semantics = [#tpu.dimension_semantics<parallel>], iteration_bounds = array<i64: 1>, scalar_prefetch = 0 : i64, scratch_operands = 0 : i64, tpu.core_type = #tpu.core_type<tc>, window_params = [{transform_indices = @transform_0, window_bounds = array<i64: 64, 384>}, {pipeline_mode = #tpu.pipeline_mode<synchronous>, transform_indices = @transform_1, window_bounds = array<i64: 384, 512>}, {pipeline_mode = #tpu.pipeline_mode<synchronous>, transform_indices = @transform_2, window_bounds = array<i64: 1, 512>}, {pipeline_mode = #tpu.pipeline_mode<synchronous>, transform_indices = @transform_3, window_bounds = array<i64: 1, 512>}, {pipeline_mode = #tpu.pipeline_mode<synchronous>, transform_indices = @transform_4, window_bounds = array<i64: 1, 512>}, {transform_indices = @transform_5, window_bounds = array<i64: 64, 512>}]} {
    %c0 = arith.constant 0 : index
    %c0_0 = arith.constant 0 : index
    %0 = vector.load %arg1[%c0, %c0_0] : memref<64x384xf32, #tpu.memory_space<vmem>>, vector<64x384xf32>
    %c0_1 = arith.constant 0 : index
    %c0_2 = arith.constant 0 : index
    %1 = vector.load %arg2[%c0_1, %c0_2] : memref<384x512xf32, #tpu.memory_space<vmem>>, vector<384x512xf32>
    %cst = arith.constant dense<0.000000e+00> : vector<64x512xf32>
    %2 = tpu.matmul %0, %1, %cst {dimension_numbers = #tpu.dot_dimension_numbers<[1], [0], [0], [1], [0, 0, 1, 1], [], []>} : vector<64x384xf32>, vector<384x512xf32>, vector<64x512xf32> -> vector<64x512xf32>
    %c0_3 = arith.constant 0 : index
    %c0_4 = arith.constant 0 : index
    %3 = vector.load %arg3[%c0_3, %c0_4] : memref<1x512xf32, #tpu.memory_space<vmem>>, vector<1x512xf32>
    %4 = vector.broadcast %3 : vector<1x512xf32> to vector<64x512xf32>
    %5 = arith.addf %2, %4 : vector<64x512xf32>
    %cst_5 = arith.constant 0.000000e+00 : f32
    %6 = vector.broadcast %cst_5 : f32 to vector<64x512xf32>
    %7 = arith.maximumf %5, %6 : vector<64x512xf32>
    %8 = vector.extract_strided_slice %7 {offsets = [0, 0], sizes = [64, 256], strides = [1, 1]} : vector<64x512xf32> to vector<64x256xf32>
    %cst_6 = arith.constant dense<0.000000e+00> : vector<64xf32>
    %9 = vector.multi_reduction <add>, %8, %cst_6 [1] : vector<64x256xf32> to vector<64xf32>
    %10 = vector.shape_cast %9 : vector<64xf32> to vector<64x1xf32>
    %cst_7 = arith.constant 2.560000e+02 : f32
    %11 = vector.broadcast %cst_7 : f32 to vector<64x1xf32>
    %12 = arith.divf %10, %11 : vector<64x1xf32>
    %13 = arith.mulf %8, %8 : vector<64x256xf32>
    %cst_8 = arith.constant dense<0.000000e+00> : vector<64xf32>
    %14 = vector.multi_reduction <add>, %13, %cst_8 [1] : vector<64x256xf32> to vector<64xf32>
    %15 = vector.shape_cast %14 : vector<64xf32> to vector<64x1xf32>
    %cst_9 = arith.constant 2.560000e+02 : f32
    %16 = vector.broadcast %cst_9 : f32 to vector<64x1xf32>
    %17 = arith.divf %15, %16 : vector<64x1xf32>
    %18 = arith.mulf %12, %12 : vector<64x1xf32>
    %19 = arith.subf %17, %18 : vector<64x1xf32>
    %20 = vector.broadcast %12 : vector<64x1xf32> to vector<64x256xf32>
    %21 = arith.subf %8, %20 : vector<64x256xf32>
    %cst_10 = arith.constant 9.99999974E-6 : f32
    %22 = vector.broadcast %cst_10 : f32 to vector<64x1xf32>
    %23 = arith.addf %19, %22 : vector<64x1xf32>
    %24 = math.rsqrt %23 : vector<64x1xf32>
    %25 = vector.broadcast %24 : vector<64x1xf32> to vector<64x256xf32>
    %26 = arith.mulf %21, %25 : vector<64x256xf32>
    %27 = vector.extract_strided_slice %7 {offsets = [0, 256], sizes = [64, 256], strides = [1, 1]} : vector<64x512xf32> to vector<64x256xf32>
    %cst_11 = arith.constant dense<0.000000e+00> : vector<64xf32>
    %28 = vector.multi_reduction <add>, %27, %cst_11 [1] : vector<64x256xf32> to vector<64xf32>
    %29 = vector.shape_cast %28 : vector<64xf32> to vector<64x1xf32>
    %cst_12 = arith.constant 2.560000e+02 : f32
    %30 = vector.broadcast %cst_12 : f32 to vector<64x1xf32>
    %31 = arith.divf %29, %30 : vector<64x1xf32>
    %32 = arith.mulf %27, %27 : vector<64x256xf32>
    %cst_13 = arith.constant dense<0.000000e+00> : vector<64xf32>
    %33 = vector.multi_reduction <add>, %32, %cst_13 [1] : vector<64x256xf32> to vector<64xf32>
    %34 = vector.shape_cast %33 : vector<64xf32> to vector<64x1xf32>
    %cst_14 = arith.constant 2.560000e+02 : f32
    %35 = vector.broadcast %cst_14 : f32 to vector<64x1xf32>
    %36 = arith.divf %34, %35 : vector<64x1xf32>
    %37 = arith.mulf %31, %31 : vector<64x1xf32>
    %38 = arith.subf %36, %37 : vector<64x1xf32>
    %39 = vector.broadcast %31 : vector<64x1xf32> to vector<64x256xf32>
    %40 = arith.subf %27, %39 : vector<64x256xf32>
    %cst_15 = arith.constant 9.99999974E-6 : f32
    %41 = vector.broadcast %cst_15 : f32 to vector<64x1xf32>
    %42 = arith.addf %38, %41 : vector<64x1xf32>
    %43 = math.rsqrt %42 : vector<64x1xf32>
    %44 = vector.broadcast %43 : vector<64x1xf32> to vector<64x256xf32>
    %45 = arith.mulf %40, %44 : vector<64x256xf32>
    %46 = tpu.concatenate %26, %45 in 1 : vector<64x256xf32>, vector<64x256xf32> -> vector<64x512xf32>
    %c0_16 = arith.constant 0 : index
    %c0_17 = arith.constant 0 : index
    %47 = vector.load %arg4[%c0_16, %c0_17] : memref<1x512xf32, #tpu.memory_space<vmem>>, vector<1x512xf32>
    %48 = vector.broadcast %47 : vector<1x512xf32> to vector<64x512xf32>
    %49 = arith.mulf %46, %48 : vector<64x512xf32>
    %c0_18 = arith.constant 0 : index
    %c0_19 = arith.constant 0 : index
    %50 = vector.load %arg5[%c0_18, %c0_19] : memref<1x512xf32, #tpu.memory_space<vmem>>, vector<1x512xf32>
    %51 = vector.broadcast %50 : vector<1x512xf32> to vector<64x512xf32>
    %52 = arith.addf %49, %51 : vector<64x512xf32>
    %c0_20 = arith.constant 0 : index
    %c0_21 = arith.constant 0 : index
    %53 = vector.load %arg6[%c0_20, %c0_21] : memref<64x512xf32, #tpu.memory_space<vmem>>, vector<64x512xf32>
    tpu.vector_store %arg6[%c0_20, %c0_21], %52 {strides = array<i32>} : memref<64x512xf32, #tpu.memory_space<vmem>>, vector<64x512xf32>,
    return
  }
  func.func @transform_0(%arg0: i32) -> (i32, i32) {
    %c0_i32 = arith.constant 0 : i32
    %c0_i32_0 = arith.constant 0 : i32
    return %arg0, %c0_i32 : i32, i32
  }
  func.func @transform_1(%arg0: i32) -> (i32, i32) {
    %c0_i32 = arith.constant 0 : i32
    %c0_i32_0 = arith.constant 0 : i32
    %c0_i32_1 = arith.constant 0 : i32
    return %c0_i32, %c0_i32_0 : i32, i32
  }
  func.func @transform_2(%arg0: i32) -> (i32, i32) {
    %c0_i32 = arith.constant 0 : i32
    %c0_i32_0 = arith.constant 0 : i32
    %c0_i32_1 = arith.constant 0 : i32
    return %c0_i32, %c0_i32_0 : i32, i32
  }
  func.func @transform_3(%arg0: i32) -> (i32, i32) {
    %c0_i32 = arith.constant 0 : i32
    %c0_i32_0 = arith.constant 0 : i32
    %c0_i32_1 = arith.constant 0 : i32
    return %c0_i32, %c0_i32_0 : i32, i32
  }
  func.func @transform_4(%arg0: i32) -> (i32, i32) {
    %c0_i32 = arith.constant 0 : i32
    %c0_i32_0 = arith.constant 0 : i32
    %c0_i32_1 = arith.constant 0 : i32
    return %c0_i32, %c0_i32_0 : i32, i32
  }
  func.func @transform_5(%arg0: i32) -> (i32, i32) {
    %c0_i32 = arith.constant 0 : i32
    %c0_i32_0 = arith.constant 0 : i32
    return %arg0, %c0_i32 : i32, i32
  }
}

module attributes {stable_mosaic.version = 11 : i64} {
  func.func @_mlp_ln_kernel(%arg0: i32, %arg1: memref<64x384xf32, #tpu.memory_space<vmem>>, %arg2: memref<384x256xf32, #tpu.memory_space<vmem>>, %arg3: memref<1x256xf32, #tpu.memory_space<vmem>>, %arg4: memref<1x256xf32, #tpu.memory_space<vmem>>, %arg5: memref<1x256xf32, #tpu.memory_space<vmem>>, %arg6: memref<64x256xf32, #tpu.memory_space<vmem>>) attributes {dimension_semantics = [#tpu.dimension_semantics<parallel>], iteration_bounds = array<i64: 1>, scalar_prefetch = 0 : i64, scratch_operands = 0 : i64, tpu.core_type = #tpu.core_type<tc>, window_params = [{transform_indices = @transform_0, window_bounds = array<i64: 64, 384>}, {pipeline_mode = #tpu.pipeline_mode<synchronous>, transform_indices = @transform_1, window_bounds = array<i64: 384, 256>}, {pipeline_mode = #tpu.pipeline_mode<synchronous>, transform_indices = @transform_2, window_bounds = array<i64: 1, 256>}, {pipeline_mode = #tpu.pipeline_mode<synchronous>, transform_indices = @transform_3, window_bounds = array<i64: 1, 256>}, {pipeline_mode = #tpu.pipeline_mode<synchronous>, transform_indices = @transform_4, window_bounds = array<i64: 1, 256>}, {transform_indices = @transform_5, window_bounds = array<i64: 64, 256>}]} {
    %c0 = arith.constant 0 : index
    %c0_0 = arith.constant 0 : index
    %0 = vector.load %arg1[%c0, %c0_0] : memref<64x384xf32, #tpu.memory_space<vmem>>, vector<64x384xf32>
    %c0_1 = arith.constant 0 : index
    %c0_2 = arith.constant 0 : index
    %1 = vector.load %arg2[%c0_1, %c0_2] : memref<384x256xf32, #tpu.memory_space<vmem>>, vector<384x256xf32>
    %cst = arith.constant dense<0.000000e+00> : vector<64x256xf32>
    %2 = tpu.matmul %0, %1, %cst {dimension_numbers = #tpu.dot_dimension_numbers<[1], [0], [0], [1], [0, 0, 1, 1], [], []>} : vector<64x384xf32>, vector<384x256xf32>, vector<64x256xf32> -> vector<64x256xf32>
    %c0_3 = arith.constant 0 : index
    %c0_4 = arith.constant 0 : index
    %3 = vector.load %arg3[%c0_3, %c0_4] : memref<1x256xf32, #tpu.memory_space<vmem>>, vector<1x256xf32>
    %4 = vector.broadcast %3 : vector<1x256xf32> to vector<64x256xf32>
    %5 = arith.addf %2, %4 : vector<64x256xf32>
    %cst_5 = arith.constant 0.000000e+00 : f32
    %6 = vector.broadcast %cst_5 : f32 to vector<64x256xf32>
    %7 = arith.maximumf %5, %6 : vector<64x256xf32>
    %cst_6 = arith.constant dense<0.000000e+00> : vector<64xf32>
    %8 = vector.multi_reduction <add>, %7, %cst_6 [1] : vector<64x256xf32> to vector<64xf32>
    %9 = vector.shape_cast %8 : vector<64xf32> to vector<64x1xf32>
    %cst_7 = arith.constant 2.560000e+02 : f32
    %10 = vector.broadcast %cst_7 : f32 to vector<64x1xf32>
    %11 = arith.divf %9, %10 : vector<64x1xf32>
    %12 = arith.mulf %7, %7 : vector<64x256xf32>
    %cst_8 = arith.constant dense<0.000000e+00> : vector<64xf32>
    %13 = vector.multi_reduction <add>, %12, %cst_8 [1] : vector<64x256xf32> to vector<64xf32>
    %14 = vector.shape_cast %13 : vector<64xf32> to vector<64x1xf32>
    %cst_9 = arith.constant 2.560000e+02 : f32
    %15 = vector.broadcast %cst_9 : f32 to vector<64x1xf32>
    %16 = arith.divf %14, %15 : vector<64x1xf32>
    %17 = arith.mulf %11, %11 : vector<64x1xf32>
    %18 = arith.subf %16, %17 : vector<64x1xf32>
    %19 = vector.broadcast %11 : vector<64x1xf32> to vector<64x256xf32>
    %20 = arith.subf %7, %19 : vector<64x256xf32>
    %cst_10 = arith.constant 9.99999974E-6 : f32
    %21 = vector.broadcast %cst_10 : f32 to vector<64x1xf32>
    %22 = arith.addf %18, %21 : vector<64x1xf32>
    %23 = math.rsqrt %22 : vector<64x1xf32>
    %24 = vector.broadcast %23 : vector<64x1xf32> to vector<64x256xf32>
    %25 = arith.mulf %20, %24 : vector<64x256xf32>
    %c0_11 = arith.constant 0 : index
    %c0_12 = arith.constant 0 : index
    %26 = vector.load %arg4[%c0_11, %c0_12] : memref<1x256xf32, #tpu.memory_space<vmem>>, vector<1x256xf32>
    %27 = vector.broadcast %26 : vector<1x256xf32> to vector<64x256xf32>
    %28 = arith.mulf %25, %27 : vector<64x256xf32>
    %c0_13 = arith.constant 0 : index
    %c0_14 = arith.constant 0 : index
    %29 = vector.load %arg5[%c0_13, %c0_14] : memref<1x256xf32, #tpu.memory_space<vmem>>, vector<1x256xf32>
    %30 = vector.broadcast %29 : vector<1x256xf32> to vector<64x256xf32>
    %31 = arith.addf %28, %30 : vector<64x256xf32>
    %c0_15 = arith.constant 0 : index
    %c0_16 = arith.constant 0 : index
    %32 = vector.load %arg6[%c0_15, %c0_16] : memref<64x256xf32, #tpu.memory_space<vmem>>, vector<64x256xf32>
    tpu.vector_store %arg6[%c0_15, %c0_16], %31 {strides = array<i32>} : memref<64x256xf32, #tpu.memory_space<vmem>>, vector<64x256xf32>,
    return
  }
  func.func @transform_0(%arg0: i32) -> (i32, i32) {
    %c0_i32 = arith.constant 0 : i32
    %c0_i32_0 = arith.constant 0 : i32
    return %arg0, %c0_i32 : i32, i32
  }
  func.func @transform_1(%arg0: i32) -> (i32, i32) {
    %c0_i32 = arith.constant 0 : i32
    %c0_i32_0 = arith.constant 0 : i32
    %c0_i32_1 = arith.constant 0 : i32
    return %c0_i32, %c0_i32_0 : i32, i32
  }
  func.func @transform_2(%arg0: i32) -> (i32, i32) {
    %c0_i32 = arith.constant 0 : i32
    %c0_i32_0 = arith.constant 0 : i32
    %c0_i32_1 = arith.constant 0 : i32
    return %c0_i32, %c0_i32_0 : i32, i32
  }
  func.func @transform_3(%arg0: i32) -> (i32, i32) {
    %c0_i32 = arith.constant 0 : i32
    %c0_i32_0 = arith.constant 0 : i32
    %c0_i32_1 = arith.constant 0 : i32
    return %c0_i32, %c0_i32_0 : i32, i32
  }
  func.func @transform_4(%arg0: i32) -> (i32, i32) {
    %c0_i32 = arith.constant 0 : i32
    %c0_i32_0 = arith.constant 0 : i32
    %c0_i32_1 = arith.constant 0 : i32
    return %c0_i32, %c0_i32_0 : i32, i32
  }
  func.func @transform_5(%arg0: i32) -> (i32, i32) {
    %c0_i32 = arith.constant 0 : i32
    %c0_i32_0 = arith.constant 0 : i32
    return %arg0, %c0_i32 : i32, i32
  }
}

module attributes {stable_mosaic.version = 11 : i64} {
  func.func @_attn_update_kernel(%arg0: i32, %arg1: i32, %arg2: memref<1x32x512xf32, #tpu.memory_space<vmem>>, %arg3: memref<1x32x256xf32, #tpu.memory_space<vmem>>, %arg4: memref<1x32x1xi32, #tpu.memory_space<vmem>>, %arg5: memref<256x8xf32, #tpu.memory_space<vmem>>, %arg6: memref<8x256xf32, #tpu.memory_space<vmem>>, %arg7: memref<256x256xf32, #tpu.memory_space<vmem>>, %arg8: memref<1x256xf32, #tpu.memory_space<vmem>>, %arg9: memref<1x256xf32, #tpu.memory_space<vmem>>, %arg10: memref<1x256xf32, #tpu.memory_space<vmem>>, %arg11: memref<1x16x256xf32, #tpu.memory_space<vmem>>, %arg12: memref<1x16x256xf32, #tpu.memory_space<vmem>>, %arg13: memref<8x16xf32, #tpu.memory_space<vmem>>, %arg14: memref<8x16xf32, #tpu.memory_space<vmem>>, %arg15: memref<1x16xf32, #tpu.memory_space<vmem>>, %arg16: memref<16x256xf32, #tpu.memory_space<vmem>>) attributes {dimension_semantics = [#tpu.dimension_semantics<parallel>, #tpu.dimension_semantics<arbitrary>], iteration_bounds = array<i64: 2, 1>, scalar_prefetch = 0 : i64, scratch_operands = 4 : i64, tpu.core_type = #tpu.core_type<tc>, window_params = [{transform_indices = @transform_0, window_bounds = array<i64: 1, 32, 512>}, {transform_indices = @transform_1, window_bounds = array<i64: 1, 32, 256>}, {transform_indices = @transform_2, window_bounds = array<i64: 1, 32, 1>}, {pipeline_mode = #tpu.pipeline_mode<synchronous>, transform_indices = @transform_3, window_bounds = array<i64: 256, 8>}, {pipeline_mode = #tpu.pipeline_mode<synchronous>, transform_indices = @transform_4, window_bounds = array<i64: 8, 256>}, {pipeline_mode = #tpu.pipeline_mode<synchronous>, transform_indices = @transform_5, window_bounds = array<i64: 256, 256>}, {pipeline_mode = #tpu.pipeline_mode<synchronous>, transform_indices = @transform_6, window_bounds = array<i64: 1, 256>}, {pipeline_mode = #tpu.pipeline_mode<synchronous>, transform_indices = @transform_7, window_bounds = array<i64: 1, 256>}, {pipeline_mode = #tpu.pipeline_mode<synchronous>, transform_indices = @transform_8, window_bounds = array<i64: 1, 256>}, {transform_indices = @transform_9, window_bounds = array<i64: 1, 16, 256>}, {transform_indices = @transform_10, window_bounds = array<i64: 1, 16, 256>}]} {
    %c0_i32 = arith.constant 0 : i32
    %0 = arith.cmpi eq, %arg1, %c0_i32 : i32
    %1 = arith.extui %0 : i1 to i32
    %c0_i32_0 = arith.constant 0 : i32
    %2 = arith.cmpi ne, %1, %c0_i32_0 : i32
    scf.if %2 {
      %cst_56 = arith.constant -1.000000e+30 : f32
      %113 = vector.broadcast %cst_56 : f32 to vector<8x16xf32>
      %c0_57 = arith.constant 0 : index
      %c0_58 = arith.constant 0 : index
      %114 = vector.load %arg13[%c0_57, %c0_58] : memref<8x16xf32, #tpu.memory_space<vmem>>, vector<8x16xf32>
      tpu.vector_store %arg13[%c0_57, %c0_58], %113 {strides = array<i32>} : memref<8x16xf32, #tpu.memory_space<vmem>>, vector<8x16xf32>,
      %cst_59 = arith.constant 0.000000e+00 : f32
      %115 = vector.broadcast %cst_59 : f32 to vector<8x16xf32>
      %c0_60 = arith.constant 0 : index
      %c0_61 = arith.constant 0 : index
      %116 = vector.load %arg14[%c0_60, %c0_61] : memref<8x16xf32, #tpu.memory_space<vmem>>, vector<8x16xf32>
      tpu.vector_store %arg14[%c0_60, %c0_61], %115 {strides = array<i32>} : memref<8x16xf32, #tpu.memory_space<vmem>>, vector<8x16xf32>,
      %cst_62 = arith.constant 0.000000e+00 : f32
      %117 = vector.broadcast %cst_62 : f32 to vector<1x16xf32>
      %c0_63 = arith.constant 0 : index
      %c0_64 = arith.constant 0 : index
      %118 = vector.load %arg15[%c0_63, %c0_64] : memref<1x16xf32, #tpu.memory_space<vmem>>, vector<1x16xf32>
      tpu.vector_store %arg15[%c0_63, %c0_64], %117 {strides = array<i32>} : memref<1x16xf32, #tpu.memory_space<vmem>>, vector<1x16xf32>,
      %cst_65 = arith.constant 0.000000e+00 : f32
      %119 = vector.broadcast %cst_65 : f32 to vector<16x256xf32>
      %c0_66 = arith.constant 0 : index
      %c0_67 = arith.constant 0 : index
      %120 = vector.load %arg16[%c0_66, %c0_67] : memref<16x256xf32, #tpu.memory_space<vmem>>, vector<16x256xf32>
      tpu.vector_store %arg16[%c0_66, %c0_67], %119 {strides = array<i32>} : memref<16x256xf32, #tpu.memory_space<vmem>>, vector<16x256xf32>,
    } else {
    }
    %c0 = arith.constant 0 : index
    %c0_1 = arith.constant 0 : index
    %c0_2 = arith.constant 0 : index
    %3 = vector.load %arg2[%c0, %c0_1, %c0_2] : memref<1x32x512xf32, #tpu.memory_space<vmem>>, vector<1x32x512xf32>
    %4 = vector.shape_cast %3 : vector<1x32x512xf32> to vector<32x512xf32>
    %5 = vector.extract_strided_slice %4 {offsets = [0, 0], sizes = [32, 256], strides = [1, 1]} : vector<32x512xf32> to vector<32x256xf32>
    %6 = vector.extract_strided_slice %4 {offsets = [0, 256], sizes = [32, 256], strides = [1, 1]} : vector<32x512xf32> to vector<32x256xf32>
    %c0_3 = arith.constant 0 : index
    %c0_4 = arith.constant 0 : index
    %c0_5 = arith.constant 0 : index
    %7 = vector.load %arg3[%c0_3, %c0_4, %c0_5] : memref<1x32x256xf32, #tpu.memory_space<vmem>>, vector<1x32x256xf32>
    %8 = vector.shape_cast %7 : vector<1x32x256xf32> to vector<32x256xf32>
    %c0_6 = arith.constant 0 : index
    %c0_7 = arith.constant 0 : index
    %c0_8 = arith.constant 0 : index
    %9 = vector.load %arg4[%c0_6, %c0_7, %c0_8] : memref<1x32x1xi32, #tpu.memory_space<vmem>>, vector<1x32x1xi32>
    %10 = vector.shape_cast %9 : vector<1x32x1xi32> to vector<32x1xi32>
    %c0_9 = arith.constant 0 : index
    %c0_10 = arith.constant 0 : index
    %11 = vector.load %arg5[%c0_9, %c0_10] : memref<256x8xf32, #tpu.memory_space<vmem>>, vector<256x8xf32>
    %c0_11 = arith.constant 0 : index
    %c0_12 = arith.constant 0 : index
    %12 = vector.load %arg6[%c0_11, %c0_12] : memref<8x256xf32, #tpu.memory_space<vmem>>, vector<8x256xf32>
    %13 = tpu.iota {dimensions = array<i32: 1>} : vector<32x16xi32>
    %14 = vector.broadcast %10 : vector<32x1xi32> to vector<32x16xi32>
    %15 = arith.cmpi eq, %13, %14 : vector<32x16xi32>
    %16 = arith.extui %15 : vector<32x16xi1> to vector<32x16xi32>
    %17 = arith.sitofp %16 : vector<32x16xi32> to vector<32x16xf32>
    %18 = arith.truncf %17 : vector<32x16xf32> to vector<32x16xbf16>
    %19 = arith.mulf %5, %8 : vector<32x256xf32>
    %20 = arith.truncf %19 : vector<32x256xf32> to vector<32x256xbf16>
    %21 = arith.truncf %11 : vector<256x8xf32> to vector<256x8xbf16>
    %cst = arith.constant dense<0.000000e+00> : vector<32x8xf32>
    %22 = tpu.matmul %20, %21, %cst {dimension_numbers = #tpu.dot_dimension_numbers<[1], [0], [0], [1], [0, 0, 1, 1], [], []>} : vector<32x256xbf16>, vector<256x8xbf16>, vector<32x8xf32> -> vector<32x8xf32>
    %cst_13 = arith.constant 0.176776692 : f32
    %23 = vector.broadcast %cst_13 : f32 to vector<32x8xf32>
    %24 = arith.mulf %22, %23 : vector<32x8xf32>
    %25 = vector.extract_strided_slice %24 {offsets = [0, 0], sizes = [32, 1], strides = [1, 1]} : vector<32x8xf32> to vector<32x1xf32>
    %cst_14 = arith.constant -1.000000e+30 : f32
    %26 = vector.shape_cast %25 : vector<32x1xf32> to vector<32x1xf32>
    %27 = vector.broadcast %26 : vector<32x1xf32> to vector<32x16xf32>
    %28 = vector.broadcast %cst_14 : f32 to vector<32x16xf32>
    %29 = arith.select %15, %27, %28 : vector<32x16xi1>, vector<32x16xf32>
    %cst_15 = arith.constant dense<0xFF800000> : vector<16xf32>
    %30 = vector.multi_reduction <maximumf>, %29, %cst_15 [0] : vector<32x16xf32> to vector<16xf32>
    %31 = vector.shape_cast %30 : vector<16xf32> to vector<1x16xf32>
    %32 = vector.extract_strided_slice %24 {offsets = [0, 1], sizes = [32, 1], strides = [1, 1]} : vector<32x8xf32> to vector<32x1xf32>
    %cst_16 = arith.constant -1.000000e+30 : f32
    %33 = vector.shape_cast %32 : vector<32x1xf32> to vector<32x1xf32>
    %34 = vector.broadcast %33 : vector<32x1xf32> to vector<32x16xf32>
    %35 = vector.broadcast %cst_16 : f32 to vector<32x16xf32>
    %36 = arith.select %15, %34, %35 : vector<32x16xi1>, vector<32x16xf32>
    %cst_17 = arith.constant dense<0xFF800000> : vector<16xf32>
    %37 = vector.multi_reduction <maximumf>, %36, %cst_17 [0] : vector<32x16xf32> to vector<16xf32>
    %38 = vector.shape_cast %37 : vector<16xf32> to vector<1x16xf32>
    %39 = vector.extract_strided_slice %24 {offsets = [0, 2], sizes = [32, 1], strides = [1, 1]} : vector<32x8xf32> to vector<32x1xf32>
    %cst_18 = arith.constant -1.000000e+30 : f32
    %40 = vector.shape_cast %39 : vector<32x1xf32> to vector<32x1xf32>
    %41 = vector.broadcast %40 : vector<32x1xf32> to vector<32x16xf32>
    %42 = vector.broadcast %cst_18 : f32 to vector<32x16xf32>
    %43 = arith.select %15, %41, %42 : vector<32x16xi1>, vector<32x16xf32>
    %cst_19 = arith.constant dense<0xFF800000> : vector<16xf32>
    %44 = vector.multi_reduction <maximumf>, %43, %cst_19 [0] : vector<32x16xf32> to vector<16xf32>
    %45 = vector.shape_cast %44 : vector<16xf32> to vector<1x16xf32>
    %46 = vector.extract_strided_slice %24 {offsets = [0, 3], sizes = [32, 1], strides = [1, 1]} : vector<32x8xf32> to vector<32x1xf32>
    %cst_20 = arith.constant -1.000000e+30 : f32
    %47 = vector.shape_cast %46 : vector<32x1xf32> to vector<32x1xf32>
    %48 = vector.broadcast %47 : vector<32x1xf32> to vector<32x16xf32>
    %49 = vector.broadcast %cst_20 : f32 to vector<32x16xf32>
    %50 = arith.select %15, %48, %49 : vector<32x16xi1>, vector<32x16xf32>
    %cst_21 = arith.constant dense<0xFF800000> : vector<16xf32>
    %51 = vector.multi_reduction <maximumf>, %50, %cst_21 [0] : vector<32x16xf32> to vector<16xf32>
    %52 = vector.shape_cast %51 : vector<16xf32> to vector<1x16xf32>
    %53 = vector.extract_strided_slice %24 {offsets = [0, 4], sizes = [32, 1], strides = [1, 1]} : vector<32x8xf32> to vector<32x1xf32>
    %cst_22 = arith.constant -1.000000e+30 : f32
    %54 = vector.shape_cast %53 : vector<32x1xf32> to vector<32x1xf32>
    %55 = vector.broadcast %54 : vector<32x1xf32> to vector<32x16xf32>
    %56 = vector.broadcast %cst_22 : f32 to vector<32x16xf32>
    %57 = arith.select %15, %55, %56 : vector<32x16xi1>, vector<32x16xf32>
    %cst_23 = arith.constant dense<0xFF800000> : vector<16xf32>
    %58 = vector.multi_reduction <maximumf>, %57, %cst_23 [0] : vector<32x16xf32> to vector<16xf32>
    %59 = vector.shape_cast %58 : vector<16xf32> to vector<1x16xf32>
    %60 = vector.extract_strided_slice %24 {offsets = [0, 5], sizes = [32, 1], strides = [1, 1]} : vector<32x8xf32> to vector<32x1xf32>
    %cst_24 = arith.constant -1.000000e+30 : f32
    %61 = vector.shape_cast %60 : vector<32x1xf32> to vector<32x1xf32>
    %62 = vector.broadcast %61 : vector<32x1xf32> to vector<32x16xf32>
    %63 = vector.broadcast %cst_24 : f32 to vector<32x16xf32>
    %64 = arith.select %15, %62, %63 : vector<32x16xi1>, vector<32x16xf32>
    %cst_25 = arith.constant dense<0xFF800000> : vector<16xf32>
    %65 = vector.multi_reduction <maximumf>, %64, %cst_25 [0] : vector<32x16xf32> to vector<16xf32>
    %66 = vector.shape_cast %65 : vector<16xf32> to vector<1x16xf32>
    %67 = vector.extract_strided_slice %24 {offsets = [0, 6], sizes = [32, 1], strides = [1, 1]} : vector<32x8xf32> to vector<32x1xf32>
    %cst_26 = arith.constant -1.000000e+30 : f32
    %68 = vector.shape_cast %67 : vector<32x1xf32> to vector<32x1xf32>
    %69 = vector.broadcast %68 : vector<32x1xf32> to vector<32x16xf32>
    %70 = vector.broadcast %cst_26 : f32 to vector<32x16xf32>
    %71 = arith.select %15, %69, %70 : vector<32x16xi1>, vector<32x16xf32>
    %cst_27 = arith.constant dense<0xFF800000> : vector<16xf32>
    %72 = vector.multi_reduction <maximumf>, %71, %cst_27 [0] : vector<32x16xf32> to vector<16xf32>
    %73 = vector.shape_cast %72 : vector<16xf32> to vector<1x16xf32>
    %74 = vector.extract_strided_slice %24 {offsets = [0, 7], sizes = [32, 1], strides = [1, 1]} : vector<32x8xf32> to vector<32x1xf32>
    %cst_28 = arith.constant -1.000000e+30 : f32
    %75 = vector.shape_cast %74 : vector<32x1xf32> to vector<32x1xf32>
    %76 = vector.broadcast %75 : vector<32x1xf32> to vector<32x16xf32>
    %77 = vector.broadcast %cst_28 : f32 to vector<32x16xf32>
    %78 = arith.select %15, %76, %77 : vector<32x16xi1>, vector<32x16xf32>
    %cst_29 = arith.constant dense<0xFF800000> : vector<16xf32>
    %79 = vector.multi_reduction <maximumf>, %78, %cst_29 [0] : vector<32x16xf32> to vector<16xf32>
    %80 = vector.shape_cast %79 : vector<16xf32> to vector<1x16xf32>
    %81 = tpu.concatenate %31, %38, %45, %52, %59, %66, %73, %80 in 0 : vector<1x16xf32>, vector<1x16xf32>, vector<1x16xf32>, vector<1x16xf32>, vector<1x16xf32>, vector<1x16xf32>, vector<1x16xf32>, vector<1x16xf32> -> vector<8x16xf32>
    %c0_30 = arith.constant 0 : index
    %c0_31 = arith.constant 0 : index
    %82 = vector.load %arg13[%c0_30, %c0_31] : memref<8x16xf32, #tpu.memory_space<vmem>>, vector<8x16xf32>
    %83 = arith.maximumf %82, %81 : vector<8x16xf32>
    %c0_32 = arith.constant 0 : index
    %c0_33 = arith.constant 0 : index
    %84 = vector.load %arg13[%c0_32, %c0_33] : memref<8x16xf32, #tpu.memory_space<vmem>>, vector<8x16xf32>
    %85 = arith.subf %84, %83 : vector<8x16xf32>
    %86 = math.exp %85 : vector<8x16xf32>
    %c0_34 = arith.constant 0 : index
    %c0_35 = arith.constant 0 : index
    %87 = vector.load %arg13[%c0_34, %c0_35] : memref<8x16xf32, #tpu.memory_space<vmem>>, vector<8x16xf32>
    tpu.vector_store %arg13[%c0_34, %c0_35], %83 {strides = array<i32>} : memref<8x16xf32, #tpu.memory_space<vmem>>, vector<8x16xf32>,
    %cst_36 = arith.constant dense<0.000000e+00> : vector<32x8xf32>
    %88 = tpu.matmul %17, %83, %cst_36 {dimension_numbers = #tpu.dot_dimension_numbers<[1], [1], [0], [0], [0, 0, 1, 0], [], []>} : vector<32x16xf32>, vector<8x16xf32>, vector<32x8xf32> -> vector<32x8xf32>
    %89 = arith.subf %24, %88 : vector<32x8xf32>
    %90 = math.exp %89 : vector<32x8xf32>
    %c0_37 = arith.constant 0 : index
    %c0_38 = arith.constant 0 : index
    %91 = vector.load %arg14[%c0_37, %c0_38] : memref<8x16xf32, #tpu.memory_space<vmem>>, vector<8x16xf32>
    %92 = arith.mulf %86, %91 : vector<8x16xf32>
    %cst_39 = arith.constant dense<0.000000e+00> : vector<8x16xf32>
    %93 = tpu.matmul %90, %17, %cst_39 {dimension_numbers = #tpu.dot_dimension_numbers<[0], [0], [1], [1], [0, 1, 1, 1], [], []>} : vector<32x8xf32>, vector<32x16xf32>, vector<8x16xf32> -> vector<8x16xf32>
    %94 = arith.addf %92, %93 : vector<8x16xf32>
    %c0_40 = arith.constant 0 : index
    %c0_41 = arith.constant 0 : index
    %95 = vector.load %arg14[%c0_40, %c0_41] : memref<8x16xf32, #tpu.memory_space<vmem>>, vector<8x16xf32>
    tpu.vector_store %arg14[%c0_40, %c0_41], %94 {strides = array<i32>} : memref<8x16xf32, #tpu.memory_space<vmem>>, vector<8x16xf32>,
    %c0_42 = arith.constant 0 : index
    %c0_43 = arith.constant 0 : index
    %96 = vector.load %arg15[%c0_42, %c0_43] : memref<1x16xf32, #tpu.memory_space<vmem>>, vector<1x16xf32>
    %cst_44 = arith.constant dense<0.000000e+00> : vector<16xf32>
    %97 = vector.multi_reduction <add>, %17, %cst_44 [0] : vector<32x16xf32> to vector<16xf32>
    %98 = vector.shape_cast %97 : vector<16xf32> to vector<1x16xf32>
    %99 = arith.addf %96, %98 : vector<1x16xf32>
    %c0_45 = arith.constant 0 : index
    %c0_46 = arith.constant 0 : index
    %100 = vector.load %arg15[%c0_45, %c0_46] : memref<1x16xf32, #tpu.memory_space<vmem>>, vector<1x16xf32>
    tpu.vector_store %arg15[%c0_45, %c0_46], %99 {strides = array<i32>} : memref<1x16xf32, #tpu.memory_space<vmem>>, vector<1x16xf32>,
    %cst_47 = arith.constant dense<0.000000e+00> : vector<16x256xf32>
    %101 = tpu.matmul %86, %12, %cst_47 {dimension_numbers = #tpu.dot_dimension_numbers<[0], [0], [1], [1], [0, 1, 1, 1], [], []>} : vector<8x16xf32>, vector<8x256xf32>, vector<16x256xf32> -> vector<16x256xf32>
    %cst_48 = arith.constant dense<0.000000e+00> : vector<32x256xf32>
    %102 = tpu.matmul %90, %12, %cst_48 {dimension_numbers = #tpu.dot_dimension_numbers<[1], [0], [0], [1], [0, 0, 1, 1], [], []>} : vector<32x8xf32>, vector<8x256xf32>, vector<32x256xf32> -> vector<32x256xf32>
    %103 = arith.mulf %102, %6 : vector<32x256xf32>
    %104 = arith.truncf %103 : vector<32x256xf32> to vector<32x256xbf16>
    %c0_49 = arith.constant 0 : index
    %c0_50 = arith.constant 0 : index
    %105 = vector.load %arg16[%c0_49, %c0_50] : memref<16x256xf32, #tpu.memory_space<vmem>>, vector<16x256xf32>
    %106 = arith.mulf %101, %105 : vector<16x256xf32>
    %cst_51 = arith.constant dense<0.000000e+00> : vector<16x256xf32>
    %107 = tpu.matmul %18, %104, %cst_51 {dimension_numbers = #tpu.dot_dimension_numbers<[0], [0], [1], [1], [0, 1, 1, 1], [], []>} : vector<32x16xbf16>, vector<32x256xbf16>, vector<16x256xf32> -> vector<16x256xf32>
    %108 = arith.addf %106, %107 : vector<16x256xf32>
    %c0_52 = arith.constant 0 : index
    %c0_53 = arith.constant 0 : index
    %109 = vector.load %arg16[%c0_52, %c0_53] : memref<16x256xf32, #tpu.memory_space<vmem>>, vector<16x256xf32>
    tpu.vector_store %arg16[%c0_52, %c0_53], %108 {strides = array<i32>} : memref<16x256xf32, #tpu.memory_space<vmem>>, vector<16x256xf32>,
    %c0_i32_54 = arith.constant 0 : i32
    %110 = arith.cmpi eq, %arg1, %c0_i32_54 : i32
    %111 = arith.extui %110 : i1 to i32
    %c0_i32_55 = arith.constant 0 : i32
    %112 = arith.cmpi ne, %111, %c0_i32_55 : i32
    scf.if %112 {
      %c0_56 = arith.constant 0 : index
      %c0_57 = arith.constant 0 : index
      %113 = vector.load %arg14[%c0_56, %c0_57] : memref<8x16xf32, #tpu.memory_space<vmem>>, vector<8x16xf32>
      %c0_58 = arith.constant 0 : index
      %c0_59 = arith.constant 0 : index
      %114 = vector.load %arg15[%c0_58, %c0_59] : memref<1x16xf32, #tpu.memory_space<vmem>>, vector<1x16xf32>
      %cst_60 = arith.constant 1.000000e+00 : f32
      %115 = vector.broadcast %cst_60 : f32 to vector<1x16xf32>
      %116 = arith.maximumf %114, %115 : vector<1x16xf32>
      %117 = vector.broadcast %116 : vector<1x16xf32> to vector<8x16xf32>
      %118 = arith.mulf %113, %117 : vector<8x16xf32>
      %cst_61 = arith.constant 9.99999968E-21 : f32
      %119 = vector.broadcast %cst_61 : f32 to vector<8x16xf32>
      %120 = arith.maximumf %118, %119 : vector<8x16xf32>
      %121 = tpu.reciprocal %120 {approx = true} : vector<8x16xf32> -> vector<8x16xf32>
      %cst_62 = arith.constant dense<0.000000e+00> : vector<16x256xf32>
      %122 = tpu.matmul %121, %12, %cst_62 {dimension_numbers = #tpu.dot_dimension_numbers<[0], [0], [1], [1], [0, 1, 1, 1], [], []>} : vector<8x16xf32>, vector<8x256xf32>, vector<16x256xf32> -> vector<16x256xf32>
      %c0_63 = arith.constant 0 : index
      %c0_64 = arith.constant 0 : index
      %123 = vector.load %arg16[%c0_63, %c0_64] : memref<16x256xf32, #tpu.memory_space<vmem>>, vector<16x256xf32>
      %124 = arith.mulf %123, %122 : vector<16x256xf32>
      %c0_65 = arith.constant 0 : index
      %c0_66 = arith.constant 0 : index
      %125 = vector.load %arg7[%c0_65, %c0_66] : memref<256x256xf32, #tpu.memory_space<vmem>>, vector<256x256xf32>
      %cst_67 = arith.constant dense<0.000000e+00> : vector<16x256xf32>
      %126 = tpu.matmul %124, %125, %cst_67 {dimension_numbers = #tpu.dot_dimension_numbers<[1], [0], [0], [1], [0, 0, 1, 1], [], []>} : vector<16x256xf32>, vector<256x256xf32>, vector<16x256xf32> -> vector<16x256xf32>
      %c0_68 = arith.constant 0 : index
      %c0_69 = arith.constant 0 : index
      %127 = vector.load %arg8[%c0_68, %c0_69] : memref<1x256xf32, #tpu.memory_space<vmem>>, vector<1x256xf32>
      %128 = vector.broadcast %127 : vector<1x256xf32> to vector<16x256xf32>
      %129 = arith.addf %126, %128 : vector<16x256xf32>
      %cst_70 = arith.constant 0.000000e+00 : f32
      %130 = vector.broadcast %cst_70 : f32 to vector<16x256xf32>
      %131 = arith.maximumf %129, %130 : vector<16x256xf32>
      %cst_71 = arith.constant dense<0.000000e+00> : vector<16xf32>
      %132 = vector.multi_reduction <add>, %131, %cst_71 [1] : vector<16x256xf32> to vector<16xf32>
      %133 = vector.shape_cast %132 : vector<16xf32> to vector<16x1xf32>
      %cst_72 = arith.constant 2.560000e+02 : f32
      %134 = vector.broadcast %cst_72 : f32 to vector<16x1xf32>
      %135 = arith.divf %133, %134 : vector<16x1xf32>
      %136 = arith.mulf %131, %131 : vector<16x256xf32>
      %cst_73 = arith.constant dense<0.000000e+00> : vector<16xf32>
      %137 = vector.multi_reduction <add>, %136, %cst_73 [1] : vector<16x256xf32> to vector<16xf32>
      %138 = vector.shape_cast %137 : vector<16xf32> to vector<16x1xf32>
      %cst_74 = arith.constant 2.560000e+02 : f32
      %139 = vector.broadcast %cst_74 : f32 to vector<16x1xf32>
      %140 = arith.divf %138, %139 : vector<16x1xf32>
      %141 = arith.mulf %135, %135 : vector<16x1xf32>
      %142 = arith.subf %140, %141 : vector<16x1xf32>
      %143 = vector.broadcast %135 : vector<16x1xf32> to vector<16x256xf32>
      %144 = arith.subf %131, %143 : vector<16x256xf32>
      %cst_75 = arith.constant 9.99999974E-6 : f32
      %145 = vector.broadcast %cst_75 : f32 to vector<16x1xf32>
      %146 = arith.addf %142, %145 : vector<16x1xf32>
      %147 = math.rsqrt %146 : vector<16x1xf32>
      %148 = vector.broadcast %147 : vector<16x1xf32> to vector<16x256xf32>
      %149 = arith.mulf %144, %148 : vector<16x256xf32>
      %c0_76 = arith.constant 0 : index
      %c0_77 = arith.constant 0 : index
      %150 = vector.load %arg9[%c0_76, %c0_77] : memref<1x256xf32, #tpu.memory_space<vmem>>, vector<1x256xf32>
      %151 = vector.broadcast %150 : vector<1x256xf32> to vector<16x256xf32>
      %152 = arith.mulf %149, %151 : vector<16x256xf32>
      %c0_78 = arith.constant 0 : index
      %c0_79 = arith.constant 0 : index
      %153 = vector.load %arg10[%c0_78, %c0_79] : memref<1x256xf32, #tpu.memory_space<vmem>>, vector<1x256xf32>
      %154 = vector.broadcast %153 : vector<1x256xf32> to vector<16x256xf32>
      %155 = arith.addf %152, %154 : vector<16x256xf32>
      %c0_80 = arith.constant 0 : index
      %c0_81 = arith.constant 0 : index
      %c0_82 = arith.constant 0 : index
      %156 = vector.load %arg11[%c0_80, %c0_81, %c0_82] : memref<1x16x256xf32, #tpu.memory_space<vmem>>, vector<1x16x256xf32>
      %157 = vector.shape_cast %156 : vector<1x16x256xf32> to vector<16x256xf32>
      %158 = arith.addf %155, %157 : vector<16x256xf32>
      %c0_83 = arith.constant 0 : index
      %c0_84 = arith.constant 0 : index
      %c0_85 = arith.constant 0 : index
      %159 = vector.load %arg12[%c0_83, %c0_84, %c0_85] : memref<1x16x256xf32, #tpu.memory_space<vmem>>, vector<1x16x256xf32>
      %160 = vector.shape_cast %159 : vector<1x16x256xf32> to vector<16x256xf32>
      %161 = vector.shape_cast %158 : vector<16x256xf32> to vector<1x16x256xf32>
      tpu.vector_store %arg12[%c0_83, %c0_84, %c0_85], %161 {strides = array<i32>} : memref<1x16x256xf32, #tpu.memory_space<vmem>>, vector<1x16x256xf32>,
    } else {
    }
    return
  }
  func.func @transform_0(%arg0: i32, %arg1: i32) -> (i32, i32, i32) {
    %c0_i32 = arith.constant 0 : i32
    %c0_i32_0 = arith.constant 0 : i32
    return %arg0, %arg1, %c0_i32 : i32, i32, i32
  }
  func.func @transform_1(%arg0: i32, %arg1: i32) -> (i32, i32, i32) {
    %c0_i32 = arith.constant 0 : i32
    %c0_i32_0 = arith.constant 0 : i32
    return %arg0, %arg1, %c0_i32 : i32, i32, i32
  }
  func.func @transform_2(%arg0: i32, %arg1: i32) -> (i32, i32, i32) {
    %c0_i32 = arith.constant 0 : i32
    %c0_i32_0 = arith.constant 0 : i32
    return %arg0, %arg1, %c0_i32 : i32, i32, i32
  }
  func.func @transform_3(%arg0: i32, %arg1: i32) -> (i32, i32) {
    %c0_i32 = arith.constant 0 : i32
    %c0_i32_0 = arith.constant 0 : i32
    %c0_i32_1 = arith.constant 0 : i32
    return %c0_i32, %c0_i32_0 : i32, i32
  }
  func.func @transform_4(%arg0: i32, %arg1: i32) -> (i32, i32) {
    %c0_i32 = arith.constant 0 : i32
    %c0_i32_0 = arith.constant 0 : i32
    %c0_i32_1 = arith.constant 0 : i32
    return %c0_i32, %c0_i32_0 : i32, i32
  }
  func.func @transform_5(%arg0: i32, %arg1: i32) -> (i32, i32) {
    %c0_i32 = arith.constant 0 : i32
    %c0_i32_0 = arith.constant 0 : i32
    %c0_i32_1 = arith.constant 0 : i32
    return %c0_i32, %c0_i32_0 : i32, i32
  }
  func.func @transform_6(%arg0: i32, %arg1: i32) -> (i32, i32) {
    %c0_i32 = arith.constant 0 : i32
    %c0_i32_0 = arith.constant 0 : i32
    %c0_i32_1 = arith.constant 0 : i32
    return %c0_i32, %c0_i32_0 : i32, i32
  }
  func.func @transform_7(%arg0: i32, %arg1: i32) -> (i32, i32) {
    %c0_i32 = arith.constant 0 : i32
    %c0_i32_0 = arith.constant 0 : i32
    %c0_i32_1 = arith.constant 0 : i32
    return %c0_i32, %c0_i32_0 : i32, i32
  }
  func.func @transform_8(%arg0: i32, %arg1: i32) -> (i32, i32) {
    %c0_i32 = arith.constant 0 : i32
    %c0_i32_0 = arith.constant 0 : i32
    %c0_i32_1 = arith.constant 0 : i32
    return %c0_i32, %c0_i32_0 : i32, i32
  }
  func.func @transform_9(%arg0: i32, %arg1: i32) -> (i32, i32, i32) {
    %c0_i32 = arith.constant 0 : i32
    %c0_i32_0 = arith.constant 0 : i32
    %c0_i32_1 = arith.constant 0 : i32
    return %arg0, %c0_i32, %c0_i32_0 : i32, i32, i32
  }
  func.func @transform_10(%arg0: i32, %arg1: i32) -> (i32, i32, i32) {
    %c0_i32 = arith.constant 0 : i32
    %c0_i32_0 = arith.constant 0 : i32
    %c0_i32_1 = arith.constant 0 : i32
    return %arg0, %c0_i32, %c0_i32_0 : i32, i32, i32
  }
}

</mosaic_0001>

<llo_original>
// kernel: sub.12
$region0: #{sub.12}
  #allocation0 [shape = 's32[1]{0}', space=sflag, size = 0x4, scoped, tag = 'scoped memory for sub.12']
  %s0 = inlined_call_operand.vmem [shape: f32[64,3], index: 0, kind: input, shape index: {}]
  %s1 = inlined_call_operand.vmem [shape: f32[64,3], index: 1, kind: input, shape index: {}]
  %s2 = inlined_call_operand.vmem [shape: f32[64,3], index: 2, kind: output, shape index: {}]
  %v3 = vld [vmem:[%s0] sm:$0xff]
  %v4 = vld [vmem:[%s1] sm:$0xff]
  %5 = xla_tuple %v3, %v4
  %6 = xla_tuple %5
  %v7 = vsub.f32 %v3, %v4
  %8 = xla_tuple %v7
  %9 = vst [vmem:[%s2] sm:$0xff] %v7
  %s10 = scalar_lea.vmem %s0, 8
  %v11 = vld [vmem:[%s10] sm:$0xff]
  %s12 = scalar_lea.vmem %s1, 8
  %v13 = vld [vmem:[%s12] sm:$0xff]
  %14 = xla_tuple %v11, %v13
  %15 = xla_tuple %14
  %v16 = vsub.f32 %v11, %v13
  %17 = xla_tuple %v16
  %s18 = scalar_lea.vmem %s2, 8
  %19 = vst [vmem:[%s18] sm:$0xff] %v16
  %s20 = scalar_lea.vmem %s0, 16
  %v21 = vld [vmem:[%s20] sm:$0xff]
  %s22 = scalar_lea.vmem %s1, 16
  %v23 = vld [vmem:[%s22] sm:$0xff]
  %24 = xla_tuple %v21, %v23
  %25 = xla_tuple %24
  %v26 = vsub.f32 %v21, %v23
  %27 = xla_tuple %v26
  %s28 = scalar_lea.vmem %s2, 16
  %29 = vst [vmem:[%s28] sm:$0xff] %v26
  %s30 = scalar_lea.vmem %s0, 24
  %v31 = vld [vmem:[%s30] sm:$0xff]
  %s32 = scalar_lea.vmem %s1, 24
  %v33 = vld [vmem:[%s32] sm:$0xff]
  %34 = xla_tuple %v31, %v33
  %35 = xla_tuple %34
  %v36 = vsub.f32 %v31, %v33
  %37 = xla_tuple %v36
  %s38 = scalar_lea.vmem %s2, 24
  %39 = vst [vmem:[%s38] sm:$0xff] %v36
  %s40 = scalar_lea.vmem %s0, 32
  %v41 = vld [vmem:[%s40] sm:$0xff]
  %s42 = scalar_lea.vmem %s1, 32
  %v43 = vld [vmem:[%s42] sm:$0xff]
  %44 = xla_tuple %v41, %v43
  %45 = xla_tuple %44
  %v46 = vsub.f32 %v41, %v43
  %47 = xla_tuple %v46
  %s48 = scalar_lea.vmem %s2, 32
  %49 = vst [vmem:[%s48] sm:$0xff] %v46
  %s50 = scalar_lea.vmem %s0, 40
  %v51 = vld [vmem:[%s50] sm:$0xff]
  %s52 = scalar_lea.vmem %s1, 40
  %v53 = vld [vmem:[%s52] sm:$0xff]
  %54 = xla_tuple %v51, %v53
  %55 = xla_tuple %54
  %v56 = vsub.f32 %v51, %v53
  %57 = xla_tuple %v56
  %s58 = scalar_lea.vmem %s2, 40
  %59 = vst [vmem:[%s58] sm:$0xff] %v56
  %s60 = scalar_lea.vmem %s0, 48
  %v61 = vld [vmem:[%s60] sm:$0xff]
  %s62 = scalar_lea.vmem %s1, 48
  %v63 = vld [vmem:[%s62] sm:$0xff]
  %64 = xla_tuple %v61, %v63
  %65 = xla_tuple %64
  %v66 = vsub.f32 %v61, %v63
  %67 = xla_tuple %v66
  %s68 = scalar_lea.vmem %s2, 48
  %69 = vst [vmem:[%s68] sm:$0xff] %v66
  %s70 = scalar_lea.vmem %s0, 56
  %v71 = vld [vmem:[%s70] sm:$0xff]
  %s72 = scalar_lea.vmem %s1, 56
  %v73 = vld [vmem:[%s72] sm:$0xff]
  %74 = xla_tuple %v71, %v73
  %75 = xla_tuple %74
  %v76 = vsub.f32 %v71, %v73
  %77 = xla_tuple %v76
  %s78 = scalar_lea.vmem %s2, 56
  %79 = vst [vmem:[%s78] sm:$0xff] %v76

// kernel: gan_module_forward.3
$region0: #{gan_module_forward.3}
  #allocation0 [shape = 'u32[]', space=smem, size = 0x4, offset = 0x4, fixed_abs, tag = 'smem constant byte address 0x4 - core index']
  #allocation1 [shape = 'u32[144,128]{1,0:T(1,128)}', space=vmem, size = 0x12000, scoped, tag = 'internal scratch']
  %s0 = inlined_call_operand.hbm [shape: f32[64,384], index: 0, kind: input, shape index: {}]
  %s1 = inlined_call_operand.hbm [shape: f32[384,512], index: 1, kind: input, shape index: {}]
  %s2 = inlined_call_operand.hbm [shape: f32[1,512], index: 2, kind: input, shape index: {}]
  %s3 = inlined_call_operand.hbm [shape: f32[1,512], index: 3, kind: input, shape index: {}]
  %s4 = inlined_call_operand.hbm [shape: f32[1,512], index: 4, kind: input, shape index: {}]
  %s5 = inlined_call_operand.hbm [shape: f32[64,512], index: 5, kind: output, shape index: {}]
  %s6 = sld [smem:[#allocation0]]
  $region50: #{gan_module_forward.3} parent=0
    _
  %s8 = ssub.s32 1, %s6
  %s9 = scalar_select 0, %s8, %s6
  $region1: #{gan_module_forward.3} parent=0
    #allocation2 [shape = 'u8[98304]{0}', space=vmem, size = 0x18000, scoped, tag = 'input window, operand 0, single buffered']
    #allocation3 [shape = 's32[1]{0}', space=sflag, size = 0x4, scoped, tag = 'scoped memory for gan_module_forward.3']
    #allocation4 [shape = 's32[1]{0}', space=sflag, size = 0x4, scoped, tag = 'scoped memory for gan_module_forward.3']
    #allocation5 [shape = 'u8[786432]{0}', space=vmem, size = 0xc0000, scoped, tag = 'input window, operand 1, single buffered']
    #allocation6 [shape = 's32[1]{0}', space=sflag, size = 0x4, scoped, tag = 'scoped memory for gan_module_forward.3']
    #allocation7 [shape = 'u8[2048]{0}', space=vmem, size = 0x800, scoped, tag = 'input window, operand 2, single buffered']
    #allocation8 [shape = 'u8[2048]{0}', space=vmem, size = 0x800, scoped, tag = 'input window, operand 3, single buffered']
    #allocation9 [shape = 's32[1]{0}', space=sflag, size = 0x4, scoped, tag = 'scoped memory for gan_module_forward.3']
    #allocation10 [shape = 'u8[2048]{0}', space=vmem, size = 0x800, scoped, tag = 'input window, operand 4, single buffered']
    #allocation11 [shape = 'u8[131072]{0}', space=vmem, size = 0x20000, scoped, tag = 'output window, operand 0, single buffered']
    %10 = vsyncpa [#allocation3], 0
    %11 = vsyncpa [#allocation6], 0
    %12 = vsyncpa [#allocation9], 0
    %13 = vsyncpa [#allocation4], 0
    // Predicated region
    $region2: #{gan_module_forward.3} parent=1 // pred_check
      _
    $region3: #{gan_module_forward.3} parent=1 // pred_check_branch
      %15 = sbr.rel (0) target = $region5
    $region4: #{gan_module_forward.3} parent=1 // pred_region
      %s17 = ssub.s32 3072, 3072
      %18 = vsyncadd [#allocation3], %s17
      %s19 = sshll.u32 [#allocation2], 4
      %s20 = int_to_ptr.vmem [resolvable:$true] %s19
      %25 = dma.hbm_to_vmem [thread:$0]  %s0, 3072, %s20, [#allocation3], 384, 384, 24
    $region5: #{gan_module_forward.3} parent=1 // pred_fallthru
      _
    // Predicated region
    $region6: #{gan_module_forward.3} parent=1 // pred_check
      _
    $region7: #{gan_module_forward.3} parent=1 // pred_check_branch
      %27 = sbr.rel (0) target = $region9
    $region8: #{gan_module_forward.3} parent=1 // pred_region
      %s29 = ssub.s32 24576, 24576
      %30 = vsyncadd [#allocation6], %s29
      %s31 = sshll.u32 [#allocation5], 4
      %s32 = int_to_ptr.vmem [resolvable:$true] %s31
      %37 = dma.hbm_to_vmem [thread:$0]  %s1, 24576, %s32, [#allocation6], 512, 512, 32
    $region9: #{gan_module_forward.3} parent=1 // pred_fallthru
      _
    // Predicated region
    $region10: #{gan_module_forward.3} parent=1 // pred_check
      _
    $region11: #{gan_module_forward.3} parent=1 // pred_check_branch
      %39 = sbr.rel (0) target = $region13
    $region12: #{gan_module_forward.3} parent=1 // pred_region
      %s41 = ssub.s32 64, 64
      %42 = vsyncadd [#allocation6], %s41
      %s44 = sshll.u32 [#allocation7], 4
      %s45 = int_to_ptr.vmem [resolvable:$true] %s44
      %47 = dma.hbm_to_vmem [thread:$0]  %s2, 64, %s45, [#allocation6]
    $region13: #{gan_module_forward.3} parent=1 // pred_fallthru
      _
    // Predicated region
    $region14: #{gan_module_forward.3} parent=1 // pred_check
      _
    $region15: #{gan_module_forward.3} parent=1 // pred_check_branch
      %49 = sbr.rel (0) target = $region17
    $region16: #{gan_module_forward.3} parent=1 // pred_region
      %s51 = ssub.s32 64, 64
      %52 = vsyncadd [#allocation9], %s51
      %s54 = sshll.u32 [#allocation8], 4
      %s55 = int_to_ptr.vmem [resolvable:$true] %s54
      %57 = dma.hbm_to_vmem [thread:$0]  %s3, 64, %s55, [#allocation9]
    $region17: #{gan_module_forward.3} parent=1 // pred_fallthru
      _
    // Predicated region
    $region18: #{gan_module_forward.3} parent=1 // pred_check
      _
    $region19: #{gan_module_forward.3} parent=1 // pred_check_branch
      %59 = sbr.rel (0) target = $region21
    $region20: #{gan_module_forward.3} parent=1 // pred_region
      %s61 = ssub.s32 64, 64
      %62 = vsyncadd [#allocation9], %s61
      %s64 = sshll.u32 [#allocation10], 4
      %s65 = int_to_ptr.vmem [resolvable:$true] %s64
      %67 = dma.hbm_to_vmem [thread:$0]  %s4, 64, %s65, [#allocation9]
    $region21: #{gan_module_forward.3} parent=1 // pred_fallthru
      _
    // Predicated region
    $region22: #{gan_module_forward.3} parent=1 // pred_check
      _
    $region23: #{gan_module_forward.3} parent=1 // pred_check_branch
      %69 = sbr.rel (0) target = $region25
    $region24: #{gan_module_forward.3} parent=1 // pred_region
      %70 = dma.done [#allocation3], 3072
    $region25: #{gan_module_forward.3} parent=1 // pred_fallthru
      _
    // Predicated region
    $region26: #{gan_module_forward.3} parent=1 // pred_check
      _
    $region27: #{gan_module_forward.3} parent=1 // pred_check_branch
      %72 = sbr.rel (0) target = $region29
    $region28: #{gan_module_forward.3} parent=1 // pred_region
      %73 = dma.done [#allocation6], 24576
    $region29: #{gan_module_forward.3} parent=1 // pred_fallthru
      _
    // Predicated region
    $region30: #{gan_module_forward.3} parent=1 // pred_check
      _
    $region31: #{gan_module_forward.3} parent=1 // pred_check_branch
      %75 = sbr.rel (0) target = $region33
    $region32: #{gan_module_forward.3} parent=1 // pred_region
      %76 = dma.done [#allocation6], 64
    $region33: #{gan_module_forward.3} parent=1 // pred_fallthru
      _
    // Predicated region
    $region34: #{gan_module_forward.3} parent=1 // pred_check
      _
    $region35: #{gan_module_forward.3} parent=1 // pred_check_branch
      %78 = sbr.rel (0) target = $region37
    $region36: #{gan_module_forward.3} parent=1 // pred_region
      %79 = dma.done [#allocation9], 64
    $region37: #{gan_module_forward.3} parent=1 // pred_fallthru
      _
    // Predicated region
    $region38: #{gan_module_forward.3} parent=1 // pred_check
      _
    $region39: #{gan_module_forward.3} parent=1 // pred_check_branch
      %81 = sbr.rel (0) target = $region41
    $region40: #{gan_module_forward.3} parent=1 // pred_region
      %82 = dma.done [#allocation9], 64
    $region41: #{gan_module_forward.3} parent=1 // pred_fallthru
      _
    %v83 = vld [vmem:[#allocation2] sm:$0xff]
    %v84 = vld [vmem:[#allocation2 + $0x8] sm:$0xff]
    %v85 = vld [vmem:[#allocation2 + $0x10] sm:$0xff]
    %v86 = vld [vmem:[#allocation2 + $0x18] sm:$0xff]
    %v87 = vld [vmem:[#allocation2 + $0x20] sm:$0xff]
    %v88 = vld [vmem:[#allocation2 + $0x28] sm:$0xff]
    %v89 = vld [vmem:[#allocation2 + $0x30] sm:$0xff]
    %v90 = vld [vmem:[#allocation2 + $0x38] sm:$0xff]
    %v91 = vld [vmem:[#allocation2 + $0x40] sm:$0xff]
    %v92 = vld [vmem:[#allocation2 + $0x48] sm:$0xff]
    %v93 = vld [vmem:[#allocation2 + $0x50] sm:$0xff]
    %v94 = vld [vmem:[#allocation2 + $0x58] sm:$0xff]
    %v95 = vld [vmem:[#allocation2 + $0x60] sm:$0xff]
    %v96 = vld [vmem:[#allocation2 + $0x68] sm:$0xff]
    %v97 = vld [vmem:[#allocation2 + $0x70] sm:$0xff]
    %v98 = vld [vmem:[#allocation2 + $0x78] sm:$0xff]
    %v99 = vld [vmem:[#allocation2 + $0x80] sm:$0xff]
    %v100 = vld [vmem:[#allocation2 + $0x88] sm:$0xff]
    %v101 = vld [vmem:[#allocation2 + $0x90] sm:$0xff]
    %v102 = vld [vmem:[#allocation2 + $0x98] sm:$0xff]
    %v103 = vld [vmem:[#allocation2 + $0xa0] sm:$0xff]
    %v104 = vld [vmem:[#allocation2 + $0xa8] sm:$0xff]
    %v105 = vld [vmem:[#allocation2 + $0xb0] sm:$0xff]
    %v106 = vld [vmem:[#allocation2 + $0xb8] sm:$0xff]
    %v107 = vld [vmem:[#allocation5] sm:$0xff]
    %v108 = vld [vmem:[#allocation5 + $0x8] sm:$0xff]
    %v109 = vld [vmem:[#allocation5 + $0x10] sm:$0xff]
    %v110 = vld [vmem:[#allocation5 + $0x18] sm:$0xff]
    %v111 = vld [vmem:[#allocation5 + $0x20] sm:$0xff]
    %v112 = vld [vmem:[#allocation5 + $0x28] sm:$0xff]
    %v113 = vld [vmem:[#allocation5 + $0x30] sm:$0xff]
    %v114 = vld [vmem:[#allocation5 + $0x38] sm:$0xff]
    %v115 = vld [vmem:[#allocation5 + $0x40] sm:$0xff]
    %v116 = vld [vmem:[#allocation5 + $0x48] sm:$0xff]
    %v117 = vld [vmem:[#allocation5 + $0x50] sm:$0xff]
    %v118 = vld [vmem:[#allocation5 + $0x58] sm:$0xff]
    %v119 = vld [vmem:[#allocation5 + $0x60] sm:$0xff]
    %v120 = vld [vmem:[#allocation5 + $0x68] sm:$0xff]
    %v121 = vld [vmem:[#allocation5 + $0x70] sm:$0xff]
    %v122 = vld [vmem:[#allocation5 + $0x78] sm:$0xff]
    %v123 = vld [vmem:[#allocation5 + $0x80] sm:$0xff]
    %v124 = vld [vmem:[#allocation5 + $0x88] sm:$0xff]
    %v125 = vld [vmem:[#allocation5 + $0x90] sm:$0xff]
    %v126 = vld [vmem:[#allocation5 + $0x98] sm:$0xff]
    %v127 = vld [vmem:[#allocation5 + $0xa0] sm:$0xff]
    %v128 = vld [vmem:[#allocation5 + $0xa8] sm:$0xff]
    %v129 = vld [vmem:[#allocation5 + $0xb0] sm:$0xff]
    %v130 = vld [vmem:[#allocation5 + $0xb8] sm:$0xff]
    %v131 = vld [vmem:[#allocation5 + $0xc0] sm:$0xff]
    %v132 = vld [vmem:[#allocation5 + $0xc8] sm:$0xff]
    %v133 = vld [vmem:[#allocation5 + $0xd0] sm:$0xff]
    %v134 = vld [vmem:[#allocation5 + $0xd8] sm:$0xff]
    %v135 = vld [vmem:[#allocation5 + $0xe0] sm:$0xff]
    %v136 = vld [vmem:[#allocation5 + $0xe8] sm:$0xff]
    %v137 = vld [vmem:[#allocation5 + $0xf0] sm:$0xff]
    %v138 = vld [vmem:[#allocation5 + $0xf8] sm:$0xff]
    %v139 = vld [vmem:[#allocation5 + $0x100] sm:$0xff]
    %v140 = vld [vmem:[#allocation5 + $0x108] sm:$0xff]
    %v141 = vld [vmem:[#allocation5 + $0x110] sm:$0xff]
    %v142 = vld [vmem:[#allocation5 + $0x118] sm:$0xff]
    %v143 = vld [vmem:[#allocation5 + $0x120] sm:$0xff]
    %v144 = vld [vmem:[#allocation5 + $0x128] sm:$0xff]
    %v145 = vld [vmem:[#allocation5 + $0x130] sm:$0xff]
    %v146 = vld [vmem:[#allocation5 + $0x138] sm:$0xff]
    %v147 = vld [vmem:[#allocation5 + $0x140] sm:$0xff]
    %v148 = vld [vmem:[#allocation5 + $0x148] sm:$0xff]
    %v149 = vld [vmem:[#allocation5 + $0x150] sm:$0xff]
    %v150 = vld [vmem:[#allocation5 + $0x158] sm:$0xff]
    %v151 = vld [vmem:[#allocation5 + $0x160] sm:$0xff]
    %v152 = vld [vmem:[#allocation5 + $0x168] sm:$0xff]
    %v153 = vld [vmem:[#allocation5 + $0x170] sm:$0xff]
    %v154 = vld [vmem:[#allocation5 + $0x178] sm:$0xff]
    %v155 = vld [vmem:[#allocation5 + $0x180] sm:$0xff]
    %v156 = vld [vmem:[#allocation5 + $0x188] sm:$0xff]
    %v157 = vld [vmem:[#allocation5 + $0x190] sm:$0xff]
    %v158 = vld [vmem:[#allocation5 + $0x198] sm:$0xff]
    %v159 = vld [vmem:[#allocation5 + $0x1a0] sm:$0xff]
    %v160 = vld [vmem:[#allocation5 + $0x1a8] sm:$0xff]
    %v161 = vld [vmem:[#allocation5 + $0x1b0] sm:$0xff]
    %v162 = vld [vmem:[#allocation5 + $0x1b8] sm:$0xff]
    %v163 = vld [vmem:[#allocation5 + $0x1c0] sm:$0xff]
    %v164 = vld [vmem:[#allocation5 + $0x1c8] sm:$0xff]
    %v165 = vld [vmem:[#allocation5 + $0x1d0] sm:$0xff]
    %v166 = vld [vmem:[#allocation5 + $0x1d8] sm:$0xff]
    %v167 = vld [vmem:[#allocation5 + $0x1e0] sm:$0xff]
    %v168 = vld [vmem:[#allocation5 + $0x1e8] sm:$0xff]
    %v169 = vld [vmem:[#allocation5 + $0x1f0] sm:$0xff]
    %v170 = vld [vmem:[#allocation5 + $0x1f8] sm:$0xff]
    %v171 = vld [vmem:[#allocation5 + $0x200] sm:$0xff]
    %v172 = vld [vmem:[#allocation5 + $0x208] sm:$0xff]
    %v173 = vld [vmem:[#allocation5 + $0x210] sm:$0xff]
    %v174 = vld [vmem:[#allocation5 + $0x218] sm:$0xff]
    %v175 = vld [vmem:[#allocation5 + $0x220] sm:$0xff]
    %v176 = vld [vmem:[#allocation5 + $0x228] sm:$0xff]
    %v177 = vld [vmem:[#allocation5 + $0x230] sm:$0xff]
    %v178 = vld [vmem:[#allocation5 + $0x238] sm:$0xff]
    %v179 = vld [vmem:[#allocation5 + $0x240] sm:$0xff]
    %v180 = vld [vmem:[#allocation5 + $0x248] sm:$0xff]
    %v181 = vld [vmem:[#allocation5 + $0x250] sm:$0xff]
    %v182 = vld [vmem:[#allocation5 + $0x258] sm:$0xff]
    %v183 = vld [vmem:[#allocation5 + $0x260] sm:$0xff]
    %v184 = vld [vmem:[#allocation5 + $0x268] sm:$0xff]
    %v185 = vld [vmem:[#allocation5 + $0x270] sm:$0xff]
    %v186 = vld [vmem:[#allocation5 + $0x278] sm:$0xff]
    %v187 = vld [vmem:[#allocation5 + $0x280] sm:$0xff]
    %v188 = vld [vmem:[#allocation5 + $0x288] sm:$0xff]
    %v189 = vld [vmem:[#allocation5 + $0x290] sm:$0xff]
    %v190 = vld [vmem:[#allocation5 + $0x298] sm:$0xff]
    %v191 = vld [vmem:[#allocation5 + $0x2a0] sm:$0xff]
    %v192 = vld [vmem:[#allocation5 + $0x2a8] sm:$0xff]
    %v193 = vld [vmem:[#allocation5 + $0x2b0] sm:$0xff]
    %v194 = vld [vmem:[#allocation5 + $0x2b8] sm:$0xff]
    %v195 = vld [vmem:[#allocation5 + $0x2c0] sm:$0xff]
    %v196 = vld [vmem:[#allocation5 + $0x2c8] sm:$0xff]
    %v197 = vld [vmem:[#allocation5 + $0x2d0] sm:$0xff]
    %v198 = vld [vmem:[#allocation5 + $0x2d8] sm:$0xff]
    %v199 = vld [vmem:[#allocation5 + $0x2e0] sm:$0xff]
    %v200 = vld [vmem:[#allocation5 + $0x2e8] sm:$0xff]
    %v201 = vld [vmem:[#allocation5 + $0x2f0] sm:$0xff]
    %v202 = vld [vmem:[#allocation5 + $0x2f8] sm:$0xff]
    %v203 = vld [vmem:[#allocation5 + $0x300] sm:$0xff]
    %v204 = vld [vmem:[#allocation5 + $0x308] sm:$0xff]
    %v205 = vld [vmem:[#allocation5 + $0x310] sm:$0xff]
    %v206 = vld [vmem:[#allocation5 + $0x318] sm:$0xff]
    %v207 = vld [vmem:[#allocation5 + $0x320] sm:$0xff]
    %v208 = vld [vmem:[#allocation5 + $0x328] sm:$0xff]
    %v209 = vld [vmem:[#allocation5 + $0x330] sm:$0xff]
    %v210 = vld [vmem:[#allocation5 + $0x338] sm:$0xff]
    %v211 = vld [vmem:[#allocation5 + $0x340] sm:$0xff]
    %v212 = vld [vmem:[#allocation5 + $0x348] sm:$0xff]
    %v213 = vld [vmem:[#allocation5 + $0x350] sm:$0xff]
    %v214 = vld [vmem:[#allocation5 + $0x358] sm:$0xff]
    %v215 = vld [vmem:[#allocation5 + $0x360] sm:$0xff]
    %v216 = vld [vmem:[#allocation5 + $0x368] sm:$0xff]
    %v217 = vld [vmem:[#allocation5 + $0x370] sm:$0xff]
    %v218 = vld [vmem:[#allocation5 + $0x378] sm:$0xff]
    %v219 = vld [vmem:[#allocation5 + $0x380] sm:$0xff]
    %v220 = vld [vmem:[#allocation5 + $0x388] sm:$0xff]
    %v221 = vld [vmem:[#allocation5 + $0x390] sm:$0xff]
    %v222 = vld [vmem:[#allocation5 + $0x398] sm:$0xff]
    %v223 = vld [vmem:[#allocation5 + $0x3a0] sm:$0xff]
    %v224 = vld [vmem:[#allocation5 + $0x3a8] sm:$0xff]
    %v225 = vld [vmem:[#allocation5 + $0x3b0] sm:$0xff]
    %v226 = vld [vmem:[#allocation5 + $0x3b8] sm:$0xff]
    %v227 = vld [vmem:[#allocation5 + $0x3c0] sm:$0xff]
    %v228 = vld [vmem:[#allocation5 + $0x3c8] sm:$0xff]
    %v229 = vld [vmem:[#allocation5 + $0x3d0] sm:$0xff]
    %v230 = vld [vmem:[#allocation5 + $0x3d8] sm:$0xff]
    %v231 = vld [vmem:[#allocation5 + $0x3e0] sm:$0xff]
    %v232 = vld [vmem:[#allocation5 + $0x3e8] sm:$0xff]
    %v233 = vld [vmem:[#allocation5 + $0x3f0] sm:$0xff]
    %v234 = vld [vmem:[#allocation5 + $0x3f8] sm:$0xff]
    %v235 = vld [vmem:[#allocation5 + $0x400] sm:$0xff]
    %v236 = vld [vmem:[#allocation5 + $0x408] sm:$0xff]
    %v237 = vld [vmem:[#allocation5 + $0x410] sm:$0xff]
    %v238 = vld [vmem:[#allocation5 + $0x418] sm:$0xff]
    %v239 = vld [vmem:[#allocation5 + $0x420] sm:$0xff]
    %v240 = vld [vmem:[#allocation5 + $0x428] sm:$0xff]
    %v241 = vld [vmem:[#allocation5 + $0x430] sm:$0xff]
    %v242 = vld [vmem:[#allocation5 + $0x438] sm:$0xff]
    %v243 = vld [vmem:[#allocation5 + $0x440] sm:$0xff]
    %v244 = vld [vmem:[#allocation5 + $0x448] sm:$0xff]
    %v245 = vld [vmem:[#allocation5 + $0x450] sm:$0xff]
    %v246 = vld [vmem:[#allocation5 + $0x458] sm:$0xff]
    %v247 = vld [vmem:[#allocation5 + $0x460] sm:$0xff]
    %v248 = vld [vmem:[#allocation5 + $0x468] sm:$0xff]
    %v249 = vld [vmem:[#allocation5 + $0x470] sm:$0xff]
    %v250 = vld [vmem:[#allocation5 + $0x478] sm:$0xff]
    %v251 = vld [vmem:[#allocation5 + $0x480] sm:$0xff]
    %v252 = vld [vmem:[#allocation5 + $0x488] sm:$0xff]
    %v253 = vld [vmem:[#allocation5 + $0x490] sm:$0xff]
    %v254 = vld [vmem:[#allocation5 + $0x498] sm:$0xff]
    %v255 = vld [vmem:[#allocation5 + $0x4a0] sm:$0xff]
    %v256 = vld [vmem:[#allocation5 + $0x4a8] sm:$0xff]
    %v257 = vld [vmem:[#allocation5 + $0x4b0] sm:$0xff]
    %v258 = vld [vmem:[#allocation5 + $0x4b8] sm:$0xff]
    %v259 = vld [vmem:[#allocation5 + $0x4c0] sm:$0xff]
    %v260 = vld [vmem:[#allocation5 + $0x4c8] sm:$0xff]
    %v261 = vld [vmem:[#allocation5 + $0x4d0] sm:$0xff]
    %v262 = vld [vmem:[#allocation5 + $0x4d8] sm:$0xff]
    %v263 = vld [vmem:[#allocation5 + $0x4e0] sm:$0xff]
    %v264 = vld [vmem:[#allocation5 + $0x4e8] sm:$0xff]
    %v265 = vld [vmem:[#allocation5 + $0x4f0] sm:$0xff]
    %v266 = vld [vmem:[#allocation5 + $0x4f8] sm:$0xff]
    %v267 = vld [vmem:[#allocation5 + $0x500] sm:$0xff]
    %v268 = vld [vmem:[#allocation5 + $0x508] sm:$0xff]
    %v269 = vld [vmem:[#allocation5 + $0x510] sm:$0xff]
    %v270 = vld [vmem:[#allocation5 + $0x518] sm:$0xff]
    %v271 = vld [vmem:[#allocation5 + $0x520] sm:$0xff]
    %v272 = vld [vmem:[#allocation5 + $0x528] sm:$0xff]
    %v273 = vld [vmem:[#allocation5 + $0x530] sm:$0xff]
    %v274 = vld [vmem:[#allocation5 + $0x538] sm:$0xff]
    %v275 = vld [vmem:[#allocation5 + $0x540] sm:$0xff]
    %v276 = vld [vmem:[#allocation5 + $0x548] sm:$0xff]
    %v277 = vld [vmem:[#allocation5 + $0x550] sm:$0xff]
    %v278 = vld [vmem:[#allocation5 + $0x558] sm:$0xff]
    %v279 = vld [vmem:[#allocation5 + $0x560] sm:$0xff]
    %v280 = vld [vmem:[#allocation5 + $0x568] sm:$0xff]
    %v281 = vld [vmem:[#allocation5 + $0x570] sm:$0xff]
    %v282 = vld [vmem:[#allocation5 + $0x578] sm:$0xff]
    %v283 = vld [vmem:[#allocation5 + $0x580] sm:$0xff]
    %v284 = vld [vmem:[#allocation5 + $0x588] sm:$0xff]
    %v285 = vld [vmem:[#allocation5 + $0x590] sm:$0xff]
    %v286 = vld [vmem:[#allocation5 + $0x598] sm:$0xff]
    %v287 = vld [vmem:[#allocation5 + $0x5a0] sm:$0xff]
    %v288 = vld [vmem:[#allocation5 + $0x5a8] sm:$0xff]
    %v289 = vld [vmem:[#allocation5 + $0x5b0] sm:$0xff]
    %v290 = vld [vmem:[#allocation5 + $0x5b8] sm:$0xff]
    %v291 = vld [vmem:[#allocation5 + $0x5c0] sm:$0xff]
    %v292 = vld [vmem:[#allocation5 + $0x5c8] sm:$0xff]
    %v293 = vld [vmem:[#allocation5 + $0x5d0] sm:$0xff]
    %v294 = vld [vmem:[#allocation5 + $0x5d8] sm:$0xff]
    %v295 = vld [vmem:[#allocation5 + $0x5e0] sm:$0xff]
    %v296 = vld [vmem:[#allocation5 + $0x5e8] sm:$0xff]
    %v297 = vld [vmem:[#allocation5 + $0x5f0] sm:$0xff]
    %v298 = vld [vmem:[#allocation5 + $0x5f8] sm:$0xff]
    %v299 = vld [vmem:[#allocation7] sm:$0xf]
    %v301 = vlaneseq
    %v302 = vshrl.u32 %v301, 7
    %v303 = vsub.s32 0, %v302
    %v304 = vrot.slane %v299, %v303
    %v305 = vlaneseq
    %v306 = vshrl.u32 %v305, 7
    %v307 = vsub.s32 1, %v306
    %v308 = vrot.slane %v299, %v307
    %v309 = vlaneseq
    %v310 = vshrl.u32 %v309, 7
    %v311 = vsub.s32 2, %v310
    %v312 = vrot.slane %v299, %v311
    %v313 = vlaneseq
    %v314 = vshrl.u32 %v313, 7
    %v315 = vsub.s32 3, %v314
    %v316 = vrot.slane %v299, %v315
    %321 = vmatprep.subr.mxu0 %v108
    %322 = vmatpush1.msra.mxu0 %v107
    %323 = vmatprep.subr.mxu0 %v112
    %324 = vmatpush1.msra.mxu0 %v111
    %325 = vmatprep.subr.mxu0 %v116
    %326 = vmatpush1.msra.mxu0 %v115
    %327 = vmatprep.subr.mxu0 %v120
    %328 = vmatpush1.msra.mxu0 %v119
    %329 = vmatprep.subr.mxu0 %v124
    %330 = vmatpush1.msra.mxu0 %v123
    %331 = vmatprep.subr.mxu0 %v128
    %332 = vmatpush1.msra.mxu0 %v127
    %333 = vmatprep.subr.mxu0 %v132
    %334 = vmatpush1.msra.mxu0 %v131
    %335 = vmatprep.subr.mxu0 %v136
    %336 = vmatpush1.msra.mxu0 %v135
    %337 = vmatprep.subr.mxu0 %v140
    %338 = vmatpush1.msra.mxu0 %v139
    %339 = vmatprep.subr.mxu0 %v144
    %340 = vmatpush1.msra.mxu0 %v143
    %341 = vmatprep.subr.mxu0 %v148
    %342 = vmatpush1.msra.mxu0 %v147
    %343 = vmatprep.subr.mxu0 %v152
    %344 = vmatpush1.msra.mxu0 %v151
    %345 = vmatprep.subr.mxu0 %v156
    %346 = vmatpush1.msra.mxu0 %v155
    %347 = vmatprep.subr.mxu0 %v160
    %348 = vmatpush1.msra.mxu0 %v159
    %349 = vmatprep.subr.mxu0 %v164
    %350 = vmatpush1.msra.mxu0 %v163
    %351 = vmatprep.subr.mxu0 %v168
    %352 = vmatpush1.msra.mxu0 %v167
    %353 = vmatprep.subr.mxu0 %v172
    %354 = vmatpush1.msra.mxu0 %v171
    %355 = vmatprep.subr.mxu0 %v176
    %356 = vmatpush1.msra.mxu0 %v175
    %357 = vmatprep.subr.mxu0 %v180
    %358 = vmatpush1.msra.mxu0 %v179
    %359 = vmatprep.subr.mxu0 %v184
    %360 = vmatpush1.msra.mxu0 %v183
    %361 = vmatprep.subr.mxu0 %v188
    %362 = vmatpush1.msra.mxu0 %v187
    %363 = vmatprep.subr.mxu0 %v192
    %364 = vmatpush1.msra.mxu0 %v191
    %365 = vmatprep.subr.mxu0 %v196
    %366 = vmatpush1.msra.mxu0 %v195
    %367 = vmatprep.subr.mxu0 %v200
    %368 = vmatpush1.msra.mxu0 %v199
    %369 = vmatprep.subr.mxu0 %v204
    %370 = vmatpush1.msra.mxu0 %v203
    %371 = vmatprep.subr.mxu0 %v208
    %372 = vmatpush1.msra.mxu0 %v207
    %373 = vmatprep.subr.mxu0 %v212
    %374 = vmatpush1.msra.mxu0 %v211
    %375 = vmatprep.subr.mxu0 %v216
    %376 = vmatpush1.msra.mxu0 %v215
    %377 = vmatprep.subr.mxu0 %v220
    %378 = vmatpush1.msra.mxu0 %v219
    %379 = vmatprep.subr.mxu0 %v224
    %380 = vmatpush1.msra.mxu0 %v223
    %381 = vmatprep.subr.mxu0 %v228
    %382 = vmatpush1.msra.mxu0 %v227
    %383 = vmatprep.subr.mxu0 %v232
    %384 = vmatpush1.msra.mxu0 %v231
    %385 = vmatprep.mubr.f32.mxu0 %v84
    %386 = vmatmul.mubr.f32.gmra.mrb[0].mxu0 %v83
    %v387 = vpop.f32.mrb[0].mxu0
    %v388 = vadd.f32 %v304, %v387
    %v389 = vpop.f32.mrb[0].mxu0
    %v390 = vadd.f32 %v308, %v389
    %391 = vmatprep.mubr.f32.mxu0 %v87
    %392 = vmatmul.mubr.f32.gmra.mrb[0].mxu0 %v86
    %v393 = vpop.f32.mrb[0].mxu0
    %v394 = vadd.f32 %v304, %v393
    %v395 = vpop.f32.mrb[0].mxu0
    %v396 = vadd.f32 %v308, %v395
    %397 = vmatprep.mubr.f32.mxu0 %v90
    %398 = vmatmul.mubr.f32.gmra.mrb[0].mxu0 %v89
    %v399 = vpop.f32.mrb[0].mxu0
    %v400 = vadd.f32 %v304, %v399
    %v401 = vpop.f32.mrb[0].mxu0
    %v402 = vadd.f32 %v308, %v401
    %403 = vmatprep.mubr.f32.mxu0 %v93
    %404 = vmatmul.mubr.f32.gmra.mrb[0].mxu0 %v92
    %v405 = vpop.f32.mrb[0].mxu0
    %v406 = vadd.f32 %v304, %v405
    %v407 = vpop.f32.mrb[0].mxu0
    %v408 = vadd.f32 %v308, %v407
    %409 = vmatprep.mubr.f32.mxu0 %v96
    %410 = vmatmul.mubr.f32.gmra.mrb[0].mxu0 %v95
    %v411 = vpop.f32.mrb[0].mxu0
    %v412 = vadd.f32 %v304, %v411
    %v413 = vpop.f32.mrb[0].mxu0
    %v414 = vadd.f32 %v308, %v413
    %415 = vmatprep.mubr.f32.mxu0 %v99
    %416 = vmatmul.mubr.f32.gmra.mrb[0].mxu0 %v98
    %v417 = vpop.f32.mrb[0].mxu0
    %v418 = vadd.f32 %v304, %v417
    %v419 = vpop.f32.mrb[0].mxu0
    %v420 = vadd.f32 %v308, %v419
    %421 = vmatprep.mubr.f32.mxu0 %v102
    %422 = vmatmul.mubr.f32.gmra.mrb[0].mxu0 %v101
    %v423 = vpop.f32.mrb[0].mxu0
    %v424 = vadd.f32 %v304, %v423
    %v425 = vpop.f32.mrb[0].mxu0
    %v426 = vadd.f32 %v308, %v425
    %427 = vmatprep.mubr.f32.mxu0 %v105
    %428 = vmatmul.mubr.f32.gmra.mrb[0].mxu0 %v104
    %v429 = vpop.f32.mrb[0].mxu0
    %v430 = vadd.f32 %v304, %v429
    %v431 = vpop.f32.mrb[0].mxu0
    %v432 = vadd.f32 %v308, %v431
    %433 = vdwg.mxu0
    %434 = vmatprep.subr.mxu0 %v236
    %435 = vmatpush1.msra.mxu0 %v235
    %436 = vmatprep.subr.mxu0 %v240
    %437 = vmatpush1.msra.mxu0 %v239
    %438 = vmatprep.subr.mxu0 %v244
    %439 = vmatpush1.msra.mxu0 %v243
    %440 = vmatprep.subr.mxu0 %v248
    %441 = vmatpush1.msra.mxu0 %v247
    %442 = vmatprep.subr.mxu0 %v252
    %443 = vmatpush1.msra.mxu0 %v251
    %444 = vmatprep.subr.mxu0 %v256
    %445 = vmatpush1.msra.mxu0 %v255
    %446 = vmatprep.subr.mxu0 %v260
    %447 = vmatpush1.msra.mxu0 %v259
    %448 = vmatprep.subr.mxu0 %v264
    %449 = vmatpush1.msra.mxu0 %v263
    %450 = vmatprep.subr.mxu0 %v268
    %451 = vmatpush1.msra.mxu0 %v267
    %452 = vmatprep.subr.mxu0 %v272
    %453 = vmatpush1.msra.mxu0 %v271
    %454 = vmatprep.subr.mxu0 %v276
    %455 = vmatpush1.msra.mxu0 %v275
    %456 = vmatprep.subr.mxu0 %v280
    %457 = vmatpush1.msra.mxu0 %v279
    %458 = vmatprep.subr.mxu0 %v284
    %459 = vmatpush1.msra.mxu0 %v283
    %460 = vmatprep.subr.mxu0 %v288
    %461 = vmatpush1.msra.mxu0 %v287
    %462 = vmatprep.subr.mxu0 %v292
    %463 = vmatpush1.msra.mxu0 %v291
    %464 = vmatprep.subr.mxu0 %v296
    %465 = vmatpush1.msra.mxu0 %v295
    %466 = vmatprep.subr.mxu0 0.0
    %467 = vmatpush1.msra.mxu0 0.0
    %468 = vmatprep.subr.mxu0 0.0
    %469 = vmatpush1.msra.mxu0 0.0
    %470 = vmatprep.subr.mxu0 0.0
    %471 = vmatpush1.msra.mxu0 0.0
    %472 = vmatprep.subr.mxu0 0.0
    %473 = vmatpush1.msra.mxu0 0.0
    %474 = vmatprep.subr.mxu0 0.0
    %475 = vmatpush1.msra.mxu0 0.0
    %476 = vmatprep.subr.mxu0 0.0
    %477 = vmatpush1.msra.mxu0 0.0
    %478 = vmatprep.subr.mxu0 0.0
    %479 = vmatpush1.msra.mxu0 0.0
    %480 = vmatprep.subr.mxu0 0.0
    %481 = vmatpush1.msra.mxu0 0.0
    %482 = vmatprep.subr.mxu0 0.0
    %483 = vmatpush1.msra.mxu0 0.0
    %484 = vmatprep.subr.mxu0 0.0
    %485 = vmatpush1.msra.mxu0 0.0
    %486 = vmatprep.subr.mxu0 0.0
    %487 = vmatpush1.msra.mxu0 0.0
    %488 = vmatprep.subr.mxu0 0.0
    %489 = vmatpush1.msra.mxu0 0.0
    %490 = vmatprep.subr.mxu0 0.0
    %491 = vmatpush1.msra.mxu0 0.0
    %492 = vmatprep.subr.mxu0 0.0
    %493 = vmatpush1.msra.mxu0 0.0
    %494 = vmatprep.subr.mxu0 0.0
    %495 = vmatpush1.msra.mxu0 0.0
    %496 = vmatprep.subr.mxu0 0.0
    %497 = vmatpush1.msra.mxu0 0.0
    %498 = vmatprep.mubr.f32.mxu0 0.0
    %499 = vmatmul.mubr.f32.gmra.mrb[0].mxu0 %v85
    %v500 = vpop.f32.mrb[0].mxu0
    %v501 = vadd.f32 %v388, %v500
    %v502 = vpop.f32.mrb[0].mxu0
    %v503 = vadd.f32 %v390, %v502
    %504 = vmatprep.mubr.f32.mxu0 0.0
    %505 = vmatmul.mubr.f32.gmra.mrb[0].mxu0 %v88
    %v506 = vpop.f32.mrb[0].mxu0
    %v507 = vadd.f32 %v394, %v506
    %v508 = vpop.f32.mrb[0].mxu0
    %v509 = vadd.f32 %v396, %v508
    %510 = vmatprep.mubr.f32.mxu0 0.0
    %511 = vmatmul.mubr.f32.gmra.mrb[0].mxu0 %v91
    %v512 = vpop.f32.mrb[0].mxu0
    %v513 = vadd.f32 %v400, %v512
    %v514 = vpop.f32.mrb[0].mxu0
    %v515 = vadd.f32 %v402, %v514
    %516 = vmatprep.mubr.f32.mxu0 0.0
    %517 = vmatmul.mubr.f32.gmra.mrb[0].mxu0 %v94
    %v518 = vpop.f32.mrb[0].mxu0
    %v519 = vadd.f32 %v406, %v518
    %v520 = vpop.f32.mrb[0].mxu0
    %v521 = vadd.f32 %v408, %v520
    %522 = vmatprep.mubr.f32.mxu0 0.0
    %523 = vmatmul.mubr.f32.gmra.mrb[0].mxu0 %v97
    %v524 = vpop.f32.mrb[0].mxu0
    %v525 = vadd.f32 %v412, %v524
    %v526 = vpop.f32.mrb[0].mxu0
    %v527 = vadd.f32 %v414, %v526
    %528 = vmatprep.mubr.f32.mxu0 0.0
    %529 = vmatmul.mubr.f32.gmra.mrb[0].mxu0 %v100
    %v530 = vpop.f32.mrb[0].mxu0
    %v531 = vadd.f32 %v418, %v530
    %v532 = vpop.f32.mrb[0].mxu0
    %v533 = vadd.f32 %v420, %v532
    %534 = vmatprep.mubr.f32.mxu0 0.0
    %535 = vmatmul.mubr.f32.gmra.mrb[0].mxu0 %v103
    %v536 = vpop.f32.mrb[0].mxu0
    %v537 = vadd.f32 %v424, %v536
    %v538 = vpop.f32.mrb[0].mxu0
    %v539 = vadd.f32 %v426, %v538
    %540 = vmatprep.mubr.f32.mxu0 0.0
    %541 = vmatmul.mubr.f32.gmra.mrb[0].mxu0 %v106
    %v542 = vpop.f32.mrb[0].mxu0
    %v543 = vadd.f32 %v430, %v542
    %v544 = vpop.f32.mrb[0].mxu0
    %v545 = vadd.f32 %v432, %v544
    %546 = vdwg.mxu0
    %547 = vmatprep.subr.mxu0 %v110
    %548 = vmatpush1.msra.mxu0 %v109
    %549 = vmatprep.subr.mxu0 %v114
    %550 = vmatpush1.msra.mxu0 %v113
    %551 = vmatprep.subr.mxu0 %v118
    %552 = vmatpush1.msra.mxu0 %v117
    %553 = vmatprep.subr.mxu0 %v122
    %554 = vmatpush1.msra.mxu0 %v121
    %555 = vmatprep.subr.mxu0 %v126
    %556 = vmatpush1.msra.mxu0 %v125
    %557 = vmatprep.subr.mxu0 %v130
    %558 = vmatpush1.msra.mxu0 %v129
    %559 = vmatprep.subr.mxu0 %v134
    %560 = vmatpush1.msra.mxu0 %v133
    %561 = vmatprep.subr.mxu0 %v138
    %562 = vmatpush1.msra.mxu0 %v137
    %563 = vmatprep.subr.mxu0 %v142
    %564 = vmatpush1.msra.mxu0 %v141
    %565 = vmatprep.subr.mxu0 %v146
    %566 = vmatpush1.msra.mxu0 %v145
    %567 = vmatprep.subr.mxu0 %v150
    %568 = vmatpush1.msra.mxu0 %v149
    %569 = vmatprep.subr.mxu0 %v154
    %570 = vmatpush1.msra.mxu0 %v153
    %571 = vmatprep.subr.mxu0 %v158
    %572 = vmatpush1.msra.mxu0 %v157
    %573 = vmatprep.subr.mxu0 %v162
    %574 = vmatpush1.msra.mxu0 %v161
    %575 = vmatprep.subr.mxu0 %v166
    %576 = vmatpush1.msra.mxu0 %v165
    %577 = vmatprep.subr.mxu0 %v170
    %578 = vmatpush1.msra.mxu0 %v169
    %579 = vmatprep.subr.mxu0 %v174
    %580 = vmatpush1.msra.mxu0 %v173
    %581 = vmatprep.subr.mxu0 %v178
    %582 = vmatpush1.msra.mxu0 %v177
    %583 = vmatprep.subr.mxu0 %v182
    %584 = vmatpush1.msra.mxu0 %v181
    %585 = vmatprep.subr.mxu0 %v186
    %586 = vmatpush1.msra.mxu0 %v185
    %587 = vmatprep.subr.mxu0 %v190
    %588 = vmatpush1.msra.mxu0 %v189
    %589 = vmatprep.subr.mxu0 %v194
    %590 = vmatpush1.msra.mxu0 %v193
    %591 = vmatprep.subr.mxu0 %v198
    %592 = vmatpush1.msra.mxu0 %v197
    %593 = vmatprep.subr.mxu0 %v202
    %594 = vmatpush1.msra.mxu0 %v201
    %595 = vmatprep.subr.mxu0 %v206
    %596 = vmatpush1.msra.mxu0 %v205
    %597 = vmatprep.subr.mxu0 %v210
    %598 = vmatpush1.msra.mxu0 %v209
    %599 = vmatprep.subr.mxu0 %v214
    %600 = vmatpush1.msra.mxu0 %v213
    %601 = vmatprep.subr.mxu0 %v218
    %602 = vmatpush1.msra.mxu0 %v217
    %603 = vmatprep.subr.mxu0 %v222
    %604 = vmatpush1.msra.mxu0 %v221
    %605 = vmatprep.subr.mxu0 %v226
    %606 = vmatpush1.msra.mxu0 %v225
    %607 = vmatprep.subr.mxu0 %v230
    %608 = vmatpush1.msra.mxu0 %v229
    %609 = vmatprep.subr.mxu0 %v234
    %610 = vmatpush1.msra.mxu0 %v233
    %611 = vmatprep.mubr.f32.mxu0 %v84
    %612 = vmatmul.mubr.f32.gmra.mrb[0].mxu0 %v83
    %v613 = vpop.f32.mrb[0].mxu0
    %v614 = vadd.f32 %v312, %v613
    %v615 = vpop.f32.mrb[0].mxu0
    %v616 = vadd.f32 %v316, %v615
    %617 = vmatprep.mubr.f32.mxu0 %v87
    %618 = vmatmul.mubr.f32.gmra.mrb[0].mxu0 %v86
    %v619 = vpop.f32.mrb[0].mxu0
    %v620 = vadd.f32 %v312, %v619
    %v621 = vpop.f32.mrb[0].mxu0
    %v622 = vadd.f32 %v316, %v621
    %623 = vmatprep.mubr.f32.mxu0 %v90
    %624 = vmatmul.mubr.f32.gmra.mrb[0].mxu0 %v89
    %v625 = vpop.f32.mrb[0].mxu0
    %v626 = vadd.f32 %v312, %v625
    %v627 = vpop.f32.mrb[0].mxu0
    %v628 = vadd.f32 %v316, %v627
    %629 = vmatprep.mubr.f32.mxu0 %v93
    %630 = vmatmul.mubr.f32.gmra.mrb[0].mxu0 %v92
    %v631 = vpop.f32.mrb[0].mxu0
    %v632 = vadd.f32 %v312, %v631
    %v633 = vpop.f32.mrb[0].mxu0
    %v634 = vadd.f32 %v316, %v633
    %635 = vmatprep.mubr.f32.mxu0 %v96
    %636 = vmatmul.mubr.f32.gmra.mrb[0].mxu0 %v95
    %v637 = vpop.f32.mrb[0].mxu0
    %v638 = vadd.f32 %v312, %v637
    %v639 = vpop.f32.mrb[0].mxu0
    %v640 = vadd.f32 %v316, %v639
    %641 = vmatprep.mubr.f32.mxu0 %v99
    %642 = vmatmul.mubr.f32.gmra.mrb[0].mxu0 %v98
    %v643 = vpop.f32.mrb[0].mxu0
    %v644 = vadd.f32 %v312, %v643
    %v645 = vpop.f32.mrb[0].mxu0
    %v646 = vadd.f32 %v316, %v645
    %647 = vmatprep.mubr.f32.mxu0 %v102
    %648 = vmatmul.mubr.f32.gmra.mrb[0].mxu0 %v101
    %v649 = vpop.f32.mrb[0].mxu0
    %v650 = vadd.f32 %v312, %v649
    %v651 = vpop.f32.mrb[0].mxu0
    %v652 = vadd.f32 %v316, %v651
    %653 = vmatprep.mubr.f32.mxu0 %v105
    %654 = vmatmul.mubr.f32.gmra.mrb[0].mxu0 %v104
    %v655 = vpop.f32.mrb[0].mxu0
    %v656 = vadd.f32 %v312, %v655
    %v657 = vpop.f32.mrb[0].mxu0
    %v658 = vadd.f32 %v316, %v657
    %659 = vdwg.mxu0
    %660 = vmatprep.subr.mxu0 %v238
    %661 = vmatpush1.msra.mxu0 %v237
    %662 = vmatprep.subr.mxu0 %v242
    %663 = vmatpush1.msra.mxu0 %v241
    %664 = vmatprep.subr.mxu0 %v246
    %665 = vmatpush1.msra.mxu0 %v245
    %666 = vmatprep.subr.mxu0 %v250
    %667 = vmatpush1.msra.mxu0 %v249
    %668 = vmatprep.subr.mxu0 %v254
    %669 = vmatpush1.msra.mxu0 %v253
    %670 = vmatprep.subr.mxu0 %v258
    %671 = vmatpush1.msra.mxu0 %v257
    %672 = vmatprep.subr.mxu0 %v262
    %673 = vmatpush1.msra.mxu0 %v261
    %674 = vmatprep.subr.mxu0 %v266
    %675 = vmatpush1.msra.mxu0 %v265
    %676 = vmatprep.subr.mxu0 %v270
    %677 = vmatpush1.msra.mxu0 %v269
    %678 = vmatprep.subr.mxu0 %v274
    %679 = vmatpush1.msra.mxu0 %v273
    %680 = vmatprep.subr.mxu0 %v278
    %681 = vmatpush1.msra.mxu0 %v277
    %682 = vmatprep.subr.mxu0 %v282
    %683 = vmatpush1.msra.mxu0 %v281
    %684 = vmatprep.subr.mxu0 %v286
    %685 = vmatpush1.msra.mxu0 %v285
    %686 = vmatprep.subr.mxu0 %v290
    %687 = vmatpush1.msra.mxu0 %v289
    %688 = vmatprep.subr.mxu0 %v294
    %689 = vmatpush1.msra.mxu0 %v293
    %690 = vmatprep.subr.mxu0 %v298
    %691 = vmatpush1.msra.mxu0 %v297
    %692 = vmatprep.subr.mxu0 0.0
    %693 = vmatpush1.msra.mxu0 0.0
    %694 = vmatprep.subr.mxu0 0.0
    %695 = vmatpush1.msra.mxu0 0.0
    %696 = vmatprep.subr.mxu0 0.0
    %697 = vmatpush1.msra.mxu0 0.0
    %698 = vmatprep.subr.mxu0 0.0
    %699 = vmatpush1.msra.mxu0 0.0
    %700 = vmatprep.subr.mxu0 0.0
    %701 = vmatpush1.msra.mxu0 0.0
    %702 = vmatprep.subr.mxu0 0.0
    %703 = vmatpush1.msra.mxu0 0.0
    %704 = vmatprep.subr.mxu0 0.0
    %705 = vmatpush1.msra.mxu0 0.0
    %706 = vmatprep.subr.mxu0 0.0
    %707 = vmatpush1.msra.mxu0 0.0
    %708 = vmatprep.subr.mxu0 0.0
    %709 = vmatpush1.msra.mxu0 0.0
    %710 = vmatprep.subr.mxu0 0.0
    %711 = vmatpush1.msra.mxu0 0.0
    %712 = vmatprep.subr.mxu0 0.0
    %713 = vmatpush1.msra.mxu0 0.0
    %714 = vmatprep.subr.mxu0 0.0
    %715 = vmatpush1.msra.mxu0 0.0
    %716 = vmatprep.subr.mxu0 0.0
    %717 = vmatpush1.msra.mxu0 0.0
    %718 = vmatprep.subr.mxu0 0.0
    %719 = vmatpush1.msra.mxu0 0.0
    %720 = vmatprep.subr.mxu0 0.0
    %721 = vmatpush1.msra.mxu0 0.0
    %722 = vmatprep.subr.mxu0 0.0
    %723 = vmatpush1.msra.mxu0 0.0
    %724 = vmatprep.mubr.f32.mxu0 0.0
    %725 = vmatmul.mubr.f32.gmra.mrb[0].mxu0 %v85
    %v726 = vpop.f32.mrb[0].mxu0
    %v727 = vadd.f32 %v614, %v726
    %v728 = vpop.f32.mrb[0].mxu0
    %v729 = vadd.f32 %v616, %v728
    %730 = vmatprep.mubr.f32.mxu0 0.0
    %731 = vmatmul.mubr.f32.gmra.mrb[0].mxu0 %v88
    %v732 = vpop.f32.mrb[0].mxu0
    %v733 = vadd.f32 %v620, %v732
    %v734 = vpop.f32.mrb[0].mxu0
    %v735 = vadd.f32 %v622, %v734
    %736 = vmatprep.mubr.f32.mxu0 0.0
    %737 = vmatmul.mubr.f32.gmra.mrb[0].mxu0 %v91
    %v738 = vpop.f32.mrb[0].mxu0
    %v739 = vadd.f32 %v626, %v738
    %v740 = vpop.f32.mrb[0].mxu0
    %v741 = vadd.f32 %v628, %v740
    %742 = vmatprep.mubr.f32.mxu0 0.0
    %743 = vmatmul.mubr.f32.gmra.mrb[0].mxu0 %v94
    %v744 = vpop.f32.mrb[0].mxu0
    %v745 = vadd.f32 %v632, %v744
    %v746 = vpop.f32.mrb[0].mxu0
    %v747 = vadd.f32 %v634, %v746
    %748 = vmatprep.mubr.f32.mxu0 0.0
    %749 = vmatmul.mubr.f32.gmra.mrb[0].mxu0 %v97
    %v750 = vpop.f32.mrb[0].mxu0
    %v751 = vadd.f32 %v638, %v750
    %v752 = vpop.f32.mrb[0].mxu0
    %v753 = vadd.f32 %v640, %v752
    %754 = vmatprep.mubr.f32.mxu0 0.0
    %755 = vmatmul.mubr.f32.gmra.mrb[0].mxu0 %v100
    %v756 = vpop.f32.mrb[0].mxu0
    %v757 = vadd.f32 %v644, %v756
    %v758 = vpop.f32.mrb[0].mxu0
    %v759 = vadd.f32 %v646, %v758
    %760 = vmatprep.mubr.f32.mxu0 0.0
    %761 = vmatmul.mubr.f32.gmra.mrb[0].mxu0 %v103
    %v762 = vpop.f32.mrb[0].mxu0
    %v763 = vadd.f32 %v650, %v762
    %v764 = vpop.f32.mrb[0].mxu0
    %v765 = vadd.f32 %v652, %v764
    %766 = vmatprep.mubr.f32.mxu0 0.0
    %767 = vmatmul.mubr.f32.gmra.mrb[0].mxu0 %v106
    %v768 = vpop.f32.mrb[0].mxu0
    %v769 = vadd.f32 %v656, %v768
    %v770 = vpop.f32.mrb[0].mxu0
    %v771 = vadd.f32 %v658, %v770
    %772 = vdwg.mxu0
    %v773 = vmax.f32 %v501, 0.0
    %v774 = vmax.f32 %v503, 0.0
    %v775 = vmax.f32 %v727, 0.0
    %v776 = vmax.f32 %v729, 0.0
    %v777 = vmax.f32 %v507, 0.0
    %v778 = vmax.f32 %v509, 0.0
    %v779 = vmax.f32 %v733, 0.0
    %v780 = vmax.f32 %v735, 0.0
    %v781 = vmax.f32 %v513, 0.0
    %v782 = vmax.f32 %v515, 0.0
    %v783 = vmax.f32 %v739, 0.0
    %v784 = vmax.f32 %v741, 0.0
    %v785 = vmax.f32 %v519, 0.0
    %v786 = vmax.f32 %v521, 0.0
    %v787 = vmax.f32 %v745, 0.0
    %v788 = vmax.f32 %v747, 0.0
    %v789 = vmax.f32 %v525, 0.0
    %v790 = vmax.f32 %v527, 0.0
    %v791 = vmax.f32 %v751, 0.0
    %v792 = vmax.f32 %v753, 0.0
    %v793 = vmax.f32 %v531, 0.0
    %v794 = vmax.f32 %v533, 0.0
    %v795 = vmax.f32 %v757, 0.0
    %v796 = vmax.f32 %v759, 0.0
    %v797 = vmax.f32 %v537, 0.0
    %v798 = vmax.f32 %v539, 0.0
    %v799 = vmax.f32 %v763, 0.0
    %v800 = vmax.f32 %v765, 0.0
    %v801 = vmax.f32 %v543, 0.0
    %v802 = vmax.f32 %v545, 0.0
    %v803 = vmax.f32 %v769, 0.0
    %v804 = vmax.f32 %v771, 0.0
    %v805 = vadd.f32 %v773, %v774
    %806 = vadd.xlane.f32.xlu0 %v805
    %v807 = vpop.xlane.xlu0 %806
    %v808 = vadd.f32 %v777, %v778
    %809 = vadd.xlane.f32.xlu0 %v808
    %v810 = vpop.xlane.xlu0 %809
    %v811 = vadd.f32 %v781, %v782
    %812 = vadd.xlane.f32.xlu0 %v811
    %v813 = vpop.xlane.xlu0 %812
    %v814 = vadd.f32 %v785, %v786
    %815 = vadd.xlane.f32.xlu0 %v814
    %v816 = vpop.xlane.xlu0 %815
    %v817 = vadd.f32 %v789, %v790
    %818 = vadd.xlane.f32.xlu0 %v817
    %v819 = vpop.xlane.xlu0 %818
    %v820 = vadd.f32 %v793, %v794
    %821 = vadd.xlane.f32.xlu0 %v820
    %v822 = vpop.xlane.xlu0 %821
    %v823 = vadd.f32 %v797, %v798
    %824 = vadd.xlane.f32.xlu0 %v823
    %v825 = vpop.xlane.xlu0 %824
    %v826 = vadd.f32 %v801, %v802
    %827 = vadd.xlane.f32.xlu0 %v826
    %v828 = vpop.xlane.xlu0 %827
    %v829 = vrcp.pop 256.0
    %v830 = vmul.f32 %v807, %v829
    %v831 = vmul.f32 %v810, %v829
    %v832 = vmul.f32 %v813, %v829
    %v833 = vmul.f32 %v816, %v829
    %v834 = vmul.f32 %v819, %v829
    %v835 = vmul.f32 %v822, %v829
    %v836 = vmul.f32 %v825, %v829
    %v837 = vmul.f32 %v828, %v829
    %v838 = vmul.f32 %v773, %v773
    %v839 = vmul.f32 %v774, %v774
    %v840 = vmul.f32 %v777, %v777
    %v841 = vmul.f32 %v778, %v778
    %v842 = vmul.f32 %v781, %v781
    %v843 = vmul.f32 %v782, %v782
    %v844 = vmul.f32 %v785, %v785
    %v845 = vmul.f32 %v786, %v786
    %v846 = vmul.f32 %v789, %v789
    %v847 = vmul.f32 %v790, %v790
    %v848 = vmul.f32 %v793, %v793
    %v849 = vmul.f32 %v794, %v794
    %v850 = vmul.f32 %v797, %v797
    %v851 = vmul.f32 %v798, %v798
    %v852 = vmul.f32 %v801, %v801
    %v853 = vmul.f32 %v802, %v802
    %v854 = vadd.f32 %v838, %v839
    %855 = vadd.xlane.f32.xlu0 %v854
    %v856 = vpop.xlane.xlu0 %855
    %v857 = vadd.f32 %v840, %v841
    %858 = vadd.xlane.f32.xlu0 %v857
    %v859 = vpop.xlane.xlu0 %858
    %v860 = vadd.f32 %v842, %v843
    %861 = vadd.xlane.f32.xlu0 %v860
    %v862 = vpop.xlane.xlu0 %861
    %v863 = vadd.f32 %v844, %v845
    %864 = vadd.xlane.f32.xlu0 %v863
    %v865 = vpop.xlane.xlu0 %864
    %v866 = vadd.f32 %v846, %v847
    %867 = vadd.xlane.f32.xlu0 %v866
    %v868 = vpop.xlane.xlu0 %867
    %v869 = vadd.f32 %v848, %v849
    %870 = vadd.xlane.f32.xlu0 %v869
    %v871 = vpop.xlane.xlu0 %870
    %v872 = vadd.f32 %v850, %v851
    %873 = vadd.xlane.f32.xlu0 %v872
    %v874 = vpop.xlane.xlu0 %873
    %v875 = vadd.f32 %v852, %v853
    %876 = vadd.xlane.f32.xlu0 %v875
    %v877 = vpop.xlane.xlu0 %876
    %v878 = vmul.f32 %v856, %v829
    %v879 = vmul.f32 %v859, %v829
    %v880 = vmul.f32 %v862, %v829
    %v881 = vmul.f32 %v865, %v829
    %v882 = vmul.f32 %v868, %v829
    %v883 = vmul.f32 %v871, %v829
    %v884 = vmul.f32 %v874, %v829
    %v885 = vmul.f32 %v877, %v829
    %v886 = vmul.f32 %v830, %v830
    %v887 = vmul.f32 %v831, %v831
    %v888 = vmul.f32 %v832, %v832
    %v889 = vmul.f32 %v833, %v833
    %v890 = vmul.f32 %v834, %v834
    %v891 = vmul.f32 %v835, %v835
    %v892 = vmul.f32 %v836, %v836
    %v893 = vmul.f32 %v837, %v837
    %v894 = vsub.f32 %v878, %v886
    %v895 = vsub.f32 %v879, %v887
    %v896 = vsub.f32 %v880, %v888
    %v897 = vsub.f32 %v881, %v889
    %v898 = vsub.f32 %v882, %v890
    %v899 = vsub.f32 %v883, %v891
    %v900 = vsub.f32 %v884, %v892
    %v901 = vsub.f32 %v885, %v893
    %v902 = vsub.f32 %v773, %v830
    %v903 = vsub.f32 %v774, %v830
    %v904 = vsub.f32 %v777, %v831
    %v905 = vsub.f32 %v778, %v831
    %v906 = vsub.f32 %v781, %v832
    %v907 = vsub.f32 %v782, %v832
    %v908 = vsub.f32 %v785, %v833
    %v909 = vsub.f32 %v786, %v833
    %v910 = vsub.f32 %v789, %v834
    %v911 = vsub.f32 %v790, %v834
    %v912 = vsub.f32 %v793, %v835
    %v913 = vsub.f32 %v794, %v835
    %v914 = vsub.f32 %v797, %v836
    %v915 = vsub.f32 %v798, %v836
    %v916 = vsub.f32 %v801, %v837
    %v917 = vsub.f32 %v802, %v837
    %v918 = vadd.f32 %v894, 1e-05
    %v919 = vadd.f32 %v895, 1e-05
    %v920 = vadd.f32 %v896, 1e-05
    %v921 = vadd.f32 %v897, 1e-05
    %v922 = vadd.f32 %v898, 1e-05
    %v923 = vadd.f32 %v899, 1e-05
    %v924 = vadd.f32 %v900, 1e-05
    %v925 = vadd.f32 %v901, 1e-05
    %v926 = vrsqrt.pop %v918
    %v927 = vrsqrt.pop %v919
    %v928 = vrsqrt.pop %v920
    %v929 = vrsqrt.pop %v921
    %v930 = vrsqrt.pop %v922
    %v931 = vrsqrt.pop %v923
    %v932 = vrsqrt.pop %v924
    %v933 = vrsqrt.pop %v925
    %v934 = vmul.f32 %v902, %v926
    %v935 = vmul.f32 %v903, %v926
    %v936 = vmul.f32 %v904, %v927
    %v937 = vmul.f32 %v905, %v927
    %v938 = vmul.f32 %v906, %v928
    %v939 = vmul.f32 %v907, %v928
    %v940 = vmul.f32 %v908, %v929
    %v941 = vmul.f32 %v909, %v929
    %v942 = vmul.f32 %v910, %v930
    %v943 = vmul.f32 %v911, %v930
    %v944 = vmul.f32 %v912, %v931
    %v945 = vmul.f32 %v913, %v931
    %v946 = vmul.f32 %v914, %v932
    %v947 = vmul.f32 %v915, %v932
    %v948 = vmul.f32 %v916, %v933
    %v949 = vmul.f32 %v917, %v933
    %v950 = vadd.f32 %v775, %v776
    %951 = vadd.xlane.f32.xlu0 %v950
    %v952 = vpop.xlane.xlu0 %951
    %v953 = vadd.f32 %v779, %v780
    %954 = vadd.xlane.f32.xlu0 %v953
    %v955 = vpop.xlane.xlu0 %954
    %v956 = vadd.f32 %v783, %v784
    %957 = vadd.xlane.f32.xlu0 %v956
    %v958 = vpop.xlane.xlu0 %957
    %v959 = vadd.f32 %v787, %v788
    %960 = vadd.xlane.f32.xlu0 %v959
    %v961 = vpop.xlane.xlu0 %960
    %v962 = vadd.f32 %v791, %v792
    %963 = vadd.xlane.f32.xlu0 %v962
    %v964 = vpop.xlane.xlu0 %963
    %v965 = vadd.f32 %v795, %v796
    %966 = vadd.xlane.f32.xlu0 %v965
    %v967 = vpop.xlane.xlu0 %966
    %v968 = vadd.f32 %v799, %v800
    %969 = vadd.xlane.f32.xlu0 %v968
    %v970 = vpop.xlane.xlu0 %969
    %v971 = vadd.f32 %v803, %v804
    %972 = vadd.xlane.f32.xlu0 %v971
    %v973 = vpop.xlane.xlu0 %972
    %v974 = vmul.f32 %v952, %v829
    %v975 = vmul.f32 %v955, %v829
    %v976 = vmul.f32 %v958, %v829
    %v977 = vmul.f32 %v961, %v829
    %v978 = vmul.f32 %v964, %v829
    %v979 = vmul.f32 %v967, %v829
    %v980 = vmul.f32 %v970, %v829
    %v981 = vmul.f32 %v973, %v829
    %v982 = vmul.f32 %v775, %v775
    %v983 = vmul.f32 %v776, %v776
    %v984 = vmul.f32 %v779, %v779
    %v985 = vmul.f32 %v780, %v780
    %v986 = vmul.f32 %v783, %v783
    %v987 = vmul.f32 %v784, %v784
    %v988 = vmul.f32 %v787, %v787
    %v989 = vmul.f32 %v788, %v788
    %v990 = vmul.f32 %v791, %v791
    %v991 = vmul.f32 %v792, %v792
    %v992 = vmul.f32 %v795, %v795
    %v993 = vmul.f32 %v796, %v796
    %v994 = vmul.f32 %v799, %v799
    %v995 = vmul.f32 %v800, %v800
    %v996 = vmul.f32 %v803, %v803
    %v997 = vmul.f32 %v804, %v804
    %v998 = vadd.f32 %v982, %v983
    %999 = vadd.xlane.f32.xlu0 %v998
    %v1000 = vpop.xlane.xlu0 %999
    %v1001 = vadd.f32 %v984, %v985
    %1002 = vadd.xlane.f32.xlu0 %v1001
    %v1003 = vpop.xlane.xlu0 %1002
    %v1004 = vadd.f32 %v986, %v987
    %1005 = vadd.xlane.f32.xlu0 %v1004
    %v1006 = vpop.xlane.xlu0 %1005
    %v1007 = vadd.f32 %v988, %v989
    %1008 = vadd.xlane.f32.xlu0 %v1007
    %v1009 = vpop.xlane.xlu0 %1008
    %v1010 = vadd.f32 %v990, %v991
    %1011 = vadd.xlane.f32.xlu0 %v1010
    %v1012 = vpop.xlane.xlu0 %1011
    %v1013 = vadd.f32 %v992, %v993
    %1014 = vadd.xlane.f32.xlu0 %v1013
    %v1015 = vpop.xlane.xlu0 %1014
    %v1016 = vadd.f32 %v994, %v995
    %1017 = vadd.xlane.f32.xlu0 %v1016
    %v1018 = vpop.xlane.xlu0 %1017
    %v1019 = vadd.f32 %v996, %v997
    %1020 = vadd.xlane.f32.xlu0 %v1019
    %v1021 = vpop.xlane.xlu0 %1020
    %v1022 = vmul.f32 %v1000, %v829
    %v1023 = vmul.f32 %v1003, %v829
    %v1024 = vmul.f32 %v1006, %v829
    %v1025 = vmul.f32 %v1009, %v829
    %v1026 = vmul.f32 %v1012, %v829
    %v1027 = vmul.f32 %v1015, %v829
    %v1028 = vmul.f32 %v1018, %v829
    %v1029 = vmul.f32 %v1021, %v829
    %v1030 = vmul.f32 %v974, %v974
    %v1031 = vmul.f32 %v975, %v975
    %v1032 = vmul.f32 %v976, %v976
    %v1033 = vmul.f32 %v977, %v977
    %v1034 = vmul.f32 %v978, %v978
    %v1035 = vmul.f32 %v979, %v979
    %v1036 = vmul.f32 %v980, %v980
    %v1037 = vmul.f32 %v981, %v981
    %v1038 = vsub.f32 %v1022, %v1030
    %v1039 = vsub.f32 %v1023, %v1031
    %v1040 = vsub.f32 %v1024, %v1032
    %v1041 = vsub.f32 %v1025, %v1033
    %v1042 = vsub.f32 %v1026, %v1034
    %v1043 = vsub.f32 %v1027, %v1035
    %v1044 = vsub.f32 %v1028, %v1036
    %v1045 = vsub.f32 %v1029, %v1037
    %v1046 = vsub.f32 %v775, %v974
    %v1047 = vsub.f32 %v776, %v974
    %v1048 = vsub.f32 %v779, %v975
    %v1049 = vsub.f32 %v780, %v975
    %v1050 = vsub.f32 %v783, %v976
    %v1051 = vsub.f32 %v784, %v976
    %v1052 = vsub.f32 %v787, %v977
    %v1053 = vsub.f32 %v788, %v977
    %v1054 = vsub.f32 %v791, %v978
    %v1055 = vsub.f32 %v792, %v978
    %v1056 = vsub.f32 %v795, %v979
    %v1057 = vsub.f32 %v796, %v979
    %v1058 = vsub.f32 %v799, %v980
    %v1059 = vsub.f32 %v800, %v980
    %v1060 = vsub.f32 %v803, %v981
    %v1061 = vsub.f32 %v804, %v981
    %v1062 = vadd.f32 %v1038, 1e-05
    %v1063 = vadd.f32 %v1039, 1e-05
    %v1064 = vadd.f32 %v1040, 1e-05
    %v1065 = vadd.f32 %v1041, 1e-05
    %v1066 = vadd.f32 %v1042, 1e-05
    %v1067 = vadd.f32 %v1043, 1e-05
    %v1068 = vadd.f32 %v1044, 1e-05
    %v1069 = vadd.f32 %v1045, 1e-05
    %v1070 = vrsqrt.pop %v1062
    %v1071 = vrsqrt.pop %v1063
    %v1072 = vrsqrt.pop %v1064
    %v1073 = vrsqrt.pop %v1065
    %v1074 = vrsqrt.pop %v1066
    %v1075 = vrsqrt.pop %v1067
    %v1076 = vrsqrt.pop %v1068
    %v1077 = vrsqrt.pop %v1069
    %v1078 = vmul.f32 %v1046, %v1070
    %v1079 = vmul.f32 %v1047, %v1070
    %v1080 = vmul.f32 %v1048, %v1071
    %v1081 = vmul.f32 %v1049, %v1071
    %v1082 = vmul.f32 %v1050, %v1072
    %v1083 = vmul.f32 %v1051, %v1072
    %v1084 = vmul.f32 %v1052, %v1073
    %v1085 = vmul.f32 %v1053, %v1073
    %v1086 = vmul.f32 %v1054, %v1074
    %v1087 = vmul.f32 %v1055, %v1074
    %v1088 = vmul.f32 %v1056, %v1075
    %v1089 = vmul.f32 %v1057, %v1075
    %v1090 = vmul.f32 %v1058, %v1076
    %v1091 = vmul.f32 %v1059, %v1076
    %v1092 = vmul.f32 %v1060, %v1077
    %v1093 = vmul.f32 %v1061, %v1077
    %v1094 = vld [vmem:[#allocation8] sm:$0xf]
    %v1096 = vlaneseq
    %v1097 = vshrl.u32 %v1096, 7
    %v1098 = vsub.s32 0, %v1097
    %v1099 = vrot.slane %v1094, %v1098
    %v1100 = vlaneseq
    %v1101 = vshrl.u32 %v1100, 7
    %v1102 = vsub.s32 1, %v1101
    %v1103 = vrot.slane %v1094, %v1102
    %v1104 = vlaneseq
    %v1105 = vshrl.u32 %v1104, 7
    %v1106 = vsub.s32 2, %v1105
    %v1107 = vrot.slane %v1094, %v1106
    %v1108 = vlaneseq
    %v1109 = vshrl.u32 %v1108, 7
    %v1110 = vsub.s32 3, %v1109
    %v1111 = vrot.slane %v1094, %v1110
    %v1116 = vmul.f32 %v934, %v1099
    %v1117 = vmul.f32 %v935, %v1103
    %v1118 = vmul.f32 %v1078, %v1107
    %v1119 = vmul.f32 %v1079, %v1111
    %v1120 = vmul.f32 %v936, %v1099
    %v1121 = vmul.f32 %v937, %v1103
    %v1122 = vmul.f32 %v1080, %v1107
    %v1123 = vmul.f32 %v1081, %v1111
    %v1124 = vmul.f32 %v938, %v1099
    %v1125 = vmul.f32 %v939, %v1103
    %v1126 = vmul.f32 %v1082, %v1107
    %v1127 = vmul.f32 %v1083, %v1111
    %v1128 = vmul.f32 %v940, %v1099
    %v1129 = vmul.f32 %v941, %v1103
    %v1130 = vmul.f32 %v1084, %v1107
    %v1131 = vmul.f32 %v1085, %v1111
    %v1132 = vmul.f32 %v942, %v1099
    %v1133 = vmul.f32 %v943, %v1103
    %v1134 = vmul.f32 %v1086, %v1107
    %v1135 = vmul.f32 %v1087, %v1111
    %v1136 = vmul.f32 %v944, %v1099
    %v1137 = vmul.f32 %v945, %v1103
    %v1138 = vmul.f32 %v1088, %v1107
    %v1139 = vmul.f32 %v1089, %v1111
    %v1140 = vmul.f32 %v946, %v1099
    %v1141 = vmul.f32 %v947, %v1103
    %v1142 = vmul.f32 %v1090, %v1107
    %v1143 = vmul.f32 %v1091, %v1111
    %v1144 = vmul.f32 %v948, %v1099
    %v1145 = vmul.f32 %v949, %v1103
    %v1146 = vmul.f32 %v1092, %v1107
    %v1147 = vmul.f32 %v1093, %v1111
    %v1148 = vld [vmem:[#allocation10] sm:$0xf]
    %v1150 = vlaneseq
    %v1151 = vshrl.u32 %v1150, 7
    %v1152 = vsub.s32 0, %v1151
    %v1153 = vrot.slane %v1148, %v1152
    %v1154 = vlaneseq
    %v1155 = vshrl.u32 %v1154, 7
    %v1156 = vsub.s32 1, %v1155
    %v1157 = vrot.slane %v1148, %v1156
    %v1158 = vlaneseq
    %v1159 = vshrl.u32 %v1158, 7
    %v1160 = vsub.s32 2, %v1159
    %v1161 = vrot.slane %v1148, %v1160
    %v1162 = vlaneseq
    %v1163 = vshrl.u32 %v1162, 7
    %v1164 = vsub.s32 3, %v1163
    %v1165 = vrot.slane %v1148, %v1164
    %v1170 = vadd.f32 %v1116, %v1153
    %v1171 = vadd.f32 %v1117, %v1157
    %v1172 = vadd.f32 %v1118, %v1161
    %v1173 = vadd.f32 %v1119, %v1165
    %v1174 = vadd.f32 %v1120, %v1153
    %v1175 = vadd.f32 %v1121, %v1157
    %v1176 = vadd.f32 %v1122, %v1161
    %v1177 = vadd.f32 %v1123, %v1165
    %v1178 = vadd.f32 %v1124, %v1153
    %v1179 = vadd.f32 %v1125, %v1157
    %v1180 = vadd.f32 %v1126, %v1161
    %v1181 = vadd.f32 %v1127, %v1165
    %v1182 = vadd.f32 %v1128, %v1153
    %v1183 = vadd.f32 %v1129, %v1157
    %v1184 = vadd.f32 %v1130, %v1161
    %v1185 = vadd.f32 %v1131, %v1165
    %v1186 = vadd.f32 %v1132, %v1153
    %v1187 = vadd.f32 %v1133, %v1157
    %v1188 = vadd.f32 %v1134, %v1161
    %v1189 = vadd.f32 %v1135, %v1165
    %v1190 = vadd.f32 %v1136, %v1153
    %v1191 = vadd.f32 %v1137, %v1157
    %v1192 = vadd.f32 %v1138, %v1161
    %v1193 = vadd.f32 %v1139, %v1165
    %v1194 = vadd.f32 %v1140, %v1153
    %v1195 = vadd.f32 %v1141, %v1157
    %v1196 = vadd.f32 %v1142, %v1161
    %v1197 = vadd.f32 %v1143, %v1165
    %v1198 = vadd.f32 %v1144, %v1153
    %v1199 = vadd.f32 %v1145, %v1157
    %v1200 = vadd.f32 %v1146, %v1161
    %v1201 = vadd.f32 %v1147, %v1165
    %1202 = vst [vmem:[#allocation11] sm:$0xff] %v1170
    %1203 = vst [vmem:[#allocation11 + $0x8] sm:$0xff] %v1171
    %1204 = vst [vmem:[#allocation11 + $0x10] sm:$0xff] %v1172
    %1205 = vst [vmem:[#allocation11 + $0x18] sm:$0xff] %v1173
    %1206 = vst [vmem:[#allocation11 + $0x20] sm:$0xff] %v1174
    %1207 = vst [vmem:[#allocation11 + $0x28] sm:$0xff] %v1175
    %1208 = vst [vmem:[#allocation11 + $0x30] sm:$0xff] %v1176
    %1209 = vst [vmem:[#allocation11 + $0x38] sm:$0xff] %v1177
    %1210 = vst [vmem:[#allocation11 + $0x40] sm:$0xff] %v1178
    %1211 = vst [vmem:[#allocation11 + $0x48] sm:$0xff] %v1179
    %1212 = vst [vmem:[#allocation11 + $0x50] sm:$0xff] %v1180
    %1213 = vst [vmem:[#allocation11 + $0x58] sm:$0xff] %v1181
    %1214 = vst [vmem:[#allocation11 + $0x60] sm:$0xff] %v1182
    %1215 = vst [vmem:[#allocation11 + $0x68] sm:$0xff] %v1183
    %1216 = vst [vmem:[#allocation11 + $0x70] sm:$0xff] %v1184
    %1217 = vst [vmem:[#allocation11 + $0x78] sm:$0xff] %v1185
    %1218 = vst [vmem:[#allocation11 + $0x80] sm:$0xff] %v1186
    %1219 = vst [vmem:[#allocation11 + $0x88] sm:$0xff] %v1187
    %1220 = vst [vmem:[#allocation11 + $0x90] sm:$0xff] %v1188
    %1221 = vst [vmem:[#allocation11 + $0x98] sm:$0xff] %v1189
    %1222 = vst [vmem:[#allocation11 + $0xa0] sm:$0xff] %v1190
    %1223 = vst [vmem:[#allocation11 + $0xa8] sm:$0xff] %v1191
    %1224 = vst [vmem:[#allocation11 + $0xb0] sm:$0xff] %v1192
    %1225 = vst [vmem:[#allocation11 + $0xb8] sm:$0xff] %v1193
    %1226 = vst [vmem:[#allocation11 + $0xc0] sm:$0xff] %v1194
    %1227 = vst [vmem:[#allocation11 + $0xc8] sm:$0xff] %v1195
    %1228 = vst [vmem:[#allocation11 + $0xd0] sm:$0xff] %v1196
    %1229 = vst [vmem:[#allocation11 + $0xd8] sm:$0xff] %v1197
    %1230 = vst [vmem:[#allocation11 + $0xe0] sm:$0xff] %v1198
    %1231 = vst [vmem:[#allocation11 + $0xe8] sm:$0xff] %v1199
    %1232 = vst [vmem:[#allocation11 + $0xf0] sm:$0xff] %v1200
    %1233 = vst [vmem:[#allocation11 + $0xf8] sm:$0xff] %v1201
    // Predicated region
    $region42: #{gan_module_forward.3} parent=1 // pred_check
      _
    $region43: #{gan_module_forward.3} parent=1 // pred_check_branch
      %1235 = sbr.rel (0) target = $region45
    $region44: #{gan_module_forward.3} parent=1 // pred_region
      %s1237 = ssub.s32 4096, 4096
      %1238 = vsyncadd [#allocation4], %s1237
      %s1239 = sshll.u32 [#allocation11], 4
      %s1240 = int_to_ptr.vmem [resolvable:$true] %s1239
      %1245 = dma.vmem_to_hbm [thread:$0]  %s1240, 4096, %s5, [#allocation4], 512, 512, 32
    $region45: #{gan_module_forward.3} parent=1 // pred_fallthru
      _
    // Predicated region
    $region46: #{gan_module_forward.3} parent=1 // pred_check
      _
    $region47: #{gan_module_forward.3} parent=1 // pred_check_branch
      %1247 = sbr.rel (0) target = $region49
    $region48: #{gan_module_forward.3} parent=1 // pred_region
      %1248 = dma.done [#allocation4], 4096
    $region49: #{gan_module_forward.3} parent=1 // pred_fallthru
      _
    %1249 = vsyncpa [#allocation3], 1
    %1250 = vsyncpa [#allocation6], 1
    %1251 = vsyncpa [#allocation9], 1
    %1252 = vsyncpa [#allocation4], 1

// kernel: gan_module_forward.4
$region0: #{gan_module_forward.4}
  #allocation0 [shape = 'u32[]', space=smem, size = 0x4, offset = 0x4, fixed_abs, tag = 'smem constant byte address 0x4 - core index']
  #allocation1 [shape = 'u32[144,128]{1,0:T(1,128)}', space=vmem, size = 0x12000, scoped, tag = 'internal scratch']
  %s0 = inlined_call_operand.hbm [shape: f32[64,384], index: 0, kind: input, shape index: {}]
  %s1 = inlined_call_operand.hbm [shape: f32[384,256], index: 1, kind: input, shape index: {}]
  %s2 = inlined_call_operand.hbm [shape: f32[1,256], index: 2, kind: input, shape index: {}]
  %s3 = inlined_call_operand.hbm [shape: f32[1,256], index: 3, kind: input, shape index: {}]
  %s4 = inlined_call_operand.hbm [shape: f32[1,256], index: 4, kind: input, shape index: {}]
  %s5 = inlined_call_operand.hbm [shape: f32[64,256], index: 5, kind: output, shape index: {}]
  %s6 = sld [smem:[#allocation0]]
  $region50: #{gan_module_forward.4} parent=0
    _
  %s8 = ssub.s32 1, %s6
  %s9 = scalar_select 0, %s8, %s6
  $region1: #{gan_module_forward.4} parent=0
    #allocation2 [shape = 'u8[98304]{0}', space=vmem, size = 0x18000, scoped, tag = 'input window, operand 0, single buffered']
    #allocation3 [shape = 's32[1]{0}', space=sflag, size = 0x4, scoped, tag = 'scoped memory for gan_module_forward.4']
    #allocation4 [shape = 's32[1]{0}', space=sflag, size = 0x4, scoped, tag = 'scoped memory for gan_module_forward.4']
    #allocation5 [shape = 'u8[393216]{0}', space=vmem, size = 0x60000, scoped, tag = 'input window, operand 1, single buffered']
    #allocation6 [shape = 's32[1]{0}', space=sflag, size = 0x4, scoped, tag = 'scoped memory for gan_module_forward.4']
    #allocation7 [shape = 'u8[1024]{0}', space=vmem, size = 0x400, scoped, tag = 'input window, operand 2, single buffered']
    #allocation8 [shape = 'u8[1024]{0}', space=vmem, size = 0x400, scoped, tag = 'input window, operand 3, single buffered']
    #allocation9 [shape = 's32[1]{0}', space=sflag, size = 0x4, scoped, tag = 'scoped memory for gan_module_forward.4']
    #allocation10 [shape = 'u8[1024]{0}', space=vmem, size = 0x400, scoped, tag = 'input window, operand 4, single buffered']
    #allocation11 [shape = 'u8[65536]{0}', space=vmem, size = 0x10000, scoped, tag = 'output window, operand 0, single buffered']
    %10 = vsyncpa [#allocation3], 0
    %11 = vsyncpa [#allocation6], 0
    %12 = vsyncpa [#allocation9], 0
    %13 = vsyncpa [#allocation4], 0
    // Predicated region
    $region2: #{gan_module_forward.4} parent=1 // pred_check
      _
    $region3: #{gan_module_forward.4} parent=1 // pred_check_branch
      %15 = sbr.rel (0) target = $region5
    $region4: #{gan_module_forward.4} parent=1 // pred_region
      %s17 = ssub.s32 3072, 3072
      %18 = vsyncadd [#allocation3], %s17
      %s19 = sshll.u32 [#allocation2], 4
      %s20 = int_to_ptr.vmem [resolvable:$true] %s19
      %25 = dma.hbm_to_vmem [thread:$0]  %s0, 3072, %s20, [#allocation3], 384, 384, 24
    $region5: #{gan_module_forward.4} parent=1 // pred_fallthru
      _
    // Predicated region
    $region6: #{gan_module_forward.4} parent=1 // pred_check
      _
    $region7: #{gan_module_forward.4} parent=1 // pred_check_branch
      %27 = sbr.rel (0) target = $region9
    $region8: #{gan_module_forward.4} parent=1 // pred_region
      %s29 = ssub.s32 12288, 12288
      %30 = vsyncadd [#allocation6], %s29
      %s31 = sshll.u32 [#allocation5], 4
      %s32 = int_to_ptr.vmem [resolvable:$true] %s31
      %37 = dma.hbm_to_vmem [thread:$0]  %s1, 12288, %s32, [#allocation6], 256, 256, 16
    $region9: #{gan_module_forward.4} parent=1 // pred_fallthru
      _
    // Predicated region
    $region10: #{gan_module_forward.4} parent=1 // pred_check
      _
    $region11: #{gan_module_forward.4} parent=1 // pred_check_branch
      %39 = sbr.rel (0) target = $region13
    $region12: #{gan_module_forward.4} parent=1 // pred_region
      %s41 = ssub.s32 32, 32
      %42 = vsyncadd [#allocation6], %s41
      %s44 = sshll.u32 [#allocation7], 4
      %s45 = int_to_ptr.vmem [resolvable:$true] %s44
      %47 = dma.hbm_to_vmem [thread:$0]  %s2, 32, %s45, [#allocation6]
    $region13: #{gan_module_forward.4} parent=1 // pred_fallthru
      _
    // Predicated region
    $region14: #{gan_module_forward.4} parent=1 // pred_check
      _
    $region15: #{gan_module_forward.4} parent=1 // pred_check_branch
      %49 = sbr.rel (0) target = $region17
    $region16: #{gan_module_forward.4} parent=1 // pred_region
      %s51 = ssub.s32 32, 32
      %52 = vsyncadd [#allocation9], %s51
      %s54 = sshll.u32 [#allocation8], 4
      %s55 = int_to_ptr.vmem [resolvable:$true] %s54
      %57 = dma.hbm_to_vmem [thread:$0]  %s3, 32, %s55, [#allocation9]
    $region17: #{gan_module_forward.4} parent=1 // pred_fallthru
      _
    // Predicated region
    $region18: #{gan_module_forward.4} parent=1 // pred_check
      _
    $region19: #{gan_module_forward.4} parent=1 // pred_check_branch
      %59 = sbr.rel (0) target = $region21
    $region20: #{gan_module_forward.4} parent=1 // pred_region
      %s61 = ssub.s32 32, 32
      %62 = vsyncadd [#allocation9], %s61
      %s64 = sshll.u32 [#allocation10], 4
      %s65 = int_to_ptr.vmem [resolvable:$true] %s64
      %67 = dma.hbm_to_vmem [thread:$0]  %s4, 32, %s65, [#allocation9]
    $region21: #{gan_module_forward.4} parent=1 // pred_fallthru
      _
    // Predicated region
    $region22: #{gan_module_forward.4} parent=1 // pred_check
      _
    $region23: #{gan_module_forward.4} parent=1 // pred_check_branch
      %69 = sbr.rel (0) target = $region25
    $region24: #{gan_module_forward.4} parent=1 // pred_region
      %70 = dma.done [#allocation3], 3072
    $region25: #{gan_module_forward.4} parent=1 // pred_fallthru
      _
    // Predicated region
    $region26: #{gan_module_forward.4} parent=1 // pred_check
      _
    $region27: #{gan_module_forward.4} parent=1 // pred_check_branch
      %72 = sbr.rel (0) target = $region29
    $region28: #{gan_module_forward.4} parent=1 // pred_region
      %73 = dma.done [#allocation6], 12288
    $region29: #{gan_module_forward.4} parent=1 // pred_fallthru
      _
    // Predicated region
    $region30: #{gan_module_forward.4} parent=1 // pred_check
      _
    $region31: #{gan_module_forward.4} parent=1 // pred_check_branch
      %75 = sbr.rel (0) target = $region33
    $region32: #{gan_module_forward.4} parent=1 // pred_region
      %76 = dma.done [#allocation6], 32
    $region33: #{gan_module_forward.4} parent=1 // pred_fallthru
      _
    // Predicated region
    $region34: #{gan_module_forward.4} parent=1 // pred_check
      _
    $region35: #{gan_module_forward.4} parent=1 // pred_check_branch
      %78 = sbr.rel (0) target = $region37
    $region36: #{gan_module_forward.4} parent=1 // pred_region
      %79 = dma.done [#allocation9], 32
    $region37: #{gan_module_forward.4} parent=1 // pred_fallthru
      _
    // Predicated region
    $region38: #{gan_module_forward.4} parent=1 // pred_check
      _
    $region39: #{gan_module_forward.4} parent=1 // pred_check_branch
      %81 = sbr.rel (0) target = $region41
    $region40: #{gan_module_forward.4} parent=1 // pred_region
      %82 = dma.done [#allocation9], 32
    $region41: #{gan_module_forward.4} parent=1 // pred_fallthru
      _
    %v83 = vld [vmem:[#allocation2] sm:$0xff]
    %v84 = vld [vmem:[#allocation2 + $0x8] sm:$0xff]
    %v85 = vld [vmem:[#allocation2 + $0x10] sm:$0xff]
    %v86 = vld [vmem:[#allocation2 + $0x18] sm:$0xff]
    %v87 = vld [vmem:[#allocation2 + $0x20] sm:$0xff]
    %v88 = vld [vmem:[#allocation2 + $0x28] sm:$0xff]
    %v89 = vld [vmem:[#allocation2 + $0x30] sm:$0xff]
    %v90 = vld [vmem:[#allocation2 + $0x38] sm:$0xff]
    %v91 = vld [vmem:[#allocation2 + $0x40] sm:$0xff]
    %v92 = vld [vmem:[#allocation2 + $0x48] sm:$0xff]
    %v93 = vld [vmem:[#allocation2 + $0x50] sm:$0xff]
    %v94 = vld [vmem:[#allocation2 + $0x58] sm:$0xff]
    %v95 = vld [vmem:[#allocation2 + $0x60] sm:$0xff]
    %v96 = vld [vmem:[#allocation2 + $0x68] sm:$0xff]
    %v97 = vld [vmem:[#allocation2 + $0x70] sm:$0xff]
    %v98 = vld [vmem:[#allocation2 + $0x78] sm:$0xff]
    %v99 = vld [vmem:[#allocation2 + $0x80] sm:$0xff]
    %v100 = vld [vmem:[#allocation2 + $0x88] sm:$0xff]
    %v101 = vld [vmem:[#allocation2 + $0x90] sm:$0xff]
    %v102 = vld [vmem:[#allocation2 + $0x98] sm:$0xff]
    %v103 = vld [vmem:[#allocation2 + $0xa0] sm:$0xff]
    %v104 = vld [vmem:[#allocation2 + $0xa8] sm:$0xff]
    %v105 = vld [vmem:[#allocation2 + $0xb0] sm:$0xff]
    %v106 = vld [vmem:[#allocation2 + $0xb8] sm:$0xff]
    %v107 = vld [vmem:[#allocation5] sm:$0xff]
    %v108 = vld [vmem:[#allocation5 + $0x8] sm:$0xff]
    %v109 = vld [vmem:[#allocation5 + $0x10] sm:$0xff]
    %v110 = vld [vmem:[#allocation5 + $0x18] sm:$0xff]
    %v111 = vld [vmem:[#allocation5 + $0x20] sm:$0xff]
    %v112 = vld [vmem:[#allocation5 + $0x28] sm:$0xff]
    %v113 = vld [vmem:[#allocation5 + $0x30] sm:$0xff]
    %v114 = vld [vmem:[#allocation5 + $0x38] sm:$0xff]
    %v115 = vld [vmem:[#allocation5 + $0x40] sm:$0xff]
    %v116 = vld [vmem:[#allocation5 + $0x48] sm:$0xff]
    %v117 = vld [vmem:[#allocation5 + $0x50] sm:$0xff]
    %v118 = vld [vmem:[#allocation5 + $0x58] sm:$0xff]
    %v119 = vld [vmem:[#allocation5 + $0x60] sm:$0xff]
    %v120 = vld [vmem:[#allocation5 + $0x68] sm:$0xff]
    %v121 = vld [vmem:[#allocation5 + $0x70] sm:$0xff]
    %v122 = vld [vmem:[#allocation5 + $0x78] sm:$0xff]
    %v123 = vld [vmem:[#allocation5 + $0x80] sm:$0xff]
    %v124 = vld [vmem:[#allocation5 + $0x88] sm:$0xff]
    %v125 = vld [vmem:[#allocation5 + $0x90] sm:$0xff]
    %v126 = vld [vmem:[#allocation5 + $0x98] sm:$0xff]
    %v127 = vld [vmem:[#allocation5 + $0xa0] sm:$0xff]
    %v128 = vld [vmem:[#allocation5 + $0xa8] sm:$0xff]
    %v129 = vld [vmem:[#allocation5 + $0xb0] sm:$0xff]
    %v130 = vld [vmem:[#allocation5 + $0xb8] sm:$0xff]
    %v131 = vld [vmem:[#allocation5 + $0xc0] sm:$0xff]
    %v132 = vld [vmem:[#allocation5 + $0xc8] sm:$0xff]
    %v133 = vld [vmem:[#allocation5 + $0xd0] sm:$0xff]
    %v134 = vld [vmem:[#allocation5 + $0xd8] sm:$0xff]
    %v135 = vld [vmem:[#allocation5 + $0xe0] sm:$0xff]
    %v136 = vld [vmem:[#allocation5 + $0xe8] sm:$0xff]
    %v137 = vld [vmem:[#allocation5 + $0xf0] sm:$0xff]
    %v138 = vld [vmem:[#allocation5 + $0xf8] sm:$0xff]
    %v139 = vld [vmem:[#allocation5 + $0x100] sm:$0xff]
    %v140 = vld [vmem:[#allocation5 + $0x108] sm:$0xff]
    %v141 = vld [vmem:[#allocation5 + $0x110] sm:$0xff]
    %v142 = vld [vmem:[#allocation5 + $0x118] sm:$0xff]
    %v143 = vld [vmem:[#allocation5 + $0x120] sm:$0xff]
    %v144 = vld [vmem:[#allocation5 + $0x128] sm:$0xff]
    %v145 = vld [vmem:[#allocation5 + $0x130] sm:$0xff]
    %v146 = vld [vmem:[#allocation5 + $0x138] sm:$0xff]
    %v147 = vld [vmem:[#allocation5 + $0x140] sm:$0xff]
    %v148 = vld [vmem:[#allocation5 + $0x148] sm:$0xff]
    %v149 = vld [vmem:[#allocation5 + $0x150] sm:$0xff]
    %v150 = vld [vmem:[#allocation5 + $0x158] sm:$0xff]
    %v151 = vld [vmem:[#allocation5 + $0x160] sm:$0xff]
    %v152 = vld [vmem:[#allocation5 + $0x168] sm:$0xff]
    %v153 = vld [vmem:[#allocation5 + $0x170] sm:$0xff]
    %v154 = vld [vmem:[#allocation5 + $0x178] sm:$0xff]
    %v155 = vld [vmem:[#allocation5 + $0x180] sm:$0xff]
    %v156 = vld [vmem:[#allocation5 + $0x188] sm:$0xff]
    %v157 = vld [vmem:[#allocation5 + $0x190] sm:$0xff]
    %v158 = vld [vmem:[#allocation5 + $0x198] sm:$0xff]
    %v159 = vld [vmem:[#allocation5 + $0x1a0] sm:$0xff]
    %v160 = vld [vmem:[#allocation5 + $0x1a8] sm:$0xff]
    %v161 = vld [vmem:[#allocation5 + $0x1b0] sm:$0xff]
    %v162 = vld [vmem:[#allocation5 + $0x1b8] sm:$0xff]
    %v163 = vld [vmem:[#allocation5 + $0x1c0] sm:$0xff]
    %v164 = vld [vmem:[#allocation5 + $0x1c8] sm:$0xff]
    %v165 = vld [vmem:[#allocation5 + $0x1d0] sm:$0xff]
    %v166 = vld [vmem:[#allocation5 + $0x1d8] sm:$0xff]
    %v167 = vld [vmem:[#allocation5 + $0x1e0] sm:$0xff]
    %v168 = vld [vmem:[#allocation5 + $0x1e8] sm:$0xff]
    %v169 = vld [vmem:[#allocation5 + $0x1f0] sm:$0xff]
    %v170 = vld [vmem:[#allocation5 + $0x1f8] sm:$0xff]
    %v171 = vld [vmem:[#allocation5 + $0x200] sm:$0xff]
    %v172 = vld [vmem:[#allocation5 + $0x208] sm:$0xff]
    %v173 = vld [vmem:[#allocation5 + $0x210] sm:$0xff]
    %v174 = vld [vmem:[#allocation5 + $0x218] sm:$0xff]
    %v175 = vld [vmem:[#allocation5 + $0x220] sm:$0xff]
    %v176 = vld [vmem:[#allocation5 + $0x228] sm:$0xff]
    %v177 = vld [vmem:[#allocation5 + $0x230] sm:$0xff]
    %v178 = vld [vmem:[#allocation5 + $0x238] sm:$0xff]
    %v179 = vld [vmem:[#allocation5 + $0x240] sm:$0xff]
    %v180 = vld [vmem:[#allocation5 + $0x248] sm:$0xff]
    %v181 = vld [vmem:[#allocation5 + $0x250] sm:$0xff]
    %v182 = vld [vmem:[#allocation5 + $0x258] sm:$0xff]
    %v183 = vld [vmem:[#allocation5 + $0x260] sm:$0xff]
    %v184 = vld [vmem:[#allocation5 + $0x268] sm:$0xff]
    %v185 = vld [vmem:[#allocation5 + $0x270] sm:$0xff]
    %v186 = vld [vmem:[#allocation5 + $0x278] sm:$0xff]
    %v187 = vld [vmem:[#allocation5 + $0x280] sm:$0xff]
    %v188 = vld [vmem:[#allocation5 + $0x288] sm:$0xff]
    %v189 = vld [vmem:[#allocation5 + $0x290] sm:$0xff]
    %v190 = vld [vmem:[#allocation5 + $0x298] sm:$0xff]
    %v191 = vld [vmem:[#allocation5 + $0x2a0] sm:$0xff]
    %v192 = vld [vmem:[#allocation5 + $0x2a8] sm:$0xff]
    %v193 = vld [vmem:[#allocation5 + $0x2b0] sm:$0xff]
    %v194 = vld [vmem:[#allocation5 + $0x2b8] sm:$0xff]
    %v195 = vld [vmem:[#allocation5 + $0x2c0] sm:$0xff]
    %v196 = vld [vmem:[#allocation5 + $0x2c8] sm:$0xff]
    %v197 = vld [vmem:[#allocation5 + $0x2d0] sm:$0xff]
    %v198 = vld [vmem:[#allocation5 + $0x2d8] sm:$0xff]
    %v199 = vld [vmem:[#allocation5 + $0x2e0] sm:$0xff]
    %v200 = vld [vmem:[#allocation5 + $0x2e8] sm:$0xff]
    %v201 = vld [vmem:[#allocation5 + $0x2f0] sm:$0xff]
    %v202 = vld [vmem:[#allocation5 + $0x2f8] sm:$0xff]
    %v203 = vld [vmem:[#allocation7] sm:$0x3]
    %v205 = vlaneseq
    %v206 = vshrl.u32 %v205, 7
    %v207 = vsub.s32 0, %v206
    %v208 = vrot.slane %v203, %v207
    %v209 = vlaneseq
    %v210 = vshrl.u32 %v209, 7
    %v211 = vsub.s32 1, %v210
    %v212 = vrot.slane %v203, %v211
    %215 = vmatprep.subr.mxu0 %v108
    %216 = vmatpush1.msra.mxu0 %v107
    %217 = vmatprep.subr.mxu0 %v110
    %218 = vmatpush1.msra.mxu0 %v109
    %219 = vmatprep.subr.mxu0 %v112
    %220 = vmatpush1.msra.mxu0 %v111
    %221 = vmatprep.subr.mxu0 %v114
    %222 = vmatpush1.msra.mxu0 %v113
    %223 = vmatprep.subr.mxu0 %v116
    %224 = vmatpush1.msra.mxu0 %v115
    %225 = vmatprep.subr.mxu0 %v118
    %226 = vmatpush1.msra.mxu0 %v117
    %227 = vmatprep.subr.mxu0 %v120
    %228 = vmatpush1.msra.mxu0 %v119
    %229 = vmatprep.subr.mxu0 %v122
    %230 = vmatpush1.msra.mxu0 %v121
    %231 = vmatprep.subr.mxu0 %v124
    %232 = vmatpush1.msra.mxu0 %v123
    %233 = vmatprep.subr.mxu0 %v126
    %234 = vmatpush1.msra.mxu0 %v125
    %235 = vmatprep.subr.mxu0 %v128
    %236 = vmatpush1.msra.mxu0 %v127
    %237 = vmatprep.subr.mxu0 %v130
    %238 = vmatpush1.msra.mxu0 %v129
    %239 = vmatprep.subr.mxu0 %v132
    %240 = vmatpush1.msra.mxu0 %v131
    %241 = vmatprep.subr.mxu0 %v134
    %242 = vmatpush1.msra.mxu0 %v133
    %243 = vmatprep.subr.mxu0 %v136
    %244 = vmatpush1.msra.mxu0 %v135
    %245 = vmatprep.subr.mxu0 %v138
    %246 = vmatpush1.msra.mxu0 %v137
    %247 = vmatprep.subr.mxu0 %v140
    %248 = vmatpush1.msra.mxu0 %v139
    %249 = vmatprep.subr.mxu0 %v142
    %250 = vmatpush1.msra.mxu0 %v141
    %251 = vmatprep.subr.mxu0 %v144
    %252 = vmatpush1.msra.mxu0 %v143
    %253 = vmatprep.subr.mxu0 %v146
    %254 = vmatpush1.msra.mxu0 %v145
    %255 = vmatprep.subr.mxu0 %v148
    %256 = vmatpush1.msra.mxu0 %v147
    %257 = vmatprep.subr.mxu0 %v150
    %258 = vmatpush1.msra.mxu0 %v149
    %259 = vmatprep.subr.mxu0 %v152
    %260 = vmatpush1.msra.mxu0 %v151
    %261 = vmatprep.subr.mxu0 %v154
    %262 = vmatpush1.msra.mxu0 %v153
    %263 = vmatprep.subr.mxu0 %v156
    %264 = vmatpush1.msra.mxu0 %v155
    %265 = vmatprep.subr.mxu0 %v158
    %266 = vmatpush1.msra.mxu0 %v157
    %267 = vmatprep.subr.mxu0 %v160
    %268 = vmatpush1.msra.mxu0 %v159
    %269 = vmatprep.subr.mxu0 %v162
    %270 = vmatpush1.msra.mxu0 %v161
    %271 = vmatprep.subr.mxu0 %v164
    %272 = vmatpush1.msra.mxu0 %v163
    %273 = vmatprep.subr.mxu0 %v166
    %274 = vmatpush1.msra.mxu0 %v165
    %275 = vmatprep.subr.mxu0 %v168
    %276 = vmatpush1.msra.mxu0 %v167
    %277 = vmatprep.subr.mxu0 %v170
    %278 = vmatpush1.msra.mxu0 %v169
    %279 = vmatprep.mubr.f32.mxu0 %v84
    %280 = vmatmul.mubr.f32.gmra.mrb[0].mxu0 %v83
    %v281 = vpop.f32.mrb[0].mxu0
    %v282 = vadd.f32 %v208, %v281
    %v283 = vpop.f32.mrb[0].mxu0
    %v284 = vadd.f32 %v212, %v283
    %285 = vmatprep.mubr.f32.mxu0 %v87
    %286 = vmatmul.mubr.f32.gmra.mrb[0].mxu0 %v86
    %v287 = vpop.f32.mrb[0].mxu0
    %v288 = vadd.f32 %v208, %v287
    %v289 = vpop.f32.mrb[0].mxu0
    %v290 = vadd.f32 %v212, %v289
    %291 = vmatprep.mubr.f32.mxu0 %v90
    %292 = vmatmul.mubr.f32.gmra.mrb[0].mxu0 %v89
    %v293 = vpop.f32.mrb[0].mxu0
    %v294 = vadd.f32 %v208, %v293
    %v295 = vpop.f32.mrb[0].mxu0
    %v296 = vadd.f32 %v212, %v295
    %297 = vmatprep.mubr.f32.mxu0 %v93
    %298 = vmatmul.mubr.f32.gmra.mrb[0].mxu0 %v92
    %v299 = vpop.f32.mrb[0].mxu0
    %v300 = vadd.f32 %v208, %v299
    %v301 = vpop.f32.mrb[0].mxu0
    %v302 = vadd.f32 %v212, %v301
    %303 = vmatprep.mubr.f32.mxu0 %v96
    %304 = vmatmul.mubr.f32.gmra.mrb[0].mxu0 %v95
    %v305 = vpop.f32.mrb[0].mxu0
    %v306 = vadd.f32 %v208, %v305
    %v307 = vpop.f32.mrb[0].mxu0
    %v308 = vadd.f32 %v212, %v307
    %309 = vmatprep.mubr.f32.mxu0 %v99
    %310 = vmatmul.mubr.f32.gmra.mrb[0].mxu0 %v98
    %v311 = vpop.f32.mrb[0].mxu0
    %v312 = vadd.f32 %v208, %v311
    %v313 = vpop.f32.mrb[0].mxu0
    %v314 = vadd.f32 %v212, %v313
    %315 = vmatprep.mubr.f32.mxu0 %v102
    %316 = vmatmul.mubr.f32.gmra.mrb[0].mxu0 %v101
    %v317 = vpop.f32.mrb[0].mxu0
    %v318 = vadd.f32 %v208, %v317
    %v319 = vpop.f32.mrb[0].mxu0
    %v320 = vadd.f32 %v212, %v319
    %321 = vmatprep.mubr.f32.mxu0 %v105
    %322 = vmatmul.mubr.f32.gmra.mrb[0].mxu0 %v104
    %v323 = vpop.f32.mrb[0].mxu0
    %v324 = vadd.f32 %v208, %v323
    %v325 = vpop.f32.mrb[0].mxu0
    %v326 = vadd.f32 %v212, %v325
    %327 = vdwg.mxu0
    %328 = vmatprep.subr.mxu0 %v172
    %329 = vmatpush1.msra.mxu0 %v171
    %330 = vmatprep.subr.mxu0 %v174
    %331 = vmatpush1.msra.mxu0 %v173
    %332 = vmatprep.subr.mxu0 %v176
    %333 = vmatpush1.msra.mxu0 %v175
    %334 = vmatprep.subr.mxu0 %v178
    %335 = vmatpush1.msra.mxu0 %v177
    %336 = vmatprep.subr.mxu0 %v180
    %337 = vmatpush1.msra.mxu0 %v179
    %338 = vmatprep.subr.mxu0 %v182
    %339 = vmatpush1.msra.mxu0 %v181
    %340 = vmatprep.subr.mxu0 %v184
    %341 = vmatpush1.msra.mxu0 %v183
    %342 = vmatprep.subr.mxu0 %v186
    %343 = vmatpush1.msra.mxu0 %v185
    %344 = vmatprep.subr.mxu0 %v188
    %345 = vmatpush1.msra.mxu0 %v187
    %346 = vmatprep.subr.mxu0 %v190
    %347 = vmatpush1.msra.mxu0 %v189
    %348 = vmatprep.subr.mxu0 %v192
    %349 = vmatpush1.msra.mxu0 %v191
    %350 = vmatprep.subr.mxu0 %v194
    %351 = vmatpush1.msra.mxu0 %v193
    %352 = vmatprep.subr.mxu0 %v196
    %353 = vmatpush1.msra.mxu0 %v195
    %354 = vmatprep.subr.mxu0 %v198
    %355 = vmatpush1.msra.mxu0 %v197
    %356 = vmatprep.subr.mxu0 %v200
    %357 = vmatpush1.msra.mxu0 %v199
    %358 = vmatprep.subr.mxu0 %v202
    %359 = vmatpush1.msra.mxu0 %v201
    %360 = vmatprep.subr.mxu0 0.0
    %361 = vmatpush1.msra.mxu0 0.0
    %362 = vmatprep.subr.mxu0 0.0
    %363 = vmatpush1.msra.mxu0 0.0
    %364 = vmatprep.subr.mxu0 0.0
    %365 = vmatpush1.msra.mxu0 0.0
    %366 = vmatprep.subr.mxu0 0.0
    %367 = vmatpush1.msra.mxu0 0.0
    %368 = vmatprep.subr.mxu0 0.0
    %369 = vmatpush1.msra.mxu0 0.0
    %370 = vmatprep.subr.mxu0 0.0
    %371 = vmatpush1.msra.mxu0 0.0
    %372 = vmatprep.subr.mxu0 0.0
    %373 = vmatpush1.msra.mxu0 0.0
    %374 = vmatprep.subr.mxu0 0.0
    %375 = vmatpush1.msra.mxu0 0.0
    %376 = vmatprep.subr.mxu0 0.0
    %377 = vmatpush1.msra.mxu0 0.0
    %378 = vmatprep.subr.mxu0 0.0
    %379 = vmatpush1.msra.mxu0 0.0
    %380 = vmatprep.subr.mxu0 0.0
    %381 = vmatpush1.msra.mxu0 0.0
    %382 = vmatprep.subr.mxu0 0.0
    %383 = vmatpush1.msra.mxu0 0.0
    %384 = vmatprep.subr.mxu0 0.0
    %385 = vmatpush1.msra.mxu0 0.0
    %386 = vmatprep.subr.mxu0 0.0
    %387 = vmatpush1.msra.mxu0 0.0
    %388 = vmatprep.subr.mxu0 0.0
    %389 = vmatpush1.msra.mxu0 0.0
    %390 = vmatprep.subr.mxu0 0.0
    %391 = vmatpush1.msra.mxu0 0.0
    %392 = vmatprep.mubr.f32.mxu0 0.0
    %393 = vmatmul.mubr.f32.gmra.mrb[0].mxu0 %v85
    %v394 = vpop.f32.mrb[0].mxu0
    %v395 = vadd.f32 %v282, %v394
    %v396 = vpop.f32.mrb[0].mxu0
    %v397 = vadd.f32 %v284, %v396
    %398 = vmatprep.mubr.f32.mxu0 0.0
    %399 = vmatmul.mubr.f32.gmra.mrb[0].mxu0 %v88
    %v400 = vpop.f32.mrb[0].mxu0
    %v401 = vadd.f32 %v288, %v400
    %v402 = vpop.f32.mrb[0].mxu0
    %v403 = vadd.f32 %v290, %v402
    %404 = vmatprep.mubr.f32.mxu0 0.0
    %405 = vmatmul.mubr.f32.gmra.mrb[0].mxu0 %v91
    %v406 = vpop.f32.mrb[0].mxu0
    %v407 = vadd.f32 %v294, %v406
    %v408 = vpop.f32.mrb[0].mxu0
    %v409 = vadd.f32 %v296, %v408
    %410 = vmatprep.mubr.f32.mxu0 0.0
    %411 = vmatmul.mubr.f32.gmra.mrb[0].mxu0 %v94
    %v412 = vpop.f32.mrb[0].mxu0
    %v413 = vadd.f32 %v300, %v412
    %v414 = vpop.f32.mrb[0].mxu0
    %v415 = vadd.f32 %v302, %v414
    %416 = vmatprep.mubr.f32.mxu0 0.0
    %417 = vmatmul.mubr.f32.gmra.mrb[0].mxu0 %v97
    %v418 = vpop.f32.mrb[0].mxu0
    %v419 = vadd.f32 %v306, %v418
    %v420 = vpop.f32.mrb[0].mxu0
    %v421 = vadd.f32 %v308, %v420
    %422 = vmatprep.mubr.f32.mxu0 0.0
    %423 = vmatmul.mubr.f32.gmra.mrb[0].mxu0 %v100
    %v424 = vpop.f32.mrb[0].mxu0
    %v425 = vadd.f32 %v312, %v424
    %v426 = vpop.f32.mrb[0].mxu0
    %v427 = vadd.f32 %v314, %v426
    %428 = vmatprep.mubr.f32.mxu0 0.0
    %429 = vmatmul.mubr.f32.gmra.mrb[0].mxu0 %v103
    %v430 = vpop.f32.mrb[0].mxu0
    %v431 = vadd.f32 %v318, %v430
    %v432 = vpop.f32.mrb[0].mxu0
    %v433 = vadd.f32 %v320, %v432
    %434 = vmatprep.mubr.f32.mxu0 0.0
    %435 = vmatmul.mubr.f32.gmra.mrb[0].mxu0 %v106
    %v436 = vpop.f32.mrb[0].mxu0
    %v437 = vadd.f32 %v324, %v436
    %v438 = vpop.f32.mrb[0].mxu0
    %v439 = vadd.f32 %v326, %v438
    %440 = vdwg.mxu0
    %v441 = vmax.f32 %v395, 0.0
    %v442 = vmax.f32 %v397, 0.0
    %v443 = vmax.f32 %v401, 0.0
    %v444 = vmax.f32 %v403, 0.0
    %v445 = vmax.f32 %v407, 0.0
    %v446 = vmax.f32 %v409, 0.0
    %v447 = vmax.f32 %v413, 0.0
    %v448 = vmax.f32 %v415, 0.0
    %v449 = vmax.f32 %v419, 0.0
    %v450 = vmax.f32 %v421, 0.0
    %v451 = vmax.f32 %v425, 0.0
    %v452 = vmax.f32 %v427, 0.0
    %v453 = vmax.f32 %v431, 0.0
    %v454 = vmax.f32 %v433, 0.0
    %v455 = vmax.f32 %v437, 0.0
    %v456 = vmax.f32 %v439, 0.0
    %v457 = vadd.f32 %v441, %v442
    %458 = vadd.xlane.f32.xlu0 %v457
    %v459 = vpop.xlane.xlu0 %458
    %v460 = vadd.f32 %v443, %v444
    %461 = vadd.xlane.f32.xlu0 %v460
    %v462 = vpop.xlane.xlu0 %461
    %v463 = vadd.f32 %v445, %v446
    %464 = vadd.xlane.f32.xlu0 %v463
    %v465 = vpop.xlane.xlu0 %464
    %v466 = vadd.f32 %v447, %v448
    %467 = vadd.xlane.f32.xlu0 %v466
    %v468 = vpop.xlane.xlu0 %467
    %v469 = vadd.f32 %v449, %v450
    %470 = vadd.xlane.f32.xlu0 %v469
    %v471 = vpop.xlane.xlu0 %470
    %v472 = vadd.f32 %v451, %v452
    %473 = vadd.xlane.f32.xlu0 %v472
    %v474 = vpop.xlane.xlu0 %473
    %v475 = vadd.f32 %v453, %v454
    %476 = vadd.xlane.f32.xlu0 %v475
    %v477 = vpop.xlane.xlu0 %476
    %v478 = vadd.f32 %v455, %v456
    %479 = vadd.xlane.f32.xlu0 %v478
    %v480 = vpop.xlane.xlu0 %479
    %v481 = vrcp.pop 256.0
    %v482 = vmul.f32 %v459, %v481
    %v483 = vmul.f32 %v462, %v481
    %v484 = vmul.f32 %v465, %v481
    %v485 = vmul.f32 %v468, %v481
    %v486 = vmul.f32 %v471, %v481
    %v487 = vmul.f32 %v474, %v481
    %v488 = vmul.f32 %v477, %v481
    %v489 = vmul.f32 %v480, %v481
    %v490 = vmul.f32 %v441, %v441
    %v491 = vmul.f32 %v442, %v442
    %v492 = vmul.f32 %v443, %v443
    %v493 = vmul.f32 %v444, %v444
    %v494 = vmul.f32 %v445, %v445
    %v495 = vmul.f32 %v446, %v446
    %v496 = vmul.f32 %v447, %v447
    %v497 = vmul.f32 %v448, %v448
    %v498 = vmul.f32 %v449, %v449
    %v499 = vmul.f32 %v450, %v450
    %v500 = vmul.f32 %v451, %v451
    %v501 = vmul.f32 %v452, %v452
    %v502 = vmul.f32 %v453, %v453
    %v503 = vmul.f32 %v454, %v454
    %v504 = vmul.f32 %v455, %v455
    %v505 = vmul.f32 %v456, %v456
    %v506 = vadd.f32 %v490, %v491
    %507 = vadd.xlane.f32.xlu0 %v506
    %v508 = vpop.xlane.xlu0 %507
    %v509 = vadd.f32 %v492, %v493
    %510 = vadd.xlane.f32.xlu0 %v509
    %v511 = vpop.xlane.xlu0 %510
    %v512 = vadd.f32 %v494, %v495
    %513 = vadd.xlane.f32.xlu0 %v512
    %v514 = vpop.xlane.xlu0 %513
    %v515 = vadd.f32 %v496, %v497
    %516 = vadd.xlane.f32.xlu0 %v515
    %v517 = vpop.xlane.xlu0 %516
    %v518 = vadd.f32 %v498, %v499
    %519 = vadd.xlane.f32.xlu0 %v518
    %v520 = vpop.xlane.xlu0 %519
    %v521 = vadd.f32 %v500, %v501
    %522 = vadd.xlane.f32.xlu0 %v521
    %v523 = vpop.xlane.xlu0 %522
    %v524 = vadd.f32 %v502, %v503
    %525 = vadd.xlane.f32.xlu0 %v524
    %v526 = vpop.xlane.xlu0 %525
    %v527 = vadd.f32 %v504, %v505
    %528 = vadd.xlane.f32.xlu0 %v527
    %v529 = vpop.xlane.xlu0 %528
    %v530 = vmul.f32 %v508, %v481
    %v531 = vmul.f32 %v511, %v481
    %v532 = vmul.f32 %v514, %v481
    %v533 = vmul.f32 %v517, %v481
    %v534 = vmul.f32 %v520, %v481
    %v535 = vmul.f32 %v523, %v481
    %v536 = vmul.f32 %v526, %v481
    %v537 = vmul.f32 %v529, %v481
    %v538 = vmul.f32 %v482, %v482
    %v539 = vmul.f32 %v483, %v483
    %v540 = vmul.f32 %v484, %v484
    %v541 = vmul.f32 %v485, %v485
    %v542 = vmul.f32 %v486, %v486
    %v543 = vmul.f32 %v487, %v487
    %v544 = vmul.f32 %v488, %v488
    %v545 = vmul.f32 %v489, %v489
    %v546 = vsub.f32 %v530, %v538
    %v547 = vsub.f32 %v531, %v539
    %v548 = vsub.f32 %v532, %v540
    %v549 = vsub.f32 %v533, %v541
    %v550 = vsub.f32 %v534, %v542
    %v551 = vsub.f32 %v535, %v543
    %v552 = vsub.f32 %v536, %v544
    %v553 = vsub.f32 %v537, %v545
    %v554 = vsub.f32 %v441, %v482
    %v555 = vsub.f32 %v442, %v482
    %v556 = vsub.f32 %v443, %v483
    %v557 = vsub.f32 %v444, %v483
    %v558 = vsub.f32 %v445, %v484
    %v559 = vsub.f32 %v446, %v484
    %v560 = vsub.f32 %v447, %v485
    %v561 = vsub.f32 %v448, %v485
    %v562 = vsub.f32 %v449, %v486
    %v563 = vsub.f32 %v450, %v486
    %v564 = vsub.f32 %v451, %v487
    %v565 = vsub.f32 %v452, %v487
    %v566 = vsub.f32 %v453, %v488
    %v567 = vsub.f32 %v454, %v488
    %v568 = vsub.f32 %v455, %v489
    %v569 = vsub.f32 %v456, %v489
    %v570 = vadd.f32 %v546, 1e-05
    %v571 = vadd.f32 %v547, 1e-05
    %v572 = vadd.f32 %v548, 1e-05
    %v573 = vadd.f32 %v549, 1e-05
    %v574 = vadd.f32 %v550, 1e-05
    %v575 = vadd.f32 %v551, 1e-05
    %v576 = vadd.f32 %v552, 1e-05
    %v577 = vadd.f32 %v553, 1e-05
    %v578 = vrsqrt.pop %v570
    %v579 = vrsqrt.pop %v571
    %v580 = vrsqrt.pop %v572
    %v581 = vrsqrt.pop %v573
    %v582 = vrsqrt.pop %v574
    %v583 = vrsqrt.pop %v575
    %v584 = vrsqrt.pop %v576
    %v585 = vrsqrt.pop %v577
    %v586 = vmul.f32 %v554, %v578
    %v587 = vmul.f32 %v555, %v578
    %v588 = vmul.f32 %v556, %v579
    %v589 = vmul.f32 %v557, %v579
    %v590 = vmul.f32 %v558, %v580
    %v591 = vmul.f32 %v559, %v580
    %v592 = vmul.f32 %v560, %v581
    %v593 = vmul.f32 %v561, %v581
    %v594 = vmul.f32 %v562, %v582
    %v595 = vmul.f32 %v563, %v582
    %v596 = vmul.f32 %v564, %v583
    %v597 = vmul.f32 %v565, %v583
    %v598 = vmul.f32 %v566, %v584
    %v599 = vmul.f32 %v567, %v584
    %v600 = vmul.f32 %v568, %v585
    %v601 = vmul.f32 %v569, %v585
    %v602 = vld [vmem:[#allocation8] sm:$0x3]
    %v604 = vlaneseq
    %v605 = vshrl.u32 %v604, 7
    %v606 = vsub.s32 0, %v605
    %v607 = vrot.slane %v602, %v606
    %v608 = vlaneseq
    %v609 = vshrl.u32 %v608, 7
    %v610 = vsub.s32 1, %v609
    %v611 = vrot.slane %v602, %v610
    %v614 = vmul.f32 %v586, %v607
    %v615 = vmul.f32 %v587, %v611
    %v616 = vmul.f32 %v588, %v607
    %v617 = vmul.f32 %v589, %v611
    %v618 = vmul.f32 %v590, %v607
    %v619 = vmul.f32 %v591, %v611
    %v620 = vmul.f32 %v592, %v607
    %v621 = vmul.f32 %v593, %v611
    %v622 = vmul.f32 %v594, %v607
    %v623 = vmul.f32 %v595, %v611
    %v624 = vmul.f32 %v596, %v607
    %v625 = vmul.f32 %v597, %v611
    %v626 = vmul.f32 %v598, %v607
    %v627 = vmul.f32 %v599, %v611
    %v628 = vmul.f32 %v600, %v607
    %v629 = vmul.f32 %v601, %v611
    %v630 = vld [vmem:[#allocation10] sm:$0x3]
    %v632 = vlaneseq
    %v633 = vshrl.u32 %v632, 7
    %v634 = vsub.s32 0, %v633
    %v635 = vrot.slane %v630, %v634
    %v636 = vlaneseq
    %v637 = vshrl.u32 %v636, 7
    %v638 = vsub.s32 1, %v637
    %v639 = vrot.slane %v630, %v638
    %v642 = vadd.f32 %v614, %v635
    %v643 = vadd.f32 %v615, %v639
    %v644 = vadd.f32 %v616, %v635
    %v645 = vadd.f32 %v617, %v639
    %v646 = vadd.f32 %v618, %v635
    %v647 = vadd.f32 %v619, %v639
    %v648 = vadd.f32 %v620, %v635
    %v649 = vadd.f32 %v621, %v639
    %v650 = vadd.f32 %v622, %v635
    %v651 = vadd.f32 %v623, %v639
    %v652 = vadd.f32 %v624, %v635
    %v653 = vadd.f32 %v625, %v639
    %v654 = vadd.f32 %v626, %v635
    %v655 = vadd.f32 %v627, %v639
    %v656 = vadd.f32 %v628, %v635
    %v657 = vadd.f32 %v629, %v639
    %658 = vst [vmem:[#allocation11] sm:$0xff] %v642
    %659 = vst [vmem:[#allocation11 + $0x8] sm:$0xff] %v643
    %660 = vst [vmem:[#allocation11 + $0x10] sm:$0xff] %v644
    %661 = vst [vmem:[#allocation11 + $0x18] sm:$0xff] %v645
    %662 = vst [vmem:[#allocation11 + $0x20] sm:$0xff] %v646
    %663 = vst [vmem:[#allocation11 + $0x28] sm:$0xff] %v647
    %664 = vst [vmem:[#allocation11 + $0x30] sm:$0xff] %v648
    %665 = vst [vmem:[#allocation11 + $0x38] sm:$0xff] %v649
    %666 = vst [vmem:[#allocation11 + $0x40] sm:$0xff] %v650
    %667 = vst [vmem:[#allocation11 + $0x48] sm:$0xff] %v651
    %668 = vst [vmem:[#allocation11 + $0x50] sm:$0xff] %v652
    %669 = vst [vmem:[#allocation11 + $0x58] sm:$0xff] %v653
    %670 = vst [vmem:[#allocation11 + $0x60] sm:$0xff] %v654
    %671 = vst [vmem:[#allocation11 + $0x68] sm:$0xff] %v655
    %672 = vst [vmem:[#allocation11 + $0x70] sm:$0xff] %v656
    %673 = vst [vmem:[#allocation11 + $0x78] sm:$0xff] %v657
    // Predicated region
    $region42: #{gan_module_forward.4} parent=1 // pred_check
      _
    $region43: #{gan_module_forward.4} parent=1 // pred_check_branch
      %675 = sbr.rel (0) target = $region45
    $region44: #{gan_module_forward.4} parent=1 // pred_region
      %s677 = ssub.s32 2048, 2048
      %678 = vsyncadd [#allocation4], %s677
      %s679 = sshll.u32 [#allocation11], 4
      %s680 = int_to_ptr.vmem [resolvable:$true] %s679
      %685 = dma.vmem_to_hbm [thread:$0]  %s680, 2048, %s5, [#allocation4], 256, 256, 16
    $region45: #{gan_module_forward.4} parent=1 // pred_fallthru
      _
    // Predicated region
    $region46: #{gan_module_forward.4} parent=1 // pred_check
      _
    $region47: #{gan_module_forward.4} parent=1 // pred_check_branch
      %687 = sbr.rel (0) target = $region49
    $region48: #{gan_module_forward.4} parent=1 // pred_region
      %688 = dma.done [#allocation4], 2048
    $region49: #{gan_module_forward.4} parent=1 // pred_fallthru
      _
    %689 = vsyncpa [#allocation3], 1
    %690 = vsyncpa [#allocation6], 1
    %691 = vsyncpa [#allocation9], 1
    %692 = vsyncpa [#allocation4], 1

// kernel: gan_module_forward.5
$region0: #{gan_module_forward.5}
  #allocation0 [shape = 'u32[]', space=smem, size = 0x4, offset = 0x4, fixed_abs, tag = 'smem constant byte address 0x4 - core index']
  #allocation1 [shape = 'u32[144,128]{1,0:T(1,128)}', space=vmem, size = 0x12000, scoped, tag = 'internal scratch']
  #allocation2 [shape = 'f32[8,16]{1,0:T(8,128)}', space=vmem, size = 0x1000, scoped, tag = 'scratch operand']
  #allocation3 [shape = 'f32[8,16]{1,0:T(8,128)}', space=vmem, size = 0x1000, scoped, tag = 'scratch operand']
  #allocation4 [shape = 'f32[1,16]{1,0:T(1,128)}', space=vmem, size = 0x200, scoped, tag = 'scratch operand']
  #allocation5 [shape = 'f32[16,256]{1,0:T(8,128)}', space=vmem, size = 0x4000, scoped, tag = 'scratch operand']
  %s0 = inlined_call_operand.hbm [shape: f32[2,32,512], index: 0, kind: input, shape index: {}]
  %s1 = inlined_call_operand.hbm [shape: f32[2,32,256], index: 1, kind: input, shape index: {}]
  %s2 = inlined_call_operand.hbm [shape: s32[2,32,1], index: 2, kind: input, shape index: {}]
  %s3 = inlined_call_operand.hbm [shape: f32[256,8], index: 3, kind: input, shape index: {}]
  %s4 = inlined_call_operand.hbm [shape: f32[8,256], index: 4, kind: input, shape index: {}]
  %s5 = inlined_call_operand.hbm [shape: f32[256,256], index: 5, kind: input, shape index: {}]
  %s6 = inlined_call_operand.hbm [shape: f32[1,256], index: 6, kind: input, shape index: {}]
  %s7 = inlined_call_operand.hbm [shape: f32[1,256], index: 7, kind: input, shape index: {}]
  %s8 = inlined_call_operand.hbm [shape: f32[1,256], index: 8, kind: input, shape index: {}]
  %s9 = inlined_call_operand.hbm [shape: f32[2,16,256], index: 9, kind: input, shape index: {}]
  %s10 = inlined_call_operand.hbm [shape: f32[2,16,256], index: 10, kind: output, shape index: {}]
  %s11 = sld [smem:[#allocation0]]
  $region121: #{gan_module_forward.5} parent=0
    _
  %s13 = ssub.s32 1, %s11
  %s14 = scalar_select 0, %s13, %s11
  $region1: #{gan_module_forward.5} parent=0
    #allocation6 [shape = 'u8[131072]{0}', space=vmem, size = 0x20000, scoped, tag = 'input window, operand 0']
    #allocation7 [shape = 's32[2]{0}', space=sflag, size = 0x8, scoped, tag = 'scoped memory for gan_module_forward.5']
    #allocation8 [shape = 's32[2]{0}', space=sflag, size = 0x8, scoped, tag = 'scoped memory for gan_module_forward.5']
    #allocation9 [shape = 'u8[65536]{0}', space=vmem, size = 0x10000, scoped, tag = 'input window, operand 1']
    #allocation10 [shape = 's32[2]{0}', space=sflag, size = 0x8, scoped, tag = 'scoped memory for gan_module_forward.5']
    #allocation11 [shape = 'u8[32768]{0}', space=vmem, size = 0x8000, scoped, tag = 'input window, operand 2']
    #allocation12 [shape = 'u8[131072]{0}', space=vmem, size = 0x20000, scoped, tag = 'input window, operand 3, single buffered']
    #allocation13 [shape = 's32[1]{0}', space=sflag, size = 0x4, scoped, tag = 'scoped memory for gan_module_forward.5']
    #allocation14 [shape = 'u8[8192]{0}', space=vmem, size = 0x2000, scoped, tag = 'input window, operand 4, single buffered']
    #allocation15 [shape = 'u8[262144]{0}', space=vmem, size = 0x40000, scoped, tag = 'input window, operand 5, single buffered']
    #allocation16 [shape = 's32[1]{0}', space=sflag, size = 0x4, scoped, tag = 'scoped memory for gan_module_forward.5']
    #allocation17 [shape = 'u8[1024]{0}', space=vmem, size = 0x400, scoped, tag = 'input window, operand 6, single buffered']
    #allocation18 [shape = 'u8[1024]{0}', space=vmem, size = 0x400, scoped, tag = 'input window, operand 7, single buffered']
    #allocation19 [shape = 's32[1]{0}', space=sflag, size = 0x4, scoped, tag = 'scoped memory for gan_module_forward.5']
    #allocation20 [shape = 'u8[1024]{0}', space=vmem, size = 0x400, scoped, tag = 'input window, operand 8, single buffered']
    #allocation21 [shape = 'u8[32768]{0}', space=vmem, size = 0x8000, scoped, tag = 'input window, operand 9']
    #allocation22 [shape = 's32[2]{0}', space=sflag, size = 0x8, scoped, tag = 'scoped memory for gan_module_forward.5']
    #allocation23 [shape = 'u8[32768]{0}', space=vmem, size = 0x8000, scoped, tag = 'output window, operand 0']
    %15 = vsyncpa [#allocation7], 0
    %s16 = scalar_lea.sflag [#allocation7], 1
    %17 = vsyncpa %s16, 0
    %18 = vsyncpa [#allocation10], 0
    %s19 = scalar_lea.sflag [#allocation10], 1
    %20 = vsyncpa %s19, 0
    %21 = vsyncpa [#allocation13], 0
    %22 = vsyncpa [#allocation16], 0
    %23 = vsyncpa [#allocation19], 0
    %24 = vsyncpa [#allocation22], 0
    %s25 = scalar_lea.sflag [#allocation22], 1
    %26 = vsyncpa %s25, 0
    %27 = vsyncpa [#allocation8], 0
    %s28 = scalar_lea.sflag [#allocation8], 1
    %29 = vsyncpa %s28, 0
    loop: start=0, step=1, limit=4
    $region2: #{gan_module_forward.5} parent=1 // loop_pre_header
      _
    $region3: #{gan_module_forward.5} parent=1 // loop_header
      %s31 = sphi 0, %s35
      %p32 = scmp.ge.s32.totalorder %s31, 4
      %s38 = sphi 0, %s50
      %s39 = sphi 0, %s46
      %s40 = sphi 0, %s38
      %s41 = sphi 0, %s39
      %s42 = sphi 0, %s40
      %s43 = sphi 0, %s41
      %s55 = sphi 0, %s57
      %s58 = sphi 0, %s55
      %s59 = sphi 0, %s58
      %s75 = sphi 0, %s59
      %s83 = sphi 0, %s85
      %s86 = sphi 0, %s83
      %s87 = sphi 0, %s86
      %s103 = sphi 0, %s87
      %s111 = sphi 0, %s113
      %s114 = sphi 0, %s111
      %s115 = sphi 0, %s114
      %s131 = sphi 0, %s115
      %s135 = sphi 0, %s135
      %s137 = sphi 0, %s135
      %s138 = sphi 0, %s137
      %s152 = sphi 0, %s138
      %s156 = sphi 0, %s156
      %s158 = sphi 0, %s156
      %s159 = sphi 0, %s158
      %s173 = sphi 0, %s159
      %s177 = sphi 0, %s177
      %s179 = sphi 0, %s177
      %s180 = sphi 0, %s179
      %s194 = sphi 0, %s180
      %s198 = sphi 0, %s198
      %s200 = sphi 0, %s198
      %s201 = sphi 0, %s200
      %s215 = sphi 0, %s201
      %s219 = sphi 0, %s219
      %s221 = sphi 0, %s219
      %s222 = sphi 0, %s221
      %s236 = sphi 0, %s222
      %s240 = sphi 0, %s240
      %s242 = sphi 0, %s240
      %s243 = sphi 0, %s242
      %s257 = sphi 0, %s243
      %s263 = sphi 0, %s265
      %s266 = sphi 0, %s263
      %s267 = sphi 0, %s266
      %s283 = sphi 0, %s267
      %s289 = sphi 0, %s291
      %s292 = sphi 0, %s289
      %s293 = sphi 0, %s292
      %s309 = sphi 0, %s293
    $region4: #{gan_module_forward.5} parent=1 // loop_header_branch
      %34 = sbr.rel (%p32) target = $region8
    $region5: #{gan_module_forward.5} parent=1 // loop_body
      %s36 = ssub.s32 %s31, 1
      %s37 = ssub.s32 %s31, 2
      %s44 = sadd.s32 1, %s39
      %p45 = scmp.ge.s32.totalorder %s44, 1
      %s46 = scalar_select %p45, 0, %s44
      %s47 = sadd.s32 1, %s38
      %s48 = scalar_select %p45, %s47, %s38
      %p49 = scmp.ge.s32.totalorder %s48, 2
      %s50 = scalar_select %p49, 0, %s48
      %s51 = ssub.s32 %s38, %s50
      %s52 = ssub.s32 %s39, %s46
      %s53 = sor.u32 %s51, %s52
      %p54 = scmp.eq.s32.totalorder %s53, 0
      %s56 = sadd.s32 %s55, 1
      %s57 = scalar_select %p54, %s55, %s56
      %p60 = pneg %p54
      %p61 = scmp.eq.s32.totalorder %s31, 1
      %p62 = por %p60, %p61
      %p63 = scmp.ne.s32.totalorder %s55, %s58
      %p64 = scmp.eq.s32.totalorder %s31, 0
      %p65 = por %p63, %p64
      %p66 = scmp.ne.s32.totalorder %s55, %s58
      %p67 = scmp.eq.s32.totalorder %s36, 1
      %p68 = por %p66, %p67
      %p69 = scmp.ne.s32.totalorder %s58, %s59
      %p70 = scmp.eq.s32.totalorder %s36, 0
      %p71 = por %p69, %p70
      %p72 = scmp.ne.s32.totalorder %s58, %s59
      %p73 = scmp.eq.s32.totalorder %s37, 1
      %p74 = por %p72, %p73
      %p76 = scmp.ne.s32.totalorder %s59, %s75
      %p77 = scmp.eq.s32.totalorder %s37, 0
      %p78 = por %p76, %p77
      %s79 = ssub.s32 %s38, %s50
      %s80 = ssub.s32 %s39, %s46
      %s81 = sor.u32 %s79, %s80
      %p82 = scmp.eq.s32.totalorder %s81, 0
      %s84 = sadd.s32 %s83, 1
      %s85 = scalar_select %p82, %s83, %s84
      %p88 = pneg %p82
      %p89 = scmp.eq.s32.totalorder %s31, 1
      %p90 = por %p88, %p89
      %p91 = scmp.ne.s32.totalorder %s83, %s86
      %p92 = scmp.eq.s32.totalorder %s31, 0
      %p93 = por %p91, %p92
      %p94 = scmp.ne.s32.totalorder %s83, %s86
      %p95 = scmp.eq.s32.totalorder %s36, 1
      %p96 = por %p94, %p95
      %p97 = scmp.ne.s32.totalorder %s86, %s87
      %p98 = scmp.eq.s32.totalorder %s36, 0
      %p99 = por %p97, %p98
      %p100 = scmp.ne.s32.totalorder %s86, %s87
      %p101 = scmp.eq.s32.totalorder %s37, 1
      %p102 = por %p100, %p101
      %p104 = scmp.ne.s32.totalorder %s87, %s103
      %p105 = scmp.eq.s32.totalorder %s37, 0
      %p106 = por %p104, %p105
      %s107 = ssub.s32 %s38, %s50
      %s108 = ssub.s32 %s39, %s46
      %s109 = sor.u32 %s107, %s108
      %p110 = scmp.eq.s32.totalorder %s109, 0
      %s112 = sadd.s32 %s111, 1
      %s113 = scalar_select %p110, %s111, %s112
      %p116 = pneg %p110
      %p117 = scmp.eq.s32.totalorder %s31, 1
      %p118 = por %p116, %p117
      %p119 = scmp.ne.s32.totalorder %s111, %s114
      %p120 = scmp.eq.s32.totalorder %s31, 0
      %p121 = por %p119, %p120
      %p122 = scmp.ne.s32.totalorder %s111, %s114
      %p123 = scmp.eq.s32.totalorder %s36, 1
      %p124 = por %p122, %p123
      %p125 = scmp.ne.s32.totalorder %s114, %s115
      %p126 = scmp.eq.s32.totalorder %s36, 0
      %p127 = por %p125, %p126
      %p128 = scmp.ne.s32.totalorder %s114, %s115
      %p129 = scmp.eq.s32.totalorder %s37, 1
      %p130 = por %p128, %p129
      %p132 = scmp.ne.s32.totalorder %s115, %s131
      %p133 = scmp.eq.s32.totalorder %s37, 0
      %p134 = por %p132, %p133
      %s136 = sadd.s32 %s135, 1
      %p139 = scmp.eq.s32.totalorder %s31, 1
      %p140 = scmp.ne.s32.totalorder %s135, %s137
      %p141 = scmp.eq.s32.totalorder %s31, 0
      %p142 = por %p140, %p141
      %p143 = scmp.ne.s32.totalorder %s135, %s137
      %p144 = scmp.eq.s32.totalorder %s36, 1
      %p145 = por %p143, %p144
      %p146 = scmp.ne.s32.totalorder %s137, %s138
      %p147 = scmp.eq.s32.totalorder %s36, 0
      %p148 = por %p146, %p147
      %p149 = scmp.ne.s32.totalorder %s137, %s138
      %p150 = scmp.eq.s32.totalorder %s37, 1
      %p151 = por %p149, %p150
      %p153 = scmp.ne.s32.totalorder %s138, %s152
      %p154 = scmp.eq.s32.totalorder %s37, 0
      %p155 = por %p153, %p154
      %s157 = sadd.s32 %s156, 1
      %p160 = scmp.eq.s32.totalorder %s31, 1
      %p161 = scmp.ne.s32.totalorder %s156, %s158
      %p162 = scmp.eq.s32.totalorder %s31, 0
      %p163 = por %p161, %p162
      %p164 = scmp.ne.s32.totalorder %s156, %s158
      %p165 = scmp.eq.s32.totalorder %s36, 1
      %p166 = por %p164, %p165
      %p167 = scmp.ne.s32.totalorder %s158, %s159
      %p168 = scmp.eq.s32.totalorder %s36, 0
      %p169 = por %p167, %p168
      %p170 = scmp.ne.s32.totalorder %s158, %s159
      %p171 = scmp.eq.s32.totalorder %s37, 1
      %p172 = por %p170, %p171
      %p174 = scmp.ne.s32.totalorder %s159, %s173
      %p175 = scmp.eq.s32.totalorder %s37, 0
      %p176 = por %p174, %p175
      %s178 = sadd.s32 %s177, 1
      %p181 = scmp.eq.s32.totalorder %s31, 1
      %p182 = scmp.ne.s32.totalorder %s177, %s179
      %p183 = scmp.eq.s32.totalorder %s31, 0
      %p184 = por %p182, %p183
      %p185 = scmp.ne.s32.totalorder %s177, %s179
      %p186 = scmp.eq.s32.totalorder %s36, 1
      %p187 = por %p185, %p186
      %p188 = scmp.ne.s32.totalorder %s179, %s180
      %p189 = scmp.eq.s32.totalorder %s36, 0
      %p190 = por %p188, %p189
      %p191 = scmp.ne.s32.totalorder %s179, %s180
      %p192 = scmp.eq.s32.totalorder %s37, 1
      %p193 = por %p191, %p192
      %p195 = scmp.ne.s32.totalorder %s180, %s194
      %p196 = scmp.eq.s32.totalorder %s37, 0
      %p197 = por %p195, %p196
      %s199 = sadd.s32 %s198, 1
      %p202 = scmp.eq.s32.totalorder %s31, 1
      %p203 = scmp.ne.s32.totalorder %s198, %s200
      %p204 = scmp.eq.s32.totalorder %s31, 0
      %p205 = por %p203, %p204
      %p206 = scmp.ne.s32.totalorder %s198, %s200
      %p207 = scmp.eq.s32.totalorder %s36, 1
      %p208 = por %p206, %p207
      %p209 = scmp.ne.s32.totalorder %s200, %s201
      %p210 = scmp.eq.s32.totalorder %s36, 0
      %p211 = por %p209, %p210
      %p212 = scmp.ne.s32.totalorder %s200, %s201
      %p213 = scmp.eq.s32.totalorder %s37, 1
      %p214 = por %p212, %p213
      %p216 = scmp.ne.s32.totalorder %s201, %s215
      %p217 = scmp.eq.s32.totalorder %s37, 0
      %p218 = por %p216, %p217
      %s220 = sadd.s32 %s219, 1
      %p223 = scmp.eq.s32.totalorder %s31, 1
      %p224 = scmp.ne.s32.totalorder %s219, %s221
      %p225 = scmp.eq.s32.totalorder %s31, 0
      %p226 = por %p224, %p225
      %p227 = scmp.ne.s32.totalorder %s219, %s221
      %p228 = scmp.eq.s32.totalorder %s36, 1
      %p229 = por %p227, %p228
      %p230 = scmp.ne.s32.totalorder %s221, %s222
      %p231 = scmp.eq.s32.totalorder %s36, 0
      %p232 = por %p230, %p231
      %p233 = scmp.ne.s32.totalorder %s221, %s222
      %p234 = scmp.eq.s32.totalorder %s37, 1
      %p235 = por %p233, %p234
      %p237 = scmp.ne.s32.totalorder %s222, %s236
      %p238 = scmp.eq.s32.totalorder %s37, 0
      %p239 = por %p237, %p238
      %s241 = sadd.s32 %s240, 1
      %p244 = scmp.eq.s32.totalorder %s31, 1
      %p245 = scmp.ne.s32.totalorder %s240, %s242
      %p246 = scmp.eq.s32.totalorder %s31, 0
      %p247 = por %p245, %p246
      %p248 = scmp.ne.s32.totalorder %s240, %s242
      %p249 = scmp.eq.s32.totalorder %s36, 1
      %p250 = por %p248, %p249
      %p251 = scmp.ne.s32.totalorder %s242, %s243
      %p252 = scmp.eq.s32.totalorder %s36, 0
      %p253 = por %p251, %p252
      %p254 = scmp.ne.s32.totalorder %s242, %s243
      %p255 = scmp.eq.s32.totalorder %s37, 1
      %p256 = por %p254, %p255
      %p258 = scmp.ne.s32.totalorder %s243, %s257
      %p259 = scmp.eq.s32.totalorder %s37, 0
      %p260 = por %p258, %p259
      %s261 = ssub.s32 %s38, %s50
      %p262 = scmp.eq.s32.totalorder %s261, 0
      %s264 = sadd.s32 %s263, 1
      %s265 = scalar_select %p262, %s263, %s264
      %p268 = pneg %p262
      %p269 = scmp.eq.s32.totalorder %s31, 1
      %p270 = por %p268, %p269
      %p271 = scmp.ne.s32.totalorder %s263, %s266
      %p272 = scmp.eq.s32.totalorder %s31, 0
      %p273 = por %p271, %p272
      %p274 = scmp.ne.s32.totalorder %s263, %s266
      %p275 = scmp.eq.s32.totalorder %s36, 1
      %p276 = por %p274, %p275
      %p277 = scmp.ne.s32.totalorder %s266, %s267
      %p278 = scmp.eq.s32.totalorder %s36, 0
      %p279 = por %p277, %p278
      %p280 = scmp.ne.s32.totalorder %s266, %s267
      %p281 = scmp.eq.s32.totalorder %s37, 1
      %p282 = por %p280, %p281
      %p284 = scmp.ne.s32.totalorder %s267, %s283
      %p285 = scmp.eq.s32.totalorder %s37, 0
      %p286 = por %p284, %p285
      %s287 = ssub.s32 %s38, %s50
      %p288 = scmp.eq.s32.totalorder %s287, 0
      %s290 = sadd.s32 %s289, 1
      %s291 = scalar_select %p288, %s289, %s290
      %p294 = pneg %p288
      %p295 = scmp.eq.s32.totalorder %s31, 1
      %p296 = por %p294, %p295
      %p297 = scmp.ne.s32.totalorder %s289, %s292
      %p298 = scmp.eq.s32.totalorder %s31, 0
      %p299 = por %p297, %p298
      %p300 = scmp.ne.s32.totalorder %s289, %s292
      %p301 = scmp.eq.s32.totalorder %s36, 1
      %p302 = por %p300, %p301
      %p303 = scmp.ne.s32.totalorder %s292, %s293
      %p304 = scmp.eq.s32.totalorder %s36, 0
      %p305 = por %p303, %p304
      %p306 = scmp.ne.s32.totalorder %s292, %s293
      %p307 = scmp.eq.s32.totalorder %s37, 1
      %p308 = por %p306, %p307
      %p310 = scmp.ne.s32.totalorder %s293, %s309
      %p311 = scmp.eq.s32.totalorder %s37, 0
      %p312 = por %p310, %p311
      %p313 = scmp.le.s32.totalorder 1, %s31
      %p314 = scmp.lt.s32.totalorder %s31, 3
      %p315 = pnand %p313, %p314
      %p316 = pneg %p315
      // Predicated region
      $region9: #{gan_module_forward.5} parent=5 // pred_check
        _
      $region10: #{gan_module_forward.5} parent=5 // pred_check_branch
        %318 = sbr.rel (%p315) target = $region12
      $region11: #{gan_module_forward.5} parent=5 // pred_region
        %s319 = ssub.s32 %s31, 1
        // Predicated region
        $region13: #{gan_module_forward.5} parent=11 // pred_check
          %p320 = pneg %p148
        $region14: #{gan_module_forward.5} parent=11 // pred_check_branch
          %322 = sbr.rel (%p320) target = $region16
        $region15: #{gan_module_forward.5} parent=11 // pred_region
          %s324 = ssub.s32 4096, 4096
          %325 = vsyncadd [#allocation13], %s324
          %s326 = sshll.u32 [#allocation12], 4
          %s327 = int_to_ptr.vmem [resolvable:$true] %s326
          %332 = dma.hbm_to_vmem [thread:$0]  %s3, 4096, %s327, [#allocation13], 128, 128, 8
        $region16: #{gan_module_forward.5} parent=11 // pred_fallthru
          _
        // Predicated region
        $region17: #{gan_module_forward.5} parent=11 // pred_check
          %p333 = pneg %p169
        $region18: #{gan_module_forward.5} parent=11 // pred_check_branch
          %335 = sbr.rel (%p333) target = $region20
        $region19: #{gan_module_forward.5} parent=11 // pred_region
          %s337 = ssub.s32 256, 256
          %338 = vsyncadd [#allocation13], %s337
          %s340 = sshll.u32 [#allocation14], 4
          %s341 = int_to_ptr.vmem [resolvable:$true] %s340
          %343 = dma.hbm_to_vmem [thread:$0]  %s4, 256, %s341, [#allocation13]
        $region20: #{gan_module_forward.5} parent=11 // pred_fallthru
          _
        // Predicated region
        $region21: #{gan_module_forward.5} parent=11 // pred_check
          %p344 = pneg %p190
        $region22: #{gan_module_forward.5} parent=11 // pred_check_branch
          %346 = sbr.rel (%p344) target = $region24
        $region23: #{gan_module_forward.5} parent=11 // pred_region
          %s348 = ssub.s32 8192, 8192
          %349 = vsyncadd [#allocation16], %s348
          %s350 = sshll.u32 [#allocation15], 4
          %s351 = int_to_ptr.vmem [resolvable:$true] %s350
          %356 = dma.hbm_to_vmem [thread:$0]  %s5, 8192, %s351, [#allocation16], 256, 256, 16
        $region24: #{gan_module_forward.5} parent=11 // pred_fallthru
          _
        // Predicated region
        $region25: #{gan_module_forward.5} parent=11 // pred_check
          %p357 = pneg %p211
        $region26: #{gan_module_forward.5} parent=11 // pred_check_branch
          %359 = sbr.rel (%p357) target = $region28
        $region27: #{gan_module_forward.5} parent=11 // pred_region
          %s361 = ssub.s32 32, 32
          %362 = vsyncadd [#allocation16], %s361
          %s364 = sshll.u32 [#allocation17], 4
          %s365 = int_to_ptr.vmem [resolvable:$true] %s364
          %367 = dma.hbm_to_vmem [thread:$0]  %s6, 32, %s365, [#allocation16]
        $region28: #{gan_module_forward.5} parent=11 // pred_fallthru
          _
        // Predicated region
        $region29: #{gan_module_forward.5} parent=11 // pred_check
          %p368 = pneg %p232
        $region30: #{gan_module_forward.5} parent=11 // pred_check_branch
          %370 = sbr.rel (%p368) target = $region32
        $region31: #{gan_module_forward.5} parent=11 // pred_region
          %s372 = ssub.s32 32, 32
          %373 = vsyncadd [#allocation19], %s372
          %s375 = sshll.u32 [#allocation18], 4
          %s376 = int_to_ptr.vmem [resolvable:$true] %s375
          %378 = dma.hbm_to_vmem [thread:$0]  %s7, 32, %s376, [#allocation19]
        $region32: #{gan_module_forward.5} parent=11 // pred_fallthru
          _
        // Predicated region
        $region33: #{gan_module_forward.5} parent=11 // pred_check
          %p379 = pneg %p253
        $region34: #{gan_module_forward.5} parent=11 // pred_check_branch
          %381 = sbr.rel (%p379) target = $region36
        $region35: #{gan_module_forward.5} parent=11 // pred_region
          %s383 = ssub.s32 32, 32
          %384 = vsyncadd [#allocation19], %s383
          %s386 = sshll.u32 [#allocation20], 4
          %s387 = int_to_ptr.vmem [resolvable:$true] %s386
          %389 = dma.hbm_to_vmem [thread:$0]  %s8, 32, %s387, [#allocation19]
        $region36: #{gan_module_forward.5} parent=11 // pred_fallthru
          _
      $region12: #{gan_module_forward.5} parent=5 // pred_fallthru
        _
      %p390 = scmp.lt.s32.totalorder %s31, 2
      // Predicated region
      $region37: #{gan_module_forward.5} parent=5 // pred_check
        %p391 = pneg %p390
      $region38: #{gan_module_forward.5} parent=5 // pred_check_branch
        %393 = sbr.rel (%p391) target = $region40
      $region39: #{gan_module_forward.5} parent=5 // pred_region
        // Predicated region
        $region41: #{gan_module_forward.5} parent=39 // pred_check
          %p394 = pneg %p65
        $region42: #{gan_module_forward.5} parent=39 // pred_check_branch
          %396 = sbr.rel (%p394) target = $region44
        $region43: #{gan_module_forward.5} parent=39 // pred_region
          %s397 = sand.u32 %s55, 1
          %s398 = scalar_lea.sflag [#allocation7], %s397
          %s399 = sand.u32 %s55, 1
          %s400 = smul.addr %s399, 128
          %s401 = scalar_lea.vmem [#allocation6], %s400
          %s402 = smul.u32 4, %s39
          %s404 = ssub.s32 2048, 2048
          %405 = vsyncadd %s398, %s404
          %s406 = smul.addr %s402, 4
          %s407 = smul.addr %s38, 16
          %s408 = sadd.s32 %s406, %s407
          %s409 = smul.addr %s408, 128
          %s410 = scalar_lea.hbm %s0, %s409
          %s411 = sshll.u32 %s401, 4
          %s412 = int_to_ptr.vmem [resolvable:$true] %s411
          %417 = dma.hbm_to_vmem [thread:$0]  %s410, 2048, %s412, %s398, 512, 512, 32
        $region44: #{gan_module_forward.5} parent=39 // pred_fallthru
          _
        // Predicated region
        $region45: #{gan_module_forward.5} parent=39 // pred_check
          %p418 = pneg %p93
        $region46: #{gan_module_forward.5} parent=39 // pred_check_branch
          %420 = sbr.rel (%p418) target = $region48
        $region47: #{gan_module_forward.5} parent=39 // pred_region
          %s421 = sand.u32 %s31, 1
          %s422 = scalar_lea.sflag [#allocation10], %s421
          %s423 = sand.u32 %s83, 1
          %s424 = smul.addr %s423, 64
          %s425 = scalar_lea.vmem [#allocation9], %s424
          %s426 = smul.u32 4, %s39
          %s428 = ssub.s32 1024, 1024
          %429 = vsyncadd %s422, %s428
          %s430 = smul.addr %s426, 2
          %s431 = smul.addr %s38, 8
          %s432 = sadd.s32 %s430, %s431
          %s433 = smul.addr %s432, 128
          %s434 = scalar_lea.hbm %s1, %s433
          %s435 = sshll.u32 %s425, 4
          %s436 = int_to_ptr.vmem [resolvable:$true] %s435
          %441 = dma.hbm_to_vmem [thread:$0]  %s434, 1024, %s436, %s422, 256, 256, 16
        $region48: #{gan_module_forward.5} parent=39 // pred_fallthru
          _
        // Predicated region
        $region49: #{gan_module_forward.5} parent=39 // pred_check
          %p442 = pneg %p121
        $region50: #{gan_module_forward.5} parent=39 // pred_check_branch
          %444 = sbr.rel (%p442) target = $region52
        $region51: #{gan_module_forward.5} parent=39 // pred_region
          %s445 = sand.u32 %s31, 1
          %s446 = scalar_lea.sflag [#allocation10], %s445
          %s447 = sand.u32 %s111, 1
          %s448 = smul.addr %s447, 32
          %s449 = scalar_lea.vmem [#allocation11], %s448
          %s450 = smul.u32 4, %s39
          %s452 = ssub.s32 512, 512
          %453 = vsyncadd %s446, %s452
          %s454 = smul.addr %s38, 4
          %s455 = sadd.s32 %s450, %s454
          %s456 = smul.addr %s455, 128
          %s457 = scalar_lea.hbm %s2, %s456
          %s458 = sshll.u32 %s449, 4
          %s459 = int_to_ptr.vmem [resolvable:$true] %s458
          %464 = dma.hbm_to_vmem [thread:$0]  %s457, 512, %s459, %s446, 128, 128, 8
        $region52: #{gan_module_forward.5} parent=39 // pred_fallthru
          _
        // Predicated region
        $region53: #{gan_module_forward.5} parent=39 // pred_check
          %p465 = pneg %p273
        $region54: #{gan_module_forward.5} parent=39 // pred_check_branch
          %467 = sbr.rel (%p465) target = $region56
        $region55: #{gan_module_forward.5} parent=39 // pred_region
          %s468 = sand.u32 %s263, 1
          %s469 = scalar_lea.sflag [#allocation22], %s468
          %s470 = sand.u32 %s263, 1
          %s471 = smul.addr %s470, 32
          %s472 = scalar_lea.vmem [#allocation21], %s471
          %s474 = ssub.s32 512, 512
          %475 = vsyncadd %s469, %s474
          %s476 = smul.addr %s38, 4
          %s477 = smul.addr %s476, 128
          %s478 = scalar_lea.hbm %s9, %s477
          %s479 = sshll.u32 %s472, 4
          %s480 = int_to_ptr.vmem [resolvable:$true] %s479
          %485 = dma.hbm_to_vmem [thread:$0]  %s478, 512, %s480, %s469, 256, 256, 16
        $region56: #{gan_module_forward.5} parent=39 // pred_fallthru
          _
      $region40: #{gan_module_forward.5} parent=5 // pred_fallthru
        _
      %p486 = scmp.le.s32.totalorder 1, %s31
      %p487 = scmp.lt.s32.totalorder %s31, 3
      %p488 = pnand %p486, %p487
      %p489 = pneg %p488
      // Predicated region
      $region57: #{gan_module_forward.5} parent=5 // pred_check
        _
      $region58: #{gan_module_forward.5} parent=5 // pred_check_branch
        %491 = sbr.rel (%p488) target = $region60
      $region59: #{gan_module_forward.5} parent=5 // pred_region
        %s492 = ssub.s32 %s31, 1
        %s493 = sand.u32 %s58, 1
        %s494 = scalar_lea.sflag [#allocation7], %s493
        %s495 = sand.u32 %s58, 1
        %s496 = smul.addr %s495, 128
        %s497 = scalar_lea.vmem [#allocation6], %s496
        // Predicated region
        $region61: #{gan_module_forward.5} parent=59 // pred_check
          %p498 = pneg %p71
        $region62: #{gan_module_forward.5} parent=59 // pred_check_branch
          %500 = sbr.rel (%p498) target = $region64
        $region63: #{gan_module_forward.5} parent=59 // pred_region
          %501 = dma.done %s494, 2048
        $region64: #{gan_module_forward.5} parent=59 // pred_fallthru
          _
        %s502 = sand.u32 %s36, 1
        %s503 = scalar_lea.sflag [#allocation10], %s502
        %s504 = sand.u32 %s86, 1
        %s505 = smul.addr %s504, 64
        %s506 = scalar_lea.vmem [#allocation9], %s505
        // Predicated region
        $region65: #{gan_module_forward.5} parent=59 // pred_check
          %p507 = pneg %p99
        $region66: #{gan_module_forward.5} parent=59 // pred_check_branch
          %509 = sbr.rel (%p507) target = $region68
        $region67: #{gan_module_forward.5} parent=59 // pred_region
          %510 = dma.done %s503, 1024
        $region68: #{gan_module_forward.5} parent=59 // pred_fallthru
          _
        %s511 = sand.u32 %s36, 1
        %s512 = scalar_lea.sflag [#allocation10], %s511
        %s513 = sand.u32 %s114, 1
        %s514 = smul.addr %s513, 32
        %s515 = scalar_lea.vmem [#allocation11], %s514
        // Predicated region
        $region69: #{gan_module_forward.5} parent=59 // pred_check
          %p516 = pneg %p127
        $region70: #{gan_module_forward.5} parent=59 // pred_check_branch
          %518 = sbr.rel (%p516) target = $region72
        $region71: #{gan_module_forward.5} parent=59 // pred_region
          %519 = dma.done %s512, 512
        $region72: #{gan_module_forward.5} parent=59 // pred_fallthru
          _
        // Predicated region
        $region73: #{gan_module_forward.5} parent=59 // pred_check
          %p520 = pneg %p148
        $region74: #{gan_module_forward.5} parent=59 // pred_check_branch
          %522 = sbr.rel (%p520) target = $region76
        $region75: #{gan_module_forward.5} parent=59 // pred_region
          %523 = dma.done [#allocation13], 4096
        $region76: #{gan_module_forward.5} parent=59 // pred_fallthru
          _
        // Predicated region
        $region77: #{gan_module_forward.5} parent=59 // pred_check
          %p524 = pneg %p169
        $region78: #{gan_module_forward.5} parent=59 // pred_check_branch
          %526 = sbr.rel (%p524) target = $region80
        $region79: #{gan_module_forward.5} parent=59 // pred_region
          %527 = dma.done [#allocation13], 256
        $region80: #{gan_module_forward.5} parent=59 // pred_fallthru
          _
        // Predicated region
        $region81: #{gan_module_forward.5} parent=59 // pred_check
          %p528 = pneg %p190
        $region82: #{gan_module_forward.5} parent=59 // pred_check_branch
          %530 = sbr.rel (%p528) target = $region84
        $region83: #{gan_module_forward.5} parent=59 // pred_region
          %531 = dma.done [#allocation16], 8192
        $region84: #{gan_module_forward.5} parent=59 // pred_fallthru
          _
        // Predicated region
        $region85: #{gan_module_forward.5} parent=59 // pred_check
          %p532 = pneg %p211
        $region86: #{gan_module_forward.5} parent=59 // pred_check_branch
          %534 = sbr.rel (%p532) target = $region88
        $region87: #{gan_module_forward.5} parent=59 // pred_region
          %535 = dma.done [#allocation16], 32
        $region88: #{gan_module_forward.5} parent=59 // pred_fallthru
          _
        // Predicated region
        $region89: #{gan_module_forward.5} parent=59 // pred_check
          %p536 = pneg %p232
        $region90: #{gan_module_forward.5} parent=59 // pred_check_branch
          %538 = sbr.rel (%p536) target = $region92
        $region91: #{gan_module_forward.5} parent=59 // pred_region
          %539 = dma.done [#allocation19], 32
        $region92: #{gan_module_forward.5} parent=59 // pred_fallthru
          _
        // Predicated region
        $region93: #{gan_module_forward.5} parent=59 // pred_check
          %p540 = pneg %p253
        $region94: #{gan_module_forward.5} parent=59 // pred_check_branch
          %542 = sbr.rel (%p540) target = $region96
        $region95: #{gan_module_forward.5} parent=59 // pred_region
          %543 = dma.done [#allocation19], 32
        $region96: #{gan_module_forward.5} parent=59 // pred_fallthru
          _
        %s544 = sand.u32 %s266, 1
        %s545 = scalar_lea.sflag [#allocation22], %s544
        %s546 = sand.u32 %s266, 1
        %s547 = smul.addr %s546, 32
        %s548 = scalar_lea.vmem [#allocation21], %s547
        // Predicated region
        $region97: #{gan_module_forward.5} parent=59 // pred_check
          %p549 = pneg %p279
        $region98: #{gan_module_forward.5} parent=59 // pred_check_branch
          %551 = sbr.rel (%p549) target = $region100
        $region99: #{gan_module_forward.5} parent=59 // pred_region
          %552 = dma.done %s545, 512
        $region100: #{gan_module_forward.5} parent=59 // pred_fallthru
          _
        %s553 = sand.u32 %s58, 1
        %s554 = scalar_lea.sflag [#allocation7], %s553
        %s555 = sand.u32 %s58, 1
        %s556 = smul.addr %s555, 128
        %s557 = scalar_lea.vmem [#allocation6], %s556
        %p558 = pneg %p71
        %p559 = pneg %p68
        %s560 = sand.u32 %s36, 1
        %s561 = scalar_lea.sflag [#allocation10], %s560
        %s562 = sand.u32 %s86, 1
        %s563 = smul.addr %s562, 64
        %s564 = scalar_lea.vmem [#allocation9], %s563
        %p565 = pneg %p99
        %p566 = pneg %p96
        %s567 = sand.u32 %s36, 1
        %s568 = scalar_lea.sflag [#allocation10], %s567
        %s569 = sand.u32 %s114, 1
        %s570 = smul.addr %s569, 32
        %s571 = scalar_lea.vmem [#allocation11], %s570
        %p572 = pneg %p127
        %p573 = pneg %p124
        %p574 = pneg %p148
        %p575 = pneg %p145
        %p576 = pneg %p169
        %p577 = pneg %p166
        %p578 = pneg %p190
        %p579 = pneg %p187
        %p580 = pneg %p211
        %p581 = pneg %p208
        %p582 = pneg %p232
        %p583 = pneg %p229
        %p584 = pneg %p253
        %p585 = pneg %p250
        %s586 = sand.u32 %s266, 1
        %s587 = scalar_lea.sflag [#allocation22], %s586
        %s588 = sand.u32 %s266, 1
        %s589 = smul.addr %s588, 32
        %s590 = scalar_lea.vmem [#allocation21], %s589
        %p591 = pneg %p279
        %p592 = pneg %p276
        %p593 = pneg %p305
        %p594 = pneg %p302
        %s595 = sand.u32 %s292, 1
        %s596 = scalar_lea.sflag [#allocation8], %s595
        %s597 = sand.u32 %s292, 1
        %s598 = smul.addr %s597, 32
        %s599 = scalar_lea.vmem [#allocation23], %s598
        %s600 = smul.u32 4, %s41
        %s601 = smul.u32 4, %s41
        %s602 = smul.u32 4, %s41
        %p604 = scmp.eq.s32.totalorder %s41, 0
        // Predicated region
        $region101: #{gan_module_forward.5} parent=59 // pred_check
          %p605 = pneg %p604
        $region102: #{gan_module_forward.5} parent=59 // pred_check_branch
          %607 = sbr.rel (%p605) target = $region104
        $region103: #{gan_module_forward.5} parent=59 // pred_region
          %vm608 = vcmask 130048
          %609 = vst.msk [vmem:[#allocation2] sm:$0xff] %vm608, -1e+30
          %610 = vst.msk [vmem:[#allocation3] sm:$0xff] %vm608, 0.0
          %vm611 = vcmask 122880
          %612 = vst.msk [vmem:[#allocation4] sm:$0x1] %vm611, 0.0
          %613 = vst [vmem:[#allocation5] sm:$0xff] 0.0
          %614 = vst [vmem:[#allocation5 + $0x8] sm:$0xff] 0.0
          %615 = vst [vmem:[#allocation5 + $0x10] sm:$0xff] 0.0
          %616 = vst [vmem:[#allocation5 + $0x18] sm:$0xff] 0.0
        $region104: #{gan_module_forward.5} parent=59 // pred_fallthru
          _
        %v617 = vld [vmem:[%s497] sm:$0xff]
        %v618 = vld [vmem:[%s497 + $0x8] sm:$0xff]
        %v619 = vld [vmem:[%s497 + $0x10] sm:$0xff]
        %v620 = vld [vmem:[%s497 + $0x18] sm:$0xff]
        %v621 = vld [vmem:[%s497 + $0x20] sm:$0xff]
        %v622 = vld [vmem:[%s497 + $0x28] sm:$0xff]
        %v623 = vld [vmem:[%s497 + $0x30] sm:$0xff]
        %v624 = vld [vmem:[%s497 + $0x38] sm:$0xff]
        %v625 = vld [vmem:[%s497 + $0x40] sm:$0xff]
        %v626 = vld [vmem:[%s497 + $0x48] sm:$0xff]
        %v627 = vld [vmem:[%s497 + $0x50] sm:$0xff]
        %v628 = vld [vmem:[%s497 + $0x58] sm:$0xff]
        %v629 = vld [vmem:[%s497 + $0x60] sm:$0xff]
        %v630 = vld [vmem:[%s497 + $0x68] sm:$0xff]
        %v631 = vld [vmem:[%s497 + $0x70] sm:$0xff]
        %v632 = vld [vmem:[%s497 + $0x78] sm:$0xff]
        %v633 = vld [vmem:[%s506] sm:$0xff]
        %v634 = vld [vmem:[%s506 + $0x8] sm:$0xff]
        %v635 = vld [vmem:[%s506 + $0x10] sm:$0xff]
        %v636 = vld [vmem:[%s506 + $0x18] sm:$0xff]
        %v637 = vld [vmem:[%s506 + $0x20] sm:$0xff]
        %v638 = vld [vmem:[%s506 + $0x28] sm:$0xff]
        %v639 = vld [vmem:[%s506 + $0x30] sm:$0xff]
        %v640 = vld [vmem:[%s506 + $0x38] sm:$0xff]
        %v641 = vld [vmem:[%s515] sm:$0xff]
        %v642 = vld [vmem:[%s515 + $0x8] sm:$0xff]
        %v643 = vld [vmem:[%s515 + $0x10] sm:$0xff]
        %v644 = vld [vmem:[%s515 + $0x18] sm:$0xff]
        %v645 = vld [vmem:[#allocation12] sm:$0xff]
        %v646 = vld [vmem:[#allocation12 + $0x8] sm:$0xff]
        %v647 = vld [vmem:[#allocation12 + $0x10] sm:$0xff]
        %v648 = vld [vmem:[#allocation12 + $0x18] sm:$0xff]
        %v649 = vld [vmem:[#allocation12 + $0x20] sm:$0xff]
        %v650 = vld [vmem:[#allocation12 + $0x28] sm:$0xff]
        %v651 = vld [vmem:[#allocation12 + $0x30] sm:$0xff]
        %v652 = vld [vmem:[#allocation12 + $0x38] sm:$0xff]
        %v653 = vld [vmem:[#allocation12 + $0x40] sm:$0xff]
        %v654 = vld [vmem:[#allocation12 + $0x48] sm:$0xff]
        %v655 = vld [vmem:[#allocation12 + $0x50] sm:$0xff]
        %v656 = vld [vmem:[#allocation12 + $0x58] sm:$0xff]
        %v657 = vld [vmem:[#allocation12 + $0x60] sm:$0xff]
        %v658 = vld [vmem:[#allocation12 + $0x68] sm:$0xff]
        %v659 = vld [vmem:[#allocation12 + $0x70] sm:$0xff]
        %v660 = vld [vmem:[#allocation12 + $0x78] sm:$0xff]
        %v661 = vld [vmem:[#allocation12 + $0x80] sm:$0xff]
        %v662 = vld [vmem:[#allocation12 + $0x88] sm:$0xff]
        %v663 = vld [vmem:[#allocation12 + $0x90] sm:$0xff]
        %v664 = vld [vmem:[#allocation12 + $0x98] sm:$0xff]
        %v665 = vld [vmem:[#allocation12 + $0xa0] sm:$0xff]
        %v666 = vld [vmem:[#allocation12 + $0xa8] sm:$0xff]
        %v667 = vld [vmem:[#allocation12 + $0xb0] sm:$0xff]
        %v668 = vld [vmem:[#allocation12 + $0xb8] sm:$0xff]
        %v669 = vld [vmem:[#allocation12 + $0xc0] sm:$0xff]
        %v670 = vld [vmem:[#allocation12 + $0xc8] sm:$0xff]
        %v671 = vld [vmem:[#allocation12 + $0xd0] sm:$0xff]
        %v672 = vld [vmem:[#allocation12 + $0xd8] sm:$0xff]
        %v673 = vld [vmem:[#allocation12 + $0xe0] sm:$0xff]
        %v674 = vld [vmem:[#allocation12 + $0xe8] sm:$0xff]
        %v675 = vld [vmem:[#allocation12 + $0xf0] sm:$0xff]
        %v676 = vld [vmem:[#allocation12 + $0xf8] sm:$0xff]
        %v677 = vld [vmem:[#allocation14] sm:$0xff]
        %v678 = vld [vmem:[#allocation14 + $0x8] sm:$0xff]
        %v679 = vlaneseq
        %v680 = vand.u32 %v679, 127
        %681 = vset.pattern.permute.xlu0 0
        %682 = vperm.xlu0 %681, %v641
        %v683 = vpop.permute.xlu0 %682
        %684 = vset.pattern.permute.xlu0 0
        %685 = vperm.xlu0 %684, %v642
        %v686 = vpop.permute.xlu0 %685
        %687 = vset.pattern.permute.xlu0 0
        %688 = vperm.xlu0 %687, %v643
        %v689 = vpop.permute.xlu0 %688
        %690 = vset.pattern.permute.xlu0 0
        %691 = vperm.xlu0 %690, %v644
        %v692 = vpop.permute.xlu0 %691
        %vm693 = vcmp.eq.s32.totalorder %v680, %v683
        %vm694 = vcmp.eq.s32.totalorder %v680, %v686
        %vm695 = vcmp.eq.s32.totalorder %v680, %v689
        %vm696 = vcmp.eq.s32.totalorder %v680, %v692
        %v697 = vsel %vm693, 1, 0
        %v698 = vsel %vm694, 1, 0
        %v699 = vsel %vm695, 1, 0
        %v700 = vsel %vm696, 1, 0
        %v701 = vcvt.s32.f32 %v697
        %v702 = vcvt.s32.f32 %v698
        %v703 = vcvt.s32.f32 %v699
        %v704 = vcvt.s32.f32 %v700
        %v705 = vpack.c.bf16 %v702, %v701
        %v706 = vpack.c.bf16 %v704, %v703
        %v707 = vmul.f32 %v617, %v633
        %v708 = vmul.f32 %v618, %v634
        %v709 = vmul.f32 %v621, %v635
        %v710 = vmul.f32 %v622, %v636
        %v711 = vmul.f32 %v625, %v637
        %v712 = vmul.f32 %v626, %v638
        %v713 = vmul.f32 %v629, %v639
        %v714 = vmul.f32 %v630, %v640
        %v715 = vpack.c.bf16 %v709, %v707
        %v716 = vpack.c.bf16 %v710, %v708
        %v717 = vpack.c.bf16 %v713, %v711
        %v718 = vpack.c.bf16 %v714, %v712
        %v719 = vpack.c.bf16 %v646, %v645
        %v720 = vpack.c.bf16 %v648, %v647
        %v721 = vpack.c.bf16 %v650, %v649
        %v722 = vpack.c.bf16 %v652, %v651
        %v723 = vpack.c.bf16 %v654, %v653
        %v724 = vpack.c.bf16 %v656, %v655
        %v725 = vpack.c.bf16 %v658, %v657
        %v726 = vpack.c.bf16 %v660, %v659
        %v727 = vpack.c.bf16 %v662, %v661
        %v728 = vpack.c.bf16 %v664, %v663
        %v729 = vpack.c.bf16 %v666, %v665
        %v730 = vpack.c.bf16 %v668, %v667
        %v731 = vpack.c.bf16 %v670, %v669
        %v732 = vpack.c.bf16 %v672, %v671
        %v733 = vpack.c.bf16 %v674, %v673
        %v734 = vpack.c.bf16 %v676, %v675
        %735 = vmatprep.subr.bf16.mxu0 0
        %736 = vmatpush1.bf16.msra.mxu0 %v719
        %737 = vmatprep.subr.bf16.mxu0 0
        %738 = vmatpush1.bf16.msra.mxu0 %v720
        %739 = vmatprep.subr.bf16.mxu0 0
        %740 = vmatpush1.bf16.msra.mxu0 %v721
        %741 = vmatprep.subr.bf16.mxu0 0
        %742 = vmatpush1.bf16.msra.mxu0 %v722
        %743 = vmatprep.subr.bf16.mxu0 0
        %744 = vmatpush1.bf16.msra.mxu0 %v723
        %745 = vmatprep.subr.bf16.mxu0 0
        %746 = vmatpush1.bf16.msra.mxu0 %v724
        %747 = vmatprep.subr.bf16.mxu0 0
        %748 = vmatpush1.bf16.msra.mxu0 %v725
        %749 = vmatprep.subr.bf16.mxu0 0
        %750 = vmatpush1.bf16.msra.mxu0 %v726
        %751 = vmatprep.subr.bf16.mxu0 0
        %752 = vmatpush1.bf16.msra.mxu0 %v727
        %753 = vmatprep.subr.bf16.mxu0 0
        %754 = vmatpush1.bf16.msra.mxu0 %v728
        %755 = vmatprep.subr.bf16.mxu0 0
        %756 = vmatpush1.bf16.msra.mxu0 %v729
        %757 = vmatprep.subr.bf16.mxu0 0
        %758 = vmatpush1.bf16.msra.mxu0 %v730
        %759 = vmatprep.subr.bf16.mxu0 0
        %760 = vmatpush1.bf16.msra.mxu0 %v731
        %761 = vmatprep.subr.bf16.mxu0 0
        %762 = vmatpush1.bf16.msra.mxu0 %v732
        %763 = vmatprep.subr.bf16.mxu0 0
        %764 = vmatpush1.bf16.msra.mxu0 %v733
        %765 = vmatprep.subr.bf16.mxu0 0
        %766 = vmatpush1.bf16.msra.mxu0 %v734
        %767 = vmatprep.mubr.bf16.mxu0 %v716
        %768 = vmatmul.mubr.bf16.gmra.mrb[0].mxu0 %v715
        %v769 = vpop.f32.mrb[0].mxu0
        %v770 = vadd.f32 0.0, %v769
        %v771 = vpop.f32.mrb[0].mxu0
        %v772 = vpop.f32.mrb[0].mxu0
        %v773 = vadd.f32 0.0, %v772
        %v774 = vpop.f32.mrb[0].mxu0
        %775 = vmatprep.mubr.bf16.mxu0 %v718
        %776 = vmatmul.mubr.bf16.gmra.mrb[0].mxu0 %v717
        %v777 = vpop.f32.mrb[0].mxu0
        %v778 = vadd.f32 0.0, %v777
        %v779 = vpop.f32.mrb[0].mxu0
        %v780 = vpop.f32.mrb[0].mxu0
        %v781 = vadd.f32 0.0, %v780
        %v782 = vpop.f32.mrb[0].mxu0
        %783 = vdwg.mxu0
        %v784 = vmul.f32 %v770, 0.17677669
        %v785 = vmul.f32 %v773, 0.17677669
        %v786 = vmul.f32 %v778, 0.17677669
        %v787 = vmul.f32 %v781, 0.17677669
        %789 = vset.pattern.permute.xlu0 0
        %790 = vperm.xlu0 %789, %v784
        %v791 = vpop.permute.xlu0 %790
        %794 = vset.pattern.permute.xlu0 0
        %795 = vperm.xlu0 %794, %v785
        %v796 = vpop.permute.xlu0 %795
        %799 = vset.pattern.permute.xlu0 0
        %800 = vperm.xlu0 %799, %v786
        %v801 = vpop.permute.xlu0 %800
        %804 = vset.pattern.permute.xlu0 0
        %805 = vperm.xlu0 %804, %v787
        %v806 = vpop.permute.xlu0 %805
        %v808 = vsel %vm693, %v791, -1e+30
        %v809 = vsel %vm694, %v796, -1e+30
        %v810 = vsel %vm695, %v801, -1e+30
        %v811 = vsel %vm696, %v806, -1e+30
        %vm812 = vcmask 130048
        %v813 = vsel %vm812, %v808, -inf
        %v814 = vsel %vm812, %v809, -inf
        %v815 = vsel %vm812, %v810, -inf
        %v816 = vsel %vm812, %v811, -inf
        %v817 = vmax.f32 %v813, %v814
        %v818 = vmax.f32 %v815, %v816
        %v819 = vmax.f32 %v817, %v818
        %v820 = vrot.slane %v819, 4
        %v821 = vmax.f32 %v819, %v820
        %v822 = vrot.slane %v821, 2
        %v823 = vmax.f32 %v821, %v822
        %v824 = vrot.slane %v823, 1
        %v825 = vmax.f32 %v823, %v824
        %826 = vset.pattern.permute.xlu0 1
        %827 = vperm.xlu0 %826, %v784
        %v828 = vpop.permute.xlu0 %827
        %830 = vset.pattern.permute.xlu0 1
        %831 = vperm.xlu0 %830, %v785
        %v832 = vpop.permute.xlu0 %831
        %834 = vset.pattern.permute.xlu0 1
        %835 = vperm.xlu0 %834, %v786
        %v836 = vpop.permute.xlu0 %835
        %838 = vset.pattern.permute.xlu0 1
        %839 = vperm.xlu0 %838, %v787
        %v840 = vpop.permute.xlu0 %839
        %v842 = vsel %vm693, %v828, -1e+30
        %v843 = vsel %vm694, %v832, -1e+30
        %v844 = vsel %vm695, %v836, -1e+30
        %v845 = vsel %vm696, %v840, -1e+30
        %v846 = vsel %vm812, %v842, -inf
        %v847 = vsel %vm812, %v843, -inf
        %v848 = vsel %vm812, %v844, -inf
        %v849 = vsel %vm812, %v845, -inf
        %v850 = vmax.f32 %v846, %v847
        %v851 = vmax.f32 %v848, %v849
        %v852 = vmax.f32 %v850, %v851
        %v853 = vrot.slane %v852, 4
        %v854 = vmax.f32 %v852, %v853
        %v855 = vrot.slane %v854, 2
        %v856 = vmax.f32 %v854, %v855
        %v857 = vrot.slane %v856, 1
        %v858 = vmax.f32 %v856, %v857
        %859 = vset.pattern.permute.xlu0 2
        %860 = vperm.xlu0 %859, %v784
        %v861 = vpop.permute.xlu0 %860
        %863 = vset.pattern.permute.xlu0 2
        %864 = vperm.xlu0 %863, %v785
        %v865 = vpop.permute.xlu0 %864
        %867 = vset.pattern.permute.xlu0 2
        %868 = vperm.xlu0 %867, %v786
        %v869 = vpop.permute.xlu0 %868
        %871 = vset.pattern.permute.xlu0 2
        %872 = vperm.xlu0 %871, %v787
        %v873 = vpop.permute.xlu0 %872
        %v875 = vsel %vm693, %v861, -1e+30
        %v876 = vsel %vm694, %v865, -1e+30
        %v877 = vsel %vm695, %v869, -1e+30
        %v878 = vsel %vm696, %v873, -1e+30
        %v879 = vsel %vm812, %v875, -inf
        %v880 = vsel %vm812, %v876, -inf
        %v881 = vsel %vm812, %v877, -inf
        %v882 = vsel %vm812, %v878, -inf
        %v883 = vmax.f32 %v879, %v880
        %v884 = vmax.f32 %v881, %v882
        %v885 = vmax.f32 %v883, %v884
        %v886 = vrot.slane %v885, 4
        %v887 = vmax.f32 %v885, %v886
        %v888 = vrot.slane %v887, 2
        %v889 = vmax.f32 %v887, %v888
        %v890 = vrot.slane %v889, 1
        %v891 = vmax.f32 %v889, %v890
        %892 = vset.pattern.permute.xlu0 3
        %893 = vperm.xlu0 %892, %v784
        %v894 = vpop.permute.xlu0 %893
        %896 = vset.pattern.permute.xlu0 3
        %897 = vperm.xlu0 %896, %v785
        %v898 = vpop.permute.xlu0 %897
        %900 = vset.pattern.permute.xlu0 3
        %901 = vperm.xlu0 %900, %v786
        %v902 = vpop.permute.xlu0 %901
        %904 = vset.pattern.permute.xlu0 3
        %905 = vperm.xlu0 %904, %v787
        %v906 = vpop.permute.xlu0 %905
        %v908 = vsel %vm693, %v894, -1e+30
        %v909 = vsel %vm694, %v898, -1e+30
        %v910 = vsel %vm695, %v902, -1e+30
        %v911 = vsel %vm696, %v906, -1e+30
        %v912 = vsel %vm812, %v908, -inf
        %v913 = vsel %vm812, %v909, -inf
        %v914 = vsel %vm812, %v910, -inf
        %v915 = vsel %vm812, %v911, -inf
        %v916 = vmax.f32 %v912, %v913
        %v917 = vmax.f32 %v914, %v915
        %v918 = vmax.f32 %v916, %v917
        %v919 = vrot.slane %v918, 4
        %v920 = vmax.f32 %v918, %v919
        %v921 = vrot.slane %v920, 2
        %v922 = vmax.f32 %v920, %v921
        %v923 = vrot.slane %v922, 1
        %v924 = vmax.f32 %v922, %v923
        %925 = vset.pattern.permute.xlu0 4
        %926 = vperm.xlu0 %925, %v784
        %v927 = vpop.permute.xlu0 %926
        %929 = vset.pattern.permute.xlu0 4
        %930 = vperm.xlu0 %929, %v785
        %v931 = vpop.permute.xlu0 %930
        %933 = vset.pattern.permute.xlu0 4
        %934 = vperm.xlu0 %933, %v786
        %v935 = vpop.permute.xlu0 %934
        %937 = vset.pattern.permute.xlu0 4
        %938 = vperm.xlu0 %937, %v787
        %v939 = vpop.permute.xlu0 %938
        %v941 = vsel %vm693, %v927, -1e+30
        %v942 = vsel %vm694, %v931, -1e+30
        %v943 = vsel %vm695, %v935, -1e+30
        %v944 = vsel %vm696, %v939, -1e+30
        %v945 = vsel %vm812, %v941, -inf
        %v946 = vsel %vm812, %v942, -inf
        %v947 = vsel %vm812, %v943, -inf
        %v948 = vsel %vm812, %v944, -inf
        %v949 = vmax.f32 %v945, %v946
        %v950 = vmax.f32 %v947, %v948
        %v951 = vmax.f32 %v949, %v950
        %v952 = vrot.slane %v951, 4
        %v953 = vmax.f32 %v951, %v952
        %v954 = vrot.slane %v953, 2
        %v955 = vmax.f32 %v953, %v954
        %v956 = vrot.slane %v955, 1
        %v957 = vmax.f32 %v955, %v956
        %958 = vset.pattern.permute.xlu0 5
        %959 = vperm.xlu0 %958, %v784
        %v960 = vpop.permute.xlu0 %959
        %962 = vset.pattern.permute.xlu0 5
        %963 = vperm.xlu0 %962, %v785
        %v964 = vpop.permute.xlu0 %963
        %966 = vset.pattern.permute.xlu0 5
        %967 = vperm.xlu0 %966, %v786
        %v968 = vpop.permute.xlu0 %967
        %970 = vset.pattern.permute.xlu0 5
        %971 = vperm.xlu0 %970, %v787
        %v972 = vpop.permute.xlu0 %971
        %v974 = vsel %vm693, %v960, -1e+30
        %v975 = vsel %vm694, %v964, -1e+30
        %v976 = vsel %vm695, %v968, -1e+30
        %v977 = vsel %vm696, %v972, -1e+30
        %v978 = vsel %vm812, %v974, -inf
        %v979 = vsel %vm812, %v975, -inf
        %v980 = vsel %vm812, %v976, -inf
        %v981 = vsel %vm812, %v977, -inf
        %v982 = vmax.f32 %v978, %v979
        %v983 = vmax.f32 %v980, %v981
        %v984 = vmax.f32 %v982, %v983
        %v985 = vrot.slane %v984, 4
        %v986 = vmax.f32 %v984, %v985
        %v987 = vrot.slane %v986, 2
        %v988 = vmax.f32 %v986, %v987
        %v989 = vrot.slane %v988, 1
        %v990 = vmax.f32 %v988, %v989
        %991 = vset.pattern.permute.xlu0 6
        %992 = vperm.xlu0 %991, %v784
        %v993 = vpop.permute.xlu0 %992
        %995 = vset.pattern.permute.xlu0 6
        %996 = vperm.xlu0 %995, %v785
        %v997 = vpop.permute.xlu0 %996
        %999 = vset.pattern.permute.xlu0 6
        %1000 = vperm.xlu0 %999, %v786
        %v1001 = vpop.permute.xlu0 %1000
        %1003 = vset.pattern.permute.xlu0 6
        %1004 = vperm.xlu0 %1003, %v787
        %v1005 = vpop.permute.xlu0 %1004
        %v1007 = vsel %vm693, %v993, -1e+30
        %v1008 = vsel %vm694, %v997, -1e+30
        %v1009 = vsel %vm695, %v1001, -1e+30
        %v1010 = vsel %vm696, %v1005, -1e+30
        %v1011 = vsel %vm812, %v1007, -inf
        %v1012 = vsel %vm812, %v1008, -inf
        %v1013 = vsel %vm812, %v1009, -inf
        %v1014 = vsel %vm812, %v1010, -inf
        %v1015 = vmax.f32 %v1011, %v1012
        %v1016 = vmax.f32 %v1013, %v1014
        %v1017 = vmax.f32 %v1015, %v1016
        %v1018 = vrot.slane %v1017, 4
        %v1019 = vmax.f32 %v1017, %v1018
        %v1020 = vrot.slane %v1019, 2
        %v1021 = vmax.f32 %v1019, %v1020
        %v1022 = vrot.slane %v1021, 1
        %v1023 = vmax.f32 %v1021, %v1022
        %1024 = vset.pattern.permute.xlu0 7
        %1025 = vperm.xlu0 %1024, %v784
        %v1026 = vpop.permute.xlu0 %1025
        %1028 = vset.pattern.permute.xlu0 7
        %1029 = vperm.xlu0 %1028, %v785
        %v1030 = vpop.permute.xlu0 %1029
        %1032 = vset.pattern.permute.xlu0 7
        %1033 = vperm.xlu0 %1032, %v786
        %v1034 = vpop.permute.xlu0 %1033
        %1036 = vset.pattern.permute.xlu0 7
        %1037 = vperm.xlu0 %1036, %v787
        %v1038 = vpop.permute.xlu0 %1037
        %v1040 = vsel %vm693, %v1026, -1e+30
        %v1041 = vsel %vm694, %v1030, -1e+30
        %v1042 = vsel %vm695, %v1034, -1e+30
        %v1043 = vsel %vm696, %v1038, -1e+30
        %v1044 = vsel %vm812, %v1040, -inf
        %v1045 = vsel %vm812, %v1041, -inf
        %v1046 = vsel %vm812, %v1042, -inf
        %v1047 = vsel %vm812, %v1043, -inf
        %v1048 = vmax.f32 %v1044, %v1045
        %v1049 = vmax.f32 %v1046, %v1047
        %v1050 = vmax.f32 %v1048, %v1049
        %v1051 = vrot.slane %v1050, 4
        %v1052 = vmax.f32 %v1050, %v1051
        %v1053 = vrot.slane %v1052, 2
        %v1054 = vmax.f32 %v1052, %v1053
        %v1055 = vrot.slane %v1054, 1
        %v1056 = vmax.f32 %v1054, %v1055
        %vm1057 = vcmask 1040384
        %v1058 = vsel %vm1057, %v825, %v858
        %vm1059 = vcmask 1041408
        %v1060 = vsel %vm1059, %v1058, %v891
        %vm1061 = vcmask 1042432
        %v1062 = vsel %vm1061, %v1060, %v924
        %vm1063 = vcmask 1043456
        %v1064 = vsel %vm1063, %v1062, %v957
        %vm1065 = vcmask 1044480
        %v1066 = vsel %vm1065, %v1064, %v990
        %vm1067 = vcmask 1045504
        %v1068 = vsel %vm1067, %v1066, %v1023
        %vm1069 = vcmask 1046528
        %v1070 = vsel %vm1069, %v1068, %v1056
        %v1071 = vld [vmem:[#allocation2] sm:$0xff]
        %v1072 = vmax.f32 %v1071, %v1070
        %v1073 = vsub.f32 %v1071, %v1072
        %v1074 = vmul.f32 %v1073, 1.442695
        %v1075 = vpow.pop %v1074
        %1076 = vst.msk [vmem:[#allocation2] sm:$0xff] %vm812, %v1072
        %v1078 = vsel %vm812, %v701, 0
        %v1081 = vsel %vm812, %v702, 0
        %v1084 = vsel %vm812, %v703, 0
        %v1087 = vsel %vm812, %v704, 0
        %v1090 = vsel %vm812, %v1072, 0
        %1092 = vmatprep.subr.mxu0 0.0
        %1093 = vmatpush1.xpose.msra.mxu0 %v1090
        %1094 = vmatprep.subr.mxu0 0.0
        %1095 = vmatpush1.xpose.msra.mxu0 0.0
        %1096 = vmatprep.subr.mxu0 0.0
        %1097 = vmatpush1.xpose.msra.mxu0 0.0
        %1098 = vmatprep.subr.mxu0 0.0
        %1099 = vmatpush1.xpose.msra.mxu0 0.0
        %1100 = vmatprep.subr.mxu0 0.0
        %1101 = vmatpush1.xpose.msra.mxu0 0.0
        %1102 = vmatprep.subr.mxu0 0.0
        %1103 = vmatpush1.xpose.msra.mxu0 0.0
        %1104 = vmatprep.subr.mxu0 0.0
        %1105 = vmatpush1.xpose.msra.mxu0 0.0
        %1106 = vmatprep.subr.mxu0 0.0
        %1107 = vmatpush1.xpose.msra.mxu0 0.0
        %1108 = vmatprep.subr.mxu0 0.0
        %1109 = vmatpush1.xpose.msra.mxu0 0.0
        %1110 = vmatprep.subr.mxu0 0.0
        %1111 = vmatpush1.xpose.msra.mxu0 0.0
        %1112 = vmatprep.subr.mxu0 0.0
        %1113 = vmatpush1.xpose.msra.mxu0 0.0
        %1114 = vmatprep.subr.mxu0 0.0
        %1115 = vmatpush1.xpose.msra.mxu0 0.0
        %1116 = vmatprep.subr.mxu0 0.0
        %1117 = vmatpush1.xpose.msra.mxu0 0.0
        %1118 = vmatprep.subr.mxu0 0.0
        %1119 = vmatpush1.xpose.msra.mxu0 0.0
        %1120 = vmatprep.subr.mxu0 0.0
        %1121 = vmatpush1.xpose.msra.mxu0 0.0
        %1122 = vmatprep.subr.mxu0 0.0
        %1123 = vmatpush1.xpose.msra.mxu0 0.0
        %1124 = vmatprep.subr.mxu0 0.0
        %1125 = vmatpush1.xpose.msra.mxu0 0.0
        %1126 = vmatprep.subr.mxu0 0.0
        %1127 = vmatpush1.xpose.msra.mxu0 0.0
        %1128 = vmatprep.subr.mxu0 0.0
        %1129 = vmatpush1.xpose.msra.mxu0 0.0
        %1130 = vmatprep.subr.mxu0 0.0
        %1131 = vmatpush1.xpose.msra.mxu0 0.0
        %1132 = vmatprep.subr.mxu0 0.0
        %1133 = vmatpush1.xpose.msra.mxu0 0.0
        %1134 = vmatprep.subr.mxu0 0.0
        %1135 = vmatpush1.xpose.msra.mxu0 0.0
        %1136 = vmatprep.subr.mxu0 0.0
        %1137 = vmatpush1.xpose.msra.mxu0 0.0
        %1138 = vmatprep.subr.mxu0 0.0
        %1139 = vmatpush1.xpose.msra.mxu0 0.0
        %1140 = vmatprep.subr.mxu0 0.0
        %1141 = vmatpush1.xpose.msra.mxu0 0.0
        %1142 = vmatprep.subr.mxu0 0.0
        %1143 = vmatpush1.xpose.msra.mxu0 0.0
        %1144 = vmatprep.subr.mxu0 0.0
        %1145 = vmatpush1.xpose.msra.mxu0 0.0
        %1146 = vmatprep.subr.mxu0 0.0
        %1147 = vmatpush1.xpose.msra.mxu0 0.0
        %1148 = vmatprep.subr.mxu0 0.0
        %1149 = vmatpush1.xpose.msra.mxu0 0.0
        %1150 = vmatprep.subr.mxu0 0.0
        %1151 = vmatpush1.xpose.msra.mxu0 0.0
        %1152 = vmatprep.subr.mxu0 0.0
        %1153 = vmatpush1.xpose.msra.mxu0 0.0
        %1154 = vmatprep.subr.mxu0 0.0
        %1155 = vmatpush1.xpose.msra.mxu0 0.0
        %1156 = vmatprep.mubr.f32.mxu0 0.0
        %1157 = vmatmul.mubr.f32.gmra.mrb[0].mxu0 %v1078
        %v1158 = vpop.f32.mrb[0].mxu0
        %v1159 = vadd.f32 0.0, %v1158
        %v1160 = vpop.f32.mrb[0].mxu0
        %1161 = vmatprep.mubr.f32.mxu0 0.0
        %1162 = vmatmul.mubr.f32.gmra.mrb[0].mxu0 %v1081
        %v1163 = vpop.f32.mrb[0].mxu0
        %v1164 = vadd.f32 0.0, %v1163
        %v1165 = vpop.f32.mrb[0].mxu0
        %1166 = vmatprep.mubr.f32.mxu0 0.0
        %1167 = vmatmul.mubr.f32.gmra.mrb[0].mxu0 %v1084
        %v1168 = vpop.f32.mrb[0].mxu0
        %v1169 = vadd.f32 0.0, %v1168
        %v1170 = vpop.f32.mrb[0].mxu0
        %1171 = vmatprep.mubr.f32.mxu0 0.0
        %1172 = vmatmul.mubr.f32.gmra.mrb[0].mxu0 %v1087
        %v1173 = vpop.f32.mrb[0].mxu0
        %v1174 = vadd.f32 0.0, %v1173
        %v1175 = vpop.f32.mrb[0].mxu0
        %1176 = vdwg.mxu0
        %v1177 = vsub.f32 %v784, %v1159
        %v1178 = vsub.f32 %v785, %v1164
        %v1179 = vsub.f32 %v786, %v1169
        %v1180 = vsub.f32 %v787, %v1174
        %v1181 = vmul.f32 %v1177, 1.442695
        %v1182 = vpow.pop %v1181
        %v1183 = vmul.f32 %v1178, 1.442695
        %v1184 = vpow.pop %v1183
        %v1185 = vmul.f32 %v1179, 1.442695
        %v1186 = vpow.pop %v1185
        %v1187 = vmul.f32 %v1180, 1.442695
        %v1188 = vpow.pop %v1187
        %v1189 = vld [vmem:[#allocation3] sm:$0xff]
        %v1190 = vmul.f32 %v1075, %v1189
        %1191 = vxpose.xlu0.b32.start [1/16] %v1182, 128
        %1192 = vxpose.xlu0.b32.cont [2/16] %v1184, 128
        %1193 = vxpose.xlu0.b32.cont [3/16] %v1186, 128
        %1194 = vxpose.xlu0.b32.cont [4/16] %v1188, 128
        %1195 = vxpose.xlu0.b32.cont [5/16] 0.0, 128
        %1196 = vxpose.xlu0.b32.cont [6/16] 0.0, 128
        %1197 = vxpose.xlu0.b32.cont [7/16] 0.0, 128
        %1198 = vxpose.xlu0.b32.cont [8/16] 0.0, 128
        %1199 = vxpose.xlu0.b32.cont [9/16] 0.0, 128
        %1200 = vxpose.xlu0.b32.cont [10/16] 0.0, 128
        %1201 = vxpose.xlu0.b32.cont [11/16] 0.0, 128
        %1202 = vxpose.xlu0.b32.cont [12/16] 0.0, 128
        %1203 = vxpose.xlu0.b32.cont [13/16] 0.0, 128
        %1204 = vxpose.xlu0.b32.cont [14/16] 0.0, 128
        %1205 = vxpose.xlu0.b32.cont [15/16] 0.0, 128
        %1206 = vxpose.xlu0.b32.end [16/16] 0.0, 128
        %v1207 = vpop.trf.xlu0
        %v1208 = vpop.trf.xlu0
        %v1209 = vpop.trf.xlu0
        %v1210 = vpop.trf.xlu0
        %v1211 = vpop.trf.xlu0
        %v1212 = vpop.trf.xlu0
        %v1213 = vpop.trf.xlu0
        %v1214 = vpop.trf.xlu0
        %v1215 = vpop.trf.xlu0
        %v1216 = vpop.trf.xlu0
        %v1217 = vpop.trf.xlu0
        %v1218 = vpop.trf.xlu0
        %v1219 = vpop.trf.xlu0
        %v1220 = vpop.trf.xlu0
        %v1221 = vpop.trf.xlu0
        %v1222 = vpop.trf.xlu0
        %vm1223 = vcmask 261120
        %v1225 = vsel %vm1223, %v1207, 0
        %1227 = vmatprep.subr.mxu0 0.0
        %1228 = vmatpush1.msra.mxu0 %v701
        %1229 = vmatprep.subr.mxu0 0.0
        %1230 = vmatpush1.msra.mxu0 %v702
        %1231 = vmatprep.subr.mxu0 0.0
        %1232 = vmatpush1.msra.mxu0 %v703
        %1233 = vmatprep.subr.mxu0 0.0
        %1234 = vmatpush1.msra.mxu0 %v704
        %1235 = vmatprep.subr.mxu0 0.0
        %1236 = vmatpush1.msra.mxu0 0.0
        %1237 = vmatprep.subr.mxu0 0.0
        %1238 = vmatpush1.msra.mxu0 0.0
        %1239 = vmatprep.subr.mxu0 0.0
        %1240 = vmatpush1.msra.mxu0 0.0
        %1241 = vmatprep.subr.mxu0 0.0
        %1242 = vmatpush1.msra.mxu0 0.0
        %1243 = vmatprep.subr.mxu0 0.0
        %1244 = vmatpush1.msra.mxu0 0.0
        %1245 = vmatprep.subr.mxu0 0.0
        %1246 = vmatpush1.msra.mxu0 0.0
        %1247 = vmatprep.subr.mxu0 0.0
        %1248 = vmatpush1.msra.mxu0 0.0
        %1249 = vmatprep.subr.mxu0 0.0
        %1250 = vmatpush1.msra.mxu0 0.0
        %1251 = vmatprep.subr.mxu0 0.0
        %1252 = vmatpush1.msra.mxu0 0.0
        %1253 = vmatprep.subr.mxu0 0.0
        %1254 = vmatpush1.msra.mxu0 0.0
        %1255 = vmatprep.subr.mxu0 0.0
        %1256 = vmatpush1.msra.mxu0 0.0
        %1257 = vmatprep.subr.mxu0 0.0
        %1258 = vmatpush1.msra.mxu0 0.0
        %1259 = vmatprep.subr.mxu0 0.0
        %1260 = vmatpush1.msra.mxu0 0.0
        %1261 = vmatprep.subr.mxu0 0.0
        %1262 = vmatpush1.msra.mxu0 0.0
        %1263 = vmatprep.subr.mxu0 0.0
        %1264 = vmatpush1.msra.mxu0 0.0
        %1265 = vmatprep.subr.mxu0 0.0
        %1266 = vmatpush1.msra.mxu0 0.0
        %1267 = vmatprep.subr.mxu0 0.0
        %1268 = vmatpush1.msra.mxu0 0.0
        %1269 = vmatprep.subr.mxu0 0.0
        %1270 = vmatpush1.msra.mxu0 0.0
        %1271 = vmatprep.subr.mxu0 0.0
        %1272 = vmatpush1.msra.mxu0 0.0
        %1273 = vmatprep.subr.mxu0 0.0
        %1274 = vmatpush1.msra.mxu0 0.0
        %1275 = vmatprep.subr.mxu0 0.0
        %1276 = vmatpush1.msra.mxu0 0.0
        %1277 = vmatprep.subr.mxu0 0.0
        %1278 = vmatpush1.msra.mxu0 0.0
        %1279 = vmatprep.subr.mxu0 0.0
        %1280 = vmatpush1.msra.mxu0 0.0
        %1281 = vmatprep.subr.mxu0 0.0
        %1282 = vmatpush1.msra.mxu0 0.0
        %1283 = vmatprep.subr.mxu0 0.0
        %1284 = vmatpush1.msra.mxu0 0.0
        %1285 = vmatprep.subr.mxu0 0.0
        %1286 = vmatpush1.msra.mxu0 0.0
        %1287 = vmatprep.subr.mxu0 0.0
        %1288 = vmatpush1.msra.mxu0 0.0
        %1289 = vmatprep.subr.mxu0 0.0
        %1290 = vmatpush1.msra.mxu0 0.0
        %1291 = vmatprep.mubr.f32.mxu0 0.0
        %1292 = vmatmul.mubr.f32.gmra.mrb[0].mxu0 %v1225
        %v1293 = vpop.f32.mrb[0].mxu0
        %v1294 = vadd.f32 0.0, %v1293
        %v1295 = vpop.f32.mrb[0].mxu0
        %1296 = vdwg.mxu0
        %v1297 = vadd.f32 %v1190, %v1294
        %1298 = vst.msk [vmem:[#allocation3] sm:$0xff] %vm812, %v1297
        %v1299 = vld [vmem:[#allocation4] sm:$0x1]
        %v1300 = vsel %vm812, %v701, 0.0
        %v1301 = vsel %vm812, %v702, 0.0
        %v1302 = vadd.f32 %v1300, %v1301
        %v1303 = vsel %vm812, %v703, 0.0
        %v1304 = vadd.f32 %v1302, %v1303
        %v1305 = vsel %vm812, %v704, 0.0
        %v1306 = vadd.f32 %v1304, %v1305
        %v1307 = vrot.slane %v1306, 4
        %v1308 = vadd.f32 %v1306, %v1307
        %v1309 = vrot.slane %v1308, 2
        %v1310 = vadd.f32 %v1308, %v1309
        %v1311 = vrot.slane %v1310, 1
        %v1312 = vadd.f32 %v1310, %v1311
        %v1313 = vadd.f32 %v1299, %v1312
        %vm1314 = vcmask 122880
        %1315 = vst.msk [vmem:[#allocation4] sm:$0x1] %vm1314, %v1313
        %1316 = vxpose.xlu0.b32.start [1/16] %v1075, 128
        %1317 = vxpose.xlu0.b32.cont [2/16] 0.0, 128
        %1318 = vxpose.xlu0.b32.cont [3/16] 0.0, 128
        %1319 = vxpose.xlu0.b32.cont [4/16] 0.0, 128
        %1320 = vxpose.xlu0.b32.cont [5/16] 0.0, 128
        %1321 = vxpose.xlu0.b32.cont [6/16] 0.0, 128
        %1322 = vxpose.xlu0.b32.cont [7/16] 0.0, 128
        %1323 = vxpose.xlu0.b32.cont [8/16] 0.0, 128
        %1324 = vxpose.xlu0.b32.cont [9/16] 0.0, 128
        %1325 = vxpose.xlu0.b32.cont [10/16] 0.0, 128
        %1326 = vxpose.xlu0.b32.cont [11/16] 0.0, 128
        %1327 = vxpose.xlu0.b32.cont [12/16] 0.0, 128
        %1328 = vxpose.xlu0.b32.cont [13/16] 0.0, 128
        %1329 = vxpose.xlu0.b32.cont [14/16] 0.0, 128
        %1330 = vxpose.xlu0.b32.cont [15/16] 0.0, 128
        %1331 = vxpose.xlu0.b32.end [16/16] 0.0, 128
        %v1332 = vpop.trf.xlu0
        %v1333 = vpop.trf.xlu0
        %v1334 = vpop.trf.xlu0
        %v1335 = vpop.trf.xlu0
        %v1336 = vpop.trf.xlu0
        %v1337 = vpop.trf.xlu0
        %v1338 = vpop.trf.xlu0
        %v1339 = vpop.trf.xlu0
        %v1340 = vpop.trf.xlu0
        %v1341 = vpop.trf.xlu0
        %v1342 = vpop.trf.xlu0
        %v1343 = vpop.trf.xlu0
        %v1344 = vpop.trf.xlu0
        %v1345 = vpop.trf.xlu0
        %v1346 = vpop.trf.xlu0
        %v1347 = vpop.trf.xlu0
        %vm1348 = vcmask 64512
        %v1350 = vsel %vm1348, %v1332, 0
        %v1353 = vsel %vm1348, %v1333, 0
        %1355 = vmatprep.subr.mxu0 %v678
        %1356 = vmatpush1.msra.mxu0 %v677
        %1357 = vmatprep.subr.mxu0 0.0
        %1358 = vmatpush1.msra.mxu0 0.0
        %1359 = vmatprep.subr.mxu0 0.0
        %1360 = vmatpush1.msra.mxu0 0.0
        %1361 = vmatprep.subr.mxu0 0.0
        %1362 = vmatpush1.msra.mxu0 0.0
        %1363 = vmatprep.subr.mxu0 0.0
        %1364 = vmatpush1.msra.mxu0 0.0
        %1365 = vmatprep.subr.mxu0 0.0
        %1366 = vmatpush1.msra.mxu0 0.0
        %1367 = vmatprep.subr.mxu0 0.0
        %1368 = vmatpush1.msra.mxu0 0.0
        %1369 = vmatprep.subr.mxu0 0.0
        %1370 = vmatpush1.msra.mxu0 0.0
        %1371 = vmatprep.subr.mxu0 0.0
        %1372 = vmatpush1.msra.mxu0 0.0
        %1373 = vmatprep.subr.mxu0 0.0
        %1374 = vmatpush1.msra.mxu0 0.0
        %1375 = vmatprep.subr.mxu0 0.0
        %1376 = vmatpush1.msra.mxu0 0.0
        %1377 = vmatprep.subr.mxu0 0.0
        %1378 = vmatpush1.msra.mxu0 0.0
        %1379 = vmatprep.subr.mxu0 0.0
        %1380 = vmatpush1.msra.mxu0 0.0
        %1381 = vmatprep.subr.mxu0 0.0
        %1382 = vmatpush1.msra.mxu0 0.0
        %1383 = vmatprep.subr.mxu0 0.0
        %1384 = vmatpush1.msra.mxu0 0.0
        %1385 = vmatprep.subr.mxu0 0.0
        %1386 = vmatpush1.msra.mxu0 0.0
        %1387 = vmatprep.subr.mxu0 0.0
        %1388 = vmatpush1.msra.mxu0 0.0
        %1389 = vmatprep.subr.mxu0 0.0
        %1390 = vmatpush1.msra.mxu0 0.0
        %1391 = vmatprep.subr.mxu0 0.0
        %1392 = vmatpush1.msra.mxu0 0.0
        %1393 = vmatprep.subr.mxu0 0.0
        %1394 = vmatpush1.msra.mxu0 0.0
        %1395 = vmatprep.subr.mxu0 0.0
        %1396 = vmatpush1.msra.mxu0 0.0
        %1397 = vmatprep.subr.mxu0 0.0
        %1398 = vmatpush1.msra.mxu0 0.0
        %1399 = vmatprep.subr.mxu0 0.0
        %1400 = vmatpush1.msra.mxu0 0.0
        %1401 = vmatprep.subr.mxu0 0.0
        %1402 = vmatpush1.msra.mxu0 0.0
        %1403 = vmatprep.subr.mxu0 0.0
        %1404 = vmatpush1.msra.mxu0 0.0
        %1405 = vmatprep.subr.mxu0 0.0
        %1406 = vmatpush1.msra.mxu0 0.0
        %1407 = vmatprep.subr.mxu0 0.0
        %1408 = vmatpush1.msra.mxu0 0.0
        %1409 = vmatprep.subr.mxu0 0.0
        %1410 = vmatpush1.msra.mxu0 0.0
        %1411 = vmatprep.subr.mxu0 0.0
        %1412 = vmatpush1.msra.mxu0 0.0
        %1413 = vmatprep.subr.mxu0 0.0
        %1414 = vmatpush1.msra.mxu0 0.0
        %1415 = vmatprep.subr.mxu0 0.0
        %1416 = vmatpush1.msra.mxu0 0.0
        %1417 = vmatprep.subr.mxu0 0.0
        %1418 = vmatpush1.msra.mxu0 0.0
        %1419 = vmatprep.mubr.f32.mxu0 0.0
        %1420 = vmatmul.mubr.f32.gmra.mrb[0].mxu0 %v1350
        %v1421 = vpop.f32.mrb[0].mxu0
        %v1422 = vadd.f32 0.0, %v1421
        %v1423 = vpop.f32.mrb[0].mxu0
        %v1424 = vadd.f32 0.0, %v1423
        %1425 = vmatprep.mubr.f32.mxu0 0.0
        %1426 = vmatmul.mubr.f32.gmra.mrb[0].mxu0 %v1353
        %v1427 = vpop.f32.mrb[0].mxu0
        %v1428 = vadd.f32 0.0, %v1427
        %v1429 = vpop.f32.mrb[0].mxu0
        %v1430 = vadd.f32 0.0, %v1429
        %1431 = vdwg.mxu0
        %v1433 = vsel %vm1348, %v1182, 0
        %v1436 = vsel %vm1348, %v1184, 0
        %v1439 = vsel %vm1348, %v1186, 0
        %v1442 = vsel %vm1348, %v1188, 0
        %1444 = vmatprep.subr.mxu0 %v678
        %1445 = vmatpush1.msra.mxu0 %v677
        %1446 = vmatprep.subr.mxu0 0.0
        %1447 = vmatpush1.msra.mxu0 0.0
        %1448 = vmatprep.subr.mxu0 0.0
        %1449 = vmatpush1.msra.mxu0 0.0
        %1450 = vmatprep.subr.mxu0 0.0
        %1451 = vmatpush1.msra.mxu0 0.0
        %1452 = vmatprep.subr.mxu0 0.0
        %1453 = vmatpush1.msra.mxu0 0.0
        %1454 = vmatprep.subr.mxu0 0.0
        %1455 = vmatpush1.msra.mxu0 0.0
        %1456 = vmatprep.subr.mxu0 0.0
        %1457 = vmatpush1.msra.mxu0 0.0
        %1458 = vmatprep.subr.mxu0 0.0
        %1459 = vmatpush1.msra.mxu0 0.0
        %1460 = vmatprep.subr.mxu0 0.0
        %1461 = vmatpush1.msra.mxu0 0.0
        %1462 = vmatprep.subr.mxu0 0.0
        %1463 = vmatpush1.msra.mxu0 0.0
        %1464 = vmatprep.subr.mxu0 0.0
        %1465 = vmatpush1.msra.mxu0 0.0
        %1466 = vmatprep.subr.mxu0 0.0
        %1467 = vmatpush1.msra.mxu0 0.0
        %1468 = vmatprep.subr.mxu0 0.0
        %1469 = vmatpush1.msra.mxu0 0.0
        %1470 = vmatprep.subr.mxu0 0.0
        %1471 = vmatpush1.msra.mxu0 0.0
        %1472 = vmatprep.subr.mxu0 0.0
        %1473 = vmatpush1.msra.mxu0 0.0
        %1474 = vmatprep.subr.mxu0 0.0
        %1475 = vmatpush1.msra.mxu0 0.0
        %1476 = vmatprep.subr.mxu0 0.0
        %1477 = vmatpush1.msra.mxu0 0.0
        %1478 = vmatprep.subr.mxu0 0.0
        %1479 = vmatpush1.msra.mxu0 0.0
        %1480 = vmatprep.subr.mxu0 0.0
        %1481 = vmatpush1.msra.mxu0 0.0
        %1482 = vmatprep.subr.mxu0 0.0
        %1483 = vmatpush1.msra.mxu0 0.0
        %1484 = vmatprep.subr.mxu0 0.0
        %1485 = vmatpush1.msra.mxu0 0.0
        %1486 = vmatprep.subr.mxu0 0.0
        %1487 = vmatpush1.msra.mxu0 0.0
        %1488 = vmatprep.subr.mxu0 0.0
        %1489 = vmatpush1.msra.mxu0 0.0
        %1490 = vmatprep.subr.mxu0 0.0
        %1491 = vmatpush1.msra.mxu0 0.0
        %1492 = vmatprep.subr.mxu0 0.0
        %1493 = vmatpush1.msra.mxu0 0.0
        %1494 = vmatprep.subr.mxu0 0.0
        %1495 = vmatpush1.msra.mxu0 0.0
        %1496 = vmatprep.subr.mxu0 0.0
        %1497 = vmatpush1.msra.mxu0 0.0
        %1498 = vmatprep.subr.mxu0 0.0
        %1499 = vmatpush1.msra.mxu0 0.0
        %1500 = vmatprep.subr.mxu0 0.0
        %1501 = vmatpush1.msra.mxu0 0.0
        %1502 = vmatprep.subr.mxu0 0.0
        %1503 = vmatpush1.msra.mxu0 0.0
        %1504 = vmatprep.subr.mxu0 0.0
        %1505 = vmatpush1.msra.mxu0 0.0
        %1506 = vmatprep.subr.mxu0 0.0
        %1507 = vmatpush1.msra.mxu0 0.0
        %1508 = vmatprep.mubr.f32.mxu0 0.0
        %1509 = vmatmul.mubr.f32.gmra.mrb[0].mxu0 %v1433
        %v1510 = vpop.f32.mrb[0].mxu0
        %v1511 = vadd.f32 0.0, %v1510
        %v1512 = vpop.f32.mrb[0].mxu0
        %v1513 = vadd.f32 0.0, %v1512
        %1514 = vmatprep.mubr.f32.mxu0 0.0
        %1515 = vmatmul.mubr.f32.gmra.mrb[0].mxu0 %v1436
        %v1516 = vpop.f32.mrb[0].mxu0
        %v1517 = vadd.f32 0.0, %v1516
        %v1518 = vpop.f32.mrb[0].mxu0
        %v1519 = vadd.f32 0.0, %v1518
        %1520 = vmatprep.mubr.f32.mxu0 0.0
        %1521 = vmatmul.mubr.f32.gmra.mrb[0].mxu0 %v1439
        %v1522 = vpop.f32.mrb[0].mxu0
        %v1523 = vadd.f32 0.0, %v1522
        %v1524 = vpop.f32.mrb[0].mxu0
        %v1525 = vadd.f32 0.0, %v1524
        %1526 = vmatprep.mubr.f32.mxu0 0.0
        %1527 = vmatmul.mubr.f32.gmra.mrb[0].mxu0 %v1442
        %v1528 = vpop.f32.mrb[0].mxu0
        %v1529 = vadd.f32 0.0, %v1528
        %v1530 = vpop.f32.mrb[0].mxu0
        %v1531 = vadd.f32 0.0, %v1530
        %1532 = vdwg.mxu0
        %v1533 = vmul.f32 %v1511, %v619
        %v1534 = vmul.f32 %v1513, %v620
        %v1535 = vmul.f32 %v1517, %v623
        %v1536 = vmul.f32 %v1519, %v624
        %v1537 = vmul.f32 %v1523, %v627
        %v1538 = vmul.f32 %v1525, %v628
        %v1539 = vmul.f32 %v1529, %v631
        %v1540 = vmul.f32 %v1531, %v632
        %v1541 = vpack.c.bf16 %v1535, %v1533
        %v1542 = vpack.c.bf16 %v1536, %v1534
        %v1543 = vpack.c.bf16 %v1539, %v1537
        %v1544 = vpack.c.bf16 %v1540, %v1538
        %v1545 = vld [vmem:[#allocation5] sm:$0xff]
        %v1546 = vld [vmem:[#allocation5 + $0x8] sm:$0xff]
        %v1547 = vld [vmem:[#allocation5 + $0x10] sm:$0xff]
        %v1548 = vld [vmem:[#allocation5 + $0x18] sm:$0xff]
        %v1549 = vmul.f32 %v1422, %v1545
        %v1550 = vmul.f32 %v1424, %v1546
        %v1551 = vmul.f32 %v1428, %v1547
        %v1552 = vmul.f32 %v1430, %v1548
        %1553 = vxpose.xlu0.c.b16.start [1/8] %v705, 128
        %1554 = vxpose.xlu0.c.b16.cont [2/8] %v706, 128
        %1555 = vxpose.xlu0.c.b16.cont [3/8] 0, 128
        %1556 = vxpose.xlu0.c.b16.cont [4/8] 0, 128
        %1557 = vxpose.xlu0.c.b16.cont [5/8] 0, 128
        %1558 = vxpose.xlu0.c.b16.cont [6/8] 0, 128
        %1559 = vxpose.xlu0.c.b16.cont [7/8] 0, 128
        %1560 = vxpose.xlu0.c.b16.end [8/8] 0, 128
        %v1561 = vpop.trf.xlu0
        %v1562 = vpop.trf.xlu0
        %v1563 = vpop.trf.xlu0
        %v1564 = vpop.trf.xlu0
        %v1565 = vpop.trf.xlu0
        %v1566 = vpop.trf.xlu0
        %v1567 = vpop.trf.xlu0
        %v1568 = vpop.trf.xlu0
        %v1570 = vsel %vm1223, %v1561, 0
        %1572 = vmatprep.subr.bf16.mxu0 %v1542
        %1573 = vmatpush1.bf16.msra.mxu0 %v1541
        %1574 = vmatprep.subr.bf16.mxu0 %v1544
        %1575 = vmatpush1.bf16.msra.mxu0 %v1543
        %1576 = vmatprep.subr.bf16.mxu0 0
        %1577 = vmatpush1.bf16.msra.mxu0 0
        %1578 = vmatprep.subr.bf16.mxu0 0
        %1579 = vmatpush1.bf16.msra.mxu0 0
        %1580 = vmatprep.subr.bf16.mxu0 0
        %1581 = vmatpush1.bf16.msra.mxu0 0
        %1582 = vmatprep.subr.bf16.mxu0 0
        %1583 = vmatpush1.bf16.msra.mxu0 0
        %1584 = vmatprep.subr.bf16.mxu0 0
        %1585 = vmatpush1.bf16.msra.mxu0 0
        %1586 = vmatprep.subr.bf16.mxu0 0
        %1587 = vmatpush1.bf16.msra.mxu0 0
        %1588 = vmatprep.subr.bf16.mxu0 0
        %1589 = vmatpush1.bf16.msra.mxu0 0
        %1590 = vmatprep.subr.bf16.mxu0 0
        %1591 = vmatpush1.bf16.msra.mxu0 0
        %1592 = vmatprep.subr.bf16.mxu0 0
        %1593 = vmatpush1.bf16.msra.mxu0 0
        %1594 = vmatprep.subr.bf16.mxu0 0
        %1595 = vmatpush1.bf16.msra.mxu0 0
        %1596 = vmatprep.subr.bf16.mxu0 0
        %1597 = vmatpush1.bf16.msra.mxu0 0
        %1598 = vmatprep.subr.bf16.mxu0 0
        %1599 = vmatpush1.bf16.msra.mxu0 0
        %1600 = vmatprep.subr.bf16.mxu0 0
        %1601 = vmatpush1.bf16.msra.mxu0 0
        %1602 = vmatprep.subr.bf16.mxu0 0
        %1603 = vmatpush1.bf16.msra.mxu0 0
        %1604 = vmatprep.mubr.bf16.mxu0 0
        %1605 = vmatmul.mubr.bf16.gmra.mrb[0].mxu0 %v1570
        %v1606 = vpop.f32.mrb[0].mxu0
        %v1607 = vadd.f32 0.0, %v1606
        %v1608 = vpop.f32.mrb[0].mxu0
        %v1609 = vadd.f32 0.0, %v1608
        %v1610 = vpop.f32.mrb[0].mxu0
        %v1611 = vadd.f32 0.0, %v1610
        %v1612 = vpop.f32.mrb[0].mxu0
        %v1613 = vadd.f32 0.0, %v1612
        %1614 = vdwg.mxu0
        %v1615 = vadd.f32 %v1549, %v1607
        %v1616 = vadd.f32 %v1550, %v1609
        %v1617 = vadd.f32 %v1551, %v1611
        %v1618 = vadd.f32 %v1552, %v1613
        %1619 = vst [vmem:[#allocation5] sm:$0xff] %v1615
        %1620 = vst [vmem:[#allocation5 + $0x8] sm:$0xff] %v1616
        %1621 = vst [vmem:[#allocation5 + $0x10] sm:$0xff] %v1617
        %1622 = vst [vmem:[#allocation5 + $0x18] sm:$0xff] %v1618
        // Predicated region
        $region105: #{gan_module_forward.5} parent=59 // pred_check
          %p1623 = pneg %p604
        $region106: #{gan_module_forward.5} parent=59 // pred_check_branch
          %1625 = sbr.rel (%p1623) target = $region108
        $region107: #{gan_module_forward.5} parent=59 // pred_region
          %v1626 = vld [vmem:[#allocation3] sm:$0xff]
          %v1627 = vld [vmem:[#allocation4] sm:$0x1]
          %v1628 = vmax.f32 %v1627, 1.0
          %v1630 = vlaneseq
          %v1631 = vshrl.u32 %v1630, 7
          %v1632 = vsub.s32 0, %v1631
          %v1633 = vrot.slane %v1628, %v1632
          %v1635 = vmul.f32 %v1626, %v1633
          %v1636 = vmax.f32 %v1635, 1e-20
          %v1637 = vrcp.pop %v1636
          %1638 = vxpose.xlu0.b32.start [1/16] %v1637, 128
          %1639 = vxpose.xlu0.b32.cont [2/16] 0.0, 128
          %1640 = vxpose.xlu0.b32.cont [3/16] 0.0, 128
          %1641 = vxpose.xlu0.b32.cont [4/16] 0.0, 128
          %1642 = vxpose.xlu0.b32.cont [5/16] 0.0, 128
          %1643 = vxpose.xlu0.b32.cont [6/16] 0.0, 128
          %1644 = vxpose.xlu0.b32.cont [7/16] 0.0, 128
          %1645 = vxpose.xlu0.b32.cont [8/16] 0.0, 128
          %1646 = vxpose.xlu0.b32.cont [9/16] 0.0, 128
          %1647 = vxpose.xlu0.b32.cont [10/16] 0.0, 128
          %1648 = vxpose.xlu0.b32.cont [11/16] 0.0, 128
          %1649 = vxpose.xlu0.b32.cont [12/16] 0.0, 128
          %1650 = vxpose.xlu0.b32.cont [13/16] 0.0, 128
          %1651 = vxpose.xlu0.b32.cont [14/16] 0.0, 128
          %1652 = vxpose.xlu0.b32.cont [15/16] 0.0, 128
          %1653 = vxpose.xlu0.b32.end [16/16] 0.0, 128
          %v1654 = vpop.trf.xlu0
          %v1655 = vpop.trf.xlu0
          %v1656 = vpop.trf.xlu0
          %v1657 = vpop.trf.xlu0
          %v1658 = vpop.trf.xlu0
          %v1659 = vpop.trf.xlu0
          %v1660 = vpop.trf.xlu0
          %v1661 = vpop.trf.xlu0
          %v1662 = vpop.trf.xlu0
          %v1663 = vpop.trf.xlu0
          %v1664 = vpop.trf.xlu0
          %v1665 = vpop.trf.xlu0
          %v1666 = vpop.trf.xlu0
          %v1667 = vpop.trf.xlu0
          %v1668 = vpop.trf.xlu0
          %v1669 = vpop.trf.xlu0
          %v1671 = vsel %vm1348, %v1654, 0
          %v1674 = vsel %vm1348, %v1655, 0
          %1676 = vmatprep.subr.mxu0 %v678
          %1677 = vmatpush1.msra.mxu0 %v677
          %1678 = vmatprep.subr.mxu0 0.0
          %1679 = vmatpush1.msra.mxu0 0.0
          %1680 = vmatprep.subr.mxu0 0.0
          %1681 = vmatpush1.msra.mxu0 0.0
          %1682 = vmatprep.subr.mxu0 0.0
          %1683 = vmatpush1.msra.mxu0 0.0
          %1684 = vmatprep.subr.mxu0 0.0
          %1685 = vmatpush1.msra.mxu0 0.0
          %1686 = vmatprep.subr.mxu0 0.0
          %1687 = vmatpush1.msra.mxu0 0.0
          %1688 = vmatprep.subr.mxu0 0.0
          %1689 = vmatpush1.msra.mxu0 0.0
          %1690 = vmatprep.subr.mxu0 0.0
          %1691 = vmatpush1.msra.mxu0 0.0
          %1692 = vmatprep.subr.mxu0 0.0
          %1693 = vmatpush1.msra.mxu0 0.0
          %1694 = vmatprep.subr.mxu0 0.0
          %1695 = vmatpush1.msra.mxu0 0.0
          %1696 = vmatprep.subr.mxu0 0.0
          %1697 = vmatpush1.msra.mxu0 0.0
          %1698 = vmatprep.subr.mxu0 0.0
          %1699 = vmatpush1.msra.mxu0 0.0
          %1700 = vmatprep.subr.mxu0 0.0
          %1701 = vmatpush1.msra.mxu0 0.0
          %1702 = vmatprep.subr.mxu0 0.0
          %1703 = vmatpush1.msra.mxu0 0.0
          %1704 = vmatprep.subr.mxu0 0.0
          %1705 = vmatpush1.msra.mxu0 0.0
          %1706 = vmatprep.subr.mxu0 0.0
          %1707 = vmatpush1.msra.mxu0 0.0
          %1708 = vmatprep.subr.mxu0 0.0
          %1709 = vmatpush1.msra.mxu0 0.0
          %1710 = vmatprep.subr.mxu0 0.0
          %1711 = vmatpush1.msra.mxu0 0.0
          %1712 = vmatprep.subr.mxu0 0.0
          %1713 = vmatpush1.msra.mxu0 0.0
          %1714 = vmatprep.subr.mxu0 0.0
          %1715 = vmatpush1.msra.mxu0 0.0
          %1716 = vmatprep.subr.mxu0 0.0
          %1717 = vmatpush1.msra.mxu0 0.0
          %1718 = vmatprep.subr.mxu0 0.0
          %1719 = vmatpush1.msra.mxu0 0.0
          %1720 = vmatprep.subr.mxu0 0.0
          %1721 = vmatpush1.msra.mxu0 0.0
          %1722 = vmatprep.subr.mxu0 0.0
          %1723 = vmatpush1.msra.mxu0 0.0
          %1724 = vmatprep.subr.mxu0 0.0
          %1725 = vmatpush1.msra.mxu0 0.0
          %1726 = vmatprep.subr.mxu0 0.0
          %1727 = vmatpush1.msra.mxu0 0.0
          %1728 = vmatprep.subr.mxu0 0.0
          %1729 = vmatpush1.msra.mxu0 0.0
          %1730 = vmatprep.subr.mxu0 0.0
          %1731 = vmatpush1.msra.mxu0 0.0
          %1732 = vmatprep.subr.mxu0 0.0
          %1733 = vmatpush1.msra.mxu0 0.0
          %1734 = vmatprep.subr.mxu0 0.0
          %1735 = vmatpush1.msra.mxu0 0.0
          %1736 = vmatprep.subr.mxu0 0.0
          %1737 = vmatpush1.msra.mxu0 0.0
          %1738 = vmatprep.subr.mxu0 0.0
          %1739 = vmatpush1.msra.mxu0 0.0
          %1740 = vmatprep.mubr.f32.mxu0 0.0
          %1741 = vmatmul.mubr.f32.gmra.mrb[0].mxu0 %v1671
          %v1742 = vpop.f32.mrb[0].mxu0
          %v1743 = vadd.f32 0.0, %v1742
          %v1744 = vpop.f32.mrb[0].mxu0
          %v1745 = vadd.f32 0.0, %v1744
          %1746 = vmatprep.mubr.f32.mxu0 0.0
          %1747 = vmatmul.mubr.f32.gmra.mrb[0].mxu0 %v1674
          %v1748 = vpop.f32.mrb[0].mxu0
          %v1749 = vadd.f32 0.0, %v1748
          %v1750 = vpop.f32.mrb[0].mxu0
          %v1751 = vadd.f32 0.0, %v1750
          %1752 = vdwg.mxu0
          %v1753 = vld [vmem:[#allocation5] sm:$0xff]
          %v1754 = vld [vmem:[#allocation5 + $0x8] sm:$0xff]
          %v1755 = vld [vmem:[#allocation5 + $0x10] sm:$0xff]
          %v1756 = vld [vmem:[#allocation5 + $0x18] sm:$0xff]
          %v1757 = vmul.f32 %v1753, %v1743
          %v1758 = vmul.f32 %v1754, %v1745
          %v1759 = vmul.f32 %v1755, %v1749
          %v1760 = vmul.f32 %v1756, %v1751
          %v1761 = vld [vmem:[#allocation15] sm:$0xff]
          %v1762 = vld [vmem:[#allocation15 + $0x8] sm:$0xff]
          %v1763 = vld [vmem:[#allocation15 + $0x10] sm:$0xff]
          %v1764 = vld [vmem:[#allocation15 + $0x18] sm:$0xff]
          %v1765 = vld [vmem:[#allocation15 + $0x20] sm:$0xff]
          %v1766 = vld [vmem:[#allocation15 + $0x28] sm:$0xff]
          %v1767 = vld [vmem:[#allocation15 + $0x30] sm:$0xff]
          %v1768 = vld [vmem:[#allocation15 + $0x38] sm:$0xff]
          %v1769 = vld [vmem:[#allocation15 + $0x40] sm:$0xff]
          %v1770 = vld [vmem:[#allocation15 + $0x48] sm:$0xff]
          %v1771 = vld [vmem:[#allocation15 + $0x50] sm:$0xff]
          %v1772 = vld [vmem:[#allocation15 + $0x58] sm:$0xff]
          %v1773 = vld [vmem:[#allocation15 + $0x60] sm:$0xff]
          %v1774 = vld [vmem:[#allocation15 + $0x68] sm:$0xff]
          %v1775 = vld [vmem:[#allocation15 + $0x70] sm:$0xff]
          %v1776 = vld [vmem:[#allocation15 + $0x78] sm:$0xff]
          %v1777 = vld [vmem:[#allocation15 + $0x80] sm:$0xff]
          %v1778 = vld [vmem:[#allocation15 + $0x88] sm:$0xff]
          %v1779 = vld [vmem:[#allocation15 + $0x90] sm:$0xff]
          %v1780 = vld [vmem:[#allocation15 + $0x98] sm:$0xff]
          %v1781 = vld [vmem:[#allocation15 + $0xa0] sm:$0xff]
          %v1782 = vld [vmem:[#allocation15 + $0xa8] sm:$0xff]
          %v1783 = vld [vmem:[#allocation15 + $0xb0] sm:$0xff]
          %v1784 = vld [vmem:[#allocation15 + $0xb8] sm:$0xff]
          %v1785 = vld [vmem:[#allocation15 + $0xc0] sm:$0xff]
          %v1786 = vld [vmem:[#allocation15 + $0xc8] sm:$0xff]
          %v1787 = vld [vmem:[#allocation15 + $0xd0] sm:$0xff]
          %v1788 = vld [vmem:[#allocation15 + $0xd8] sm:$0xff]
          %v1789 = vld [vmem:[#allocation15 + $0xe0] sm:$0xff]
          %v1790 = vld [vmem:[#allocation15 + $0xe8] sm:$0xff]
          %v1791 = vld [vmem:[#allocation15 + $0xf0] sm:$0xff]
          %v1792 = vld [vmem:[#allocation15 + $0xf8] sm:$0xff]
          %v1793 = vld [vmem:[#allocation15 + $0x100] sm:$0xff]
          %v1794 = vld [vmem:[#allocation15 + $0x108] sm:$0xff]
          %v1795 = vld [vmem:[#allocation15 + $0x110] sm:$0xff]
          %v1796 = vld [vmem:[#allocation15 + $0x118] sm:$0xff]
          %v1797 = vld [vmem:[#allocation15 + $0x120] sm:$0xff]
          %v1798 = vld [vmem:[#allocation15 + $0x128] sm:$0xff]
          %v1799 = vld [vmem:[#allocation15 + $0x130] sm:$0xff]
          %v1800 = vld [vmem:[#allocation15 + $0x138] sm:$0xff]
          %v1801 = vld [vmem:[#allocation15 + $0x140] sm:$0xff]
          %v1802 = vld [vmem:[#allocation15 + $0x148] sm:$0xff]
          %v1803 = vld [vmem:[#allocation15 + $0x150] sm:$0xff]
          %v1804 = vld [vmem:[#allocation15 + $0x158] sm:$0xff]
          %v1805 = vld [vmem:[#allocation15 + $0x160] sm:$0xff]
          %v1806 = vld [vmem:[#allocation15 + $0x168] sm:$0xff]
          %v1807 = vld [vmem:[#allocation15 + $0x170] sm:$0xff]
          %v1808 = vld [vmem:[#allocation15 + $0x178] sm:$0xff]
          %v1809 = vld [vmem:[#allocation15 + $0x180] sm:$0xff]
          %v1810 = vld [vmem:[#allocation15 + $0x188] sm:$0xff]
          %v1811 = vld [vmem:[#allocation15 + $0x190] sm:$0xff]
          %v1812 = vld [vmem:[#allocation15 + $0x198] sm:$0xff]
          %v1813 = vld [vmem:[#allocation15 + $0x1a0] sm:$0xff]
          %v1814 = vld [vmem:[#allocation15 + $0x1a8] sm:$0xff]
          %v1815 = vld [vmem:[#allocation15 + $0x1b0] sm:$0xff]
          %v1816 = vld [vmem:[#allocation15 + $0x1b8] sm:$0xff]
          %v1817 = vld [vmem:[#allocation15 + $0x1c0] sm:$0xff]
          %v1818 = vld [vmem:[#allocation15 + $0x1c8] sm:$0xff]
          %v1819 = vld [vmem:[#allocation15 + $0x1d0] sm:$0xff]
          %v1820 = vld [vmem:[#allocation15 + $0x1d8] sm:$0xff]
          %v1821 = vld [vmem:[#allocation15 + $0x1e0] sm:$0xff]
          %v1822 = vld [vmem:[#allocation15 + $0x1e8] sm:$0xff]
          %v1823 = vld [vmem:[#allocation15 + $0x1f0] sm:$0xff]
          %v1824 = vld [vmem:[#allocation15 + $0x1f8] sm:$0xff]
          %v1825 = vld [vmem:[#allocation17] sm:$0x3]
          %v1827 = vlaneseq
          %v1828 = vshrl.u32 %v1827, 7
          %v1829 = vsub.s32 0, %v1828
          %v1830 = vrot.slane %v1825, %v1829
          %v1831 = vlaneseq
          %v1832 = vshrl.u32 %v1831, 7
          %v1833 = vsub.s32 1, %v1832
          %v1834 = vrot.slane %v1825, %v1833
          %1837 = vmatprep.subr.mxu0 %v1762
          %1838 = vmatpush1.msra.mxu0 %v1761
          %1839 = vmatprep.subr.mxu0 %v1764
          %1840 = vmatpush1.msra.mxu0 %v1763
          %1841 = vmatprep.subr.mxu0 %v1766
          %1842 = vmatpush1.msra.mxu0 %v1765
          %1843 = vmatprep.subr.mxu0 %v1768
          %1844 = vmatpush1.msra.mxu0 %v1767
          %1845 = vmatprep.subr.mxu0 %v1770
          %1846 = vmatpush1.msra.mxu0 %v1769
          %1847 = vmatprep.subr.mxu0 %v1772
          %1848 = vmatpush1.msra.mxu0 %v1771
          %1849 = vmatprep.subr.mxu0 %v1774
          %1850 = vmatpush1.msra.mxu0 %v1773
          %1851 = vmatprep.subr.mxu0 %v1776
          %1852 = vmatpush1.msra.mxu0 %v1775
          %1853 = vmatprep.subr.mxu0 %v1778
          %1854 = vmatpush1.msra.mxu0 %v1777
          %1855 = vmatprep.subr.mxu0 %v1780
          %1856 = vmatpush1.msra.mxu0 %v1779
          %1857 = vmatprep.subr.mxu0 %v1782
          %1858 = vmatpush1.msra.mxu0 %v1781
          %1859 = vmatprep.subr.mxu0 %v1784
          %1860 = vmatpush1.msra.mxu0 %v1783
          %1861 = vmatprep.subr.mxu0 %v1786
          %1862 = vmatpush1.msra.mxu0 %v1785
          %1863 = vmatprep.subr.mxu0 %v1788
          %1864 = vmatpush1.msra.mxu0 %v1787
          %1865 = vmatprep.subr.mxu0 %v1790
          %1866 = vmatpush1.msra.mxu0 %v1789
          %1867 = vmatprep.subr.mxu0 %v1792
          %1868 = vmatpush1.msra.mxu0 %v1791
          %1869 = vmatprep.subr.mxu0 %v1794
          %1870 = vmatpush1.msra.mxu0 %v1793
          %1871 = vmatprep.subr.mxu0 %v1796
          %1872 = vmatpush1.msra.mxu0 %v1795
          %1873 = vmatprep.subr.mxu0 %v1798
          %1874 = vmatpush1.msra.mxu0 %v1797
          %1875 = vmatprep.subr.mxu0 %v1800
          %1876 = vmatpush1.msra.mxu0 %v1799
          %1877 = vmatprep.subr.mxu0 %v1802
          %1878 = vmatpush1.msra.mxu0 %v1801
          %1879 = vmatprep.subr.mxu0 %v1804
          %1880 = vmatpush1.msra.mxu0 %v1803
          %1881 = vmatprep.subr.mxu0 %v1806
          %1882 = vmatpush1.msra.mxu0 %v1805
          %1883 = vmatprep.subr.mxu0 %v1808
          %1884 = vmatpush1.msra.mxu0 %v1807
          %1885 = vmatprep.subr.mxu0 %v1810
          %1886 = vmatpush1.msra.mxu0 %v1809
          %1887 = vmatprep.subr.mxu0 %v1812
          %1888 = vmatpush1.msra.mxu0 %v1811
          %1889 = vmatprep.subr.mxu0 %v1814
          %1890 = vmatpush1.msra.mxu0 %v1813
          %1891 = vmatprep.subr.mxu0 %v1816
          %1892 = vmatpush1.msra.mxu0 %v1815
          %1893 = vmatprep.subr.mxu0 %v1818
          %1894 = vmatpush1.msra.mxu0 %v1817
          %1895 = vmatprep.subr.mxu0 %v1820
          %1896 = vmatpush1.msra.mxu0 %v1819
          %1897 = vmatprep.subr.mxu0 %v1822
          %1898 = vmatpush1.msra.mxu0 %v1821
          %1899 = vmatprep.subr.mxu0 %v1824
          %1900 = vmatpush1.msra.mxu0 %v1823
          %1901 = vmatprep.mubr.f32.mxu0 %v1758
          %1902 = vmatmul.mubr.f32.gmra.mrb[0].mxu0 %v1757
          %v1903 = vpop.f32.mrb[0].mxu0
          %v1904 = vadd.f32 %v1830, %v1903
          %v1905 = vpop.f32.mrb[0].mxu0
          %v1906 = vadd.f32 %v1834, %v1905
          %1907 = vmatprep.mubr.f32.mxu0 %v1760
          %1908 = vmatmul.mubr.f32.gmra.mrb[0].mxu0 %v1759
          %v1909 = vpop.f32.mrb[0].mxu0
          %v1910 = vadd.f32 %v1830, %v1909
          %v1911 = vpop.f32.mrb[0].mxu0
          %v1912 = vadd.f32 %v1834, %v1911
          %1913 = vdwg.mxu0
          %v1914 = vmax.f32 %v1904, 0.0
          %v1915 = vmax.f32 %v1906, 0.0
          %v1916 = vmax.f32 %v1910, 0.0
          %v1917 = vmax.f32 %v1912, 0.0
          %v1918 = vadd.f32 %v1914, %v1915
          %1919 = vadd.xlane.f32.xlu0 %v1918
          %v1920 = vpop.xlane.xlu0 %1919
          %v1921 = vadd.f32 %v1916, %v1917
          %1922 = vadd.xlane.f32.xlu0 %v1921
          %v1923 = vpop.xlane.xlu0 %1922
          %v1924 = vrcp.pop 256.0
          %v1925 = vmul.f32 %v1920, %v1924
          %v1926 = vmul.f32 %v1923, %v1924
          %v1927 = vmul.f32 %v1914, %v1914
          %v1928 = vmul.f32 %v1915, %v1915
          %v1929 = vmul.f32 %v1916, %v1916
          %v1930 = vmul.f32 %v1917, %v1917
          %v1931 = vadd.f32 %v1927, %v1928
          %1932 = vadd.xlane.f32.xlu0 %v1931
          %v1933 = vpop.xlane.xlu0 %1932
          %v1934 = vadd.f32 %v1929, %v1930
          %1935 = vadd.xlane.f32.xlu0 %v1934
          %v1936 = vpop.xlane.xlu0 %1935
          %v1937 = vmul.f32 %v1933, %v1924
          %v1938 = vmul.f32 %v1936, %v1924
          %v1939 = vmul.f32 %v1925, %v1925
          %v1940 = vmul.f32 %v1926, %v1926
          %v1941 = vsub.f32 %v1937, %v1939
          %v1942 = vsub.f32 %v1938, %v1940
          %v1943 = vsub.f32 %v1914, %v1925
          %v1944 = vsub.f32 %v1915, %v1925
          %v1945 = vsub.f32 %v1916, %v1926
          %v1946 = vsub.f32 %v1917, %v1926
          %v1947 = vadd.f32 %v1941, 1e-05
          %v1948 = vadd.f32 %v1942, 1e-05
          %v1949 = vrsqrt.pop %v1947
          %v1950 = vrsqrt.pop %v1948
          %v1951 = vmul.f32 %v1943, %v1949
          %v1952 = vmul.f32 %v1944, %v1949
          %v1953 = vmul.f32 %v1945, %v1950
          %v1954 = vmul.f32 %v1946, %v1950
          %v1955 = vld [vmem:[#allocation18] sm:$0x3]
          %v1957 = vlaneseq
          %v1958 = vshrl.u32 %v1957, 7
          %v1959 = vsub.s32 0, %v1958
          %v1960 = vrot.slane %v1955, %v1959
          %v1961 = vlaneseq
          %v1962 = vshrl.u32 %v1961, 7
          %v1963 = vsub.s32 1, %v1962
          %v1964 = vrot.slane %v1955, %v1963
          %v1967 = vmul.f32 %v1951, %v1960
          %v1968 = vmul.f32 %v1952, %v1964
          %v1969 = vmul.f32 %v1953, %v1960
          %v1970 = vmul.f32 %v1954, %v1964
          %v1971 = vld [vmem:[#allocation20] sm:$0x3]
          %v1973 = vlaneseq
          %v1974 = vshrl.u32 %v1973, 7
          %v1975 = vsub.s32 0, %v1974
          %v1976 = vrot.slane %v1971, %v1975
          %v1977 = vlaneseq
          %v1978 = vshrl.u32 %v1977, 7
          %v1979 = vsub.s32 1, %v1978
          %v1980 = vrot.slane %v1971, %v1979
          %v1983 = vadd.f32 %v1967, %v1976
          %v1984 = vadd.f32 %v1968, %v1980
          %v1985 = vadd.f32 %v1969, %v1976
          %v1986 = vadd.f32 %v1970, %v1980
          %v1987 = vld [vmem:[%s548] sm:$0xff]
          %v1988 = vld [vmem:[%s548 + $0x8] sm:$0xff]
          %v1989 = vld [vmem:[%s548 + $0x10] sm:$0xff]
          %v1990 = vld [vmem:[%s548 + $0x18] sm:$0xff]
          %v1991 = vadd.f32 %v1983, %v1987
          %v1992 = vadd.f32 %v1984, %v1988
          %v1993 = vadd.f32 %v1985, %v1989
          %v1994 = vadd.f32 %v1986, %v1990
          %1995 = vst [vmem:[%s599] sm:$0xff] %v1991
          %1996 = vst [vmem:[%s599 + $0x8] sm:$0xff] %v1992
          %1997 = vst [vmem:[%s599 + $0x10] sm:$0xff] %v1993
          %1998 = vst [vmem:[%s599 + $0x18] sm:$0xff] %v1994
        $region108: #{gan_module_forward.5} parent=59 // pred_fallthru
          _
        %s1999 = sand.u32 %s292, 1
        %s2000 = scalar_lea.sflag [#allocation8], %s1999
        %s2001 = sand.u32 %s292, 1
        %s2002 = smul.addr %s2001, 32
        %s2003 = scalar_lea.vmem [#allocation23], %s2002
        // Predicated region
        $region109: #{gan_module_forward.5} parent=59 // pred_check
          %p2004 = pneg %p302
        $region110: #{gan_module_forward.5} parent=59 // pred_check_branch
          %2006 = sbr.rel (%p2004) target = $region112
        $region111: #{gan_module_forward.5} parent=59 // pred_region
          %s2008 = ssub.s32 512, 512
          %2009 = vsyncadd %s2000, %s2008
          %s2010 = smul.addr %s40, 4
          %s2011 = smul.addr %s2010, 128
          %s2012 = scalar_lea.hbm %s10, %s2011
          %s2013 = sshll.u32 %s2003, 4
          %s2014 = int_to_ptr.vmem [resolvable:$true] %s2013
          %2019 = dma.vmem_to_hbm [thread:$0]  %s2014, 512, %s2012, %s2000, 256, 256, 16
        $region112: #{gan_module_forward.5} parent=59 // pred_fallthru
          _
      $region60: #{gan_module_forward.5} parent=5 // pred_fallthru
        _
      %p2020 = scmp.le.s32.totalorder 2, %s31
      // Predicated region
      $region113: #{gan_module_forward.5} parent=5 // pred_check
        %p2021 = pneg %p2020
      $region114: #{gan_module_forward.5} parent=5 // pred_check_branch
        %2023 = sbr.rel (%p2021) target = $region116
      $region115: #{gan_module_forward.5} parent=5 // pred_region
        %s2024 = ssub.s32 %s31, 2
        // Predicated region
        $region117: #{gan_module_forward.5} parent=115 // pred_check
          %p2025 = pneg %p308
        $region118: #{gan_module_forward.5} parent=115 // pred_check_branch
          %2027 = sbr.rel (%p2025) target = $region120
        $region119: #{gan_module_forward.5} parent=115 // pred_region
          %s2028 = sand.u32 %s293, 1
          %s2029 = scalar_lea.sflag [#allocation8], %s2028
          %s2030 = sand.u32 %s293, 1
          %s2031 = smul.addr %s2030, 32
          %s2032 = scalar_lea.vmem [#allocation23], %s2031
          %2033 = dma.done %s2029, 512
        $region120: #{gan_module_forward.5} parent=115 // pred_fallthru
          _
      $region116: #{gan_module_forward.5} parent=5 // pred_fallthru
        _
    $region6: #{gan_module_forward.5} parent=1 // loop_footer
      %s35 = sadd.s32 1, %s31
    $region7: #{gan_module_forward.5} parent=1 // loop_footer_branch
      %30 = sbr.rel target = $region3
    $region8: #{gan_module_forward.5} parent=1 // loop_exit
      _
    %2034 = vsyncpa [#allocation7], 1
    %s2035 = scalar_lea.sflag [#allocation7], 1
    %2036 = vsyncpa %s2035, 1
    %2037 = vsyncpa [#allocation10], 1
    %s2038 = scalar_lea.sflag [#allocation10], 1
    %2039 = vsyncpa %s2038, 1
    %2040 = vsyncpa [#allocation13], 1
    %2041 = vsyncpa [#allocation16], 1
    %2042 = vsyncpa [#allocation19], 1
    %2043 = vsyncpa [#allocation22], 1
    %s2044 = scalar_lea.sflag [#allocation22], 1
    %2045 = vsyncpa %s2044, 1
    %2046 = vsyncpa [#allocation8], 1
    %s2047 = scalar_lea.sflag [#allocation8], 1
    %2048 = vsyncpa %s2047, 1

</llo_original>
